<compile_context>
chip_gen: v6e
topology: v6e:2x2x1
jax: 0.10.0
libtpu: 0.0.40
codegen_flags: <defaults>
</compile_context>

<pallas_src>
import functools

import numpy as np
import jax
import jax.numpy as jnp
from jax import lax
from jax.experimental import pallas as pl
from jax.experimental.pallas import tpu as pltpu


# --------------------------------------------------------------------------
# Pallas kernel: one packed channel-group (H, K*W) per grid step
# --------------------------------------------------------------------------
def _cldice_sums_kernel(yt_ref, yp_ref, out_ref, *, iters, W, K):
    """yt_ref / yp_ref : (H, K*W)  -- K channels packed along the lane axis.
    out_ref           : (4, K*W)  -- column sums of
        [skel_pred*y_true, skel_pred, skel_true*y_pred, skel_true]."""
    H, KW = yt_ref.shape

    # ---- boundary masks, hoisted: built once per grid step -----------------
    row = lax.broadcasted_iota(jnp.int32, (H, KW), 0)
    lane = lax.broadcasted_iota(jnp.int32, (H, KW), 1)
    mask_hm = row >= 1                  # reading row-1 is in bounds
    mask_hp = row <= H - 2              # reading row+1 is in bounds
    is_first = lane == 0                # first lane of a packed channel
    is_last = lane == W - 1             # last lane of a packed channel
    for k in range(1, K):               # K is small & static (<= 128//W)
        is_first = jnp.logical_or(is_first, lane == k * W)
        is_last = jnp.logical_or(is_last, lane == k * W + W - 1)
    mask_wm = jnp.logical_not(is_first)  # reading lane-1 stays in-channel
    mask_wp = jnp.logical_not(is_last)   # reading lane+1 stays in-channel

    PINF = jnp.float32(jnp.inf)
    NINF = jnp.float32(-jnp.inf)

    def shift(x, offset, axis, mask, fill):
        # result[..., i, ...] = x[..., i+offset, ...] where valid, else fill
        n = x.shape[axis]
        rolled = pltpu.roll(x, (-offset) % n, axis)
        return jnp.where(mask, rolled, fill)

    def erode(img):
        # min over vertical 3-window AND horizontal 3-window (plus shape),
        # +inf implicit padding (== -maxpool(-img) with -inf padding)
        p1 = jnp.minimum(jnp.minimum(img, shift(img, -1, 0, mask_hm, PINF)),
                         shift(img, 1, 0, mask_hp, PINF))
        p2 = jnp.minimum(jnp.minimum(img, shift(img, -1, 1, mask_wm, PINF)),
                         shift(img, 1, 1, mask_wp, PINF))
        return jnp.minimum(p1, p2)

    def dilate(img):
        # separable 3x3 max pool with -inf padding (W pass then H pass)
        m = jnp.maximum(jnp.maximum(img, shift(img, -1, 1, mask_wm, NINF)),
                        shift(img, 1, 1, mask_wp, NINF))
        return jnp.maximum(jnp.maximum(m, shift(m, -1, 0, mask_hm, NINF)),
                           shift(m, 1, 0, mask_hp, NINF))

    def soft_skel(img):
        # CSE'd recurrence: erode(img) computed for soft_open(img) is exactly
        # next iteration's img, so each iteration costs 1 erode + 1 dilate.
        e = erode(img)
        skel = jax.nn.relu(img - dilate(e))
        cur = e
        for _ in range(iters):
            e = erode(cur)
            delta = jax.nn.relu(cur - dilate(e))
            skel = skel + jax.nn.relu(delta - skel * delta)
            cur = e
        return skel

    y_true = yt_ref[...]
    y_pred = yp_ref[...]
    skel_pred = soft_skel(y_pred)
    skel_true = soft_skel(y_true)

    out_ref[0:1, :] = jnp.sum(skel_pred * y_true, axis=0, keepdims=True)
    out_ref[1:2, :] = jnp.sum(skel_pred, axis=0, keepdims=True)
    out_ref[2:3, :] = jnp.sum(skel_true * y_pred, axis=0, keepdims=True)
    out_ref[3:4, :] = jnp.sum(skel_true, axis=0, keepdims=True)


def soft_dice_cldice(y_true, y_pred, *, alpha=0.5, smooth=1.0, iters=10):
    """Pallas TPU implementation of the PyTorch soft_dice_cldice.forward."""
    del alpha                            # unused by the reference forward
    B, C, H, W = y_true.shape
    BC = B * C

    # Lane packing: K = 128 // W channels share one (H, K*W) lane-dense tile.
    K = max(1, 128 // W)
    G = -(-BC // K)                      # ceil(BC / K) packed groups
    BCp = G * K
    KW = K * W

    yt = y_true.reshape(BC, H, W).astype(jnp.float32)
    yp = y_pred.reshape(BC, H, W).astype(jnp.float32)
    if BCp != BC:                        # pad with zero channels, dropped later
        pad = ((0, BCp - BC), (0, 0), (0, 0))
        yt = jnp.pad(yt, pad)
        yp = jnp.pad(yp, pad)

    # (BCp,H,W) -> (G,K,H,W) -> (G,H,K,W) -> (G,H,K*W)
    yt_p = yt.reshape(G, K, H, W).transpose(0, 2, 1, 3).reshape(G, H, KW)
    yp_p = yp.reshape(G, K, H, W).transpose(0, 2, 1, 3).reshape(G, H, KW)

    kernel = functools.partial(_cldice_sums_kernel,
                               iters=int(iters), W=int(W), K=int(K))
    sums = pl.pallas_call(
        kernel,
        out_shape=jax.ShapeDtypeStruct((G, 4, KW), jnp.float32),
        grid_spec=pltpu.PrefetchScalarGridSpec(
            num_scalar_prefetch=0,
            grid=(G,),
            in_specs=[
                pl.BlockSpec((None, H, KW), lambda g: (g, 0, 0)),
                pl.BlockSpec((None, H, KW), lambda g: (g, 0, 0)),
            ],
            out_specs=pl.BlockSpec((None, 4, KW), lambda g: (g, 0, 0)),
        ),
        compiler_params=pltpu.CompilerParams(
            dimension_semantics=("parallel",)),   # no cross-step state
    )(yt_p, yp_p)                                  # (G, 4, KW)

    # Per-channel reductions + clDice combination (tiny; plain JAX, exact f32).
    per_ch = sums.reshape(G, 4, K, W).sum(axis=3)            # (G, 4, K)
    per_ch = per_ch.transpose(0, 2, 1).reshape(BCp, 4)[:BC]  # (BC, 4)
    smooth = jnp.float32(smooth)
    tprec = (per_ch[:, 0] + smooth) / (per_ch[:, 1] + smooth)
    tsens = (per_ch[:, 2] + smooth) / (per_ch[:, 3] + smooth)
    cl = 1.0 - 2.0 * (tprec * tsens) / (tprec + tsens)
    return jnp.mean(cl)


# --------------------------------------------------------------------------
# Pure-JAX reference (mirrors F.max_pool2d semantics: implicit -inf padding)
# --------------------------------------------------------------------------
def _ref_maxpool(x, kh, kw, ph, pw):
    B, C, H, W = x.shape
    xp = jnp.pad(x, ((0, 0), (0, 0), (ph, ph), (pw, pw)),
                 constant_values=-jnp.inf)
    out = jnp.full_like(x, -jnp.inf)
    for i in range(kh):
        for j in range(kw):
            out = jnp.maximum(out, xp[:, :, i:i + H, j:j + W])
    return out


def _ref_soft_erode(img):
    p1 = -_ref_maxpool(-img, 3, 1, 1, 0)
    p2 = -_ref_maxpool(-img, 1, 3, 0, 1)
    return jnp.minimum(p1, p2)


def _ref_soft_dilate(img):
    return _ref_maxpool(img, 3, 3, 1, 1)


def _ref_soft_open(img):
    return _ref_soft_dilate(_ref_soft_erode(img))


def _ref_soft_skel(img, num_iter):
    skel = jax.nn.relu(img - _ref_soft_open(img))
    for _ in range(num_iter):
        img = _ref_soft_erode(img)
        delta = jax.nn.relu(img - _ref_soft_open(img))
        skel = skel + jax.nn.relu(delta - skel * delta)
    return skel


def _ref_soft_dice_cldice(y_true, y_pred, smooth=1.0, iters=10):
    skel_pred = _ref_soft_skel(y_pred, iters)
    skel_true = _ref_soft_skel(y_true, iters)
    tprec = (jnp.sum(skel_pred * y_true, axis=(2, 3)) + smooth) / \
            (jnp.sum(skel_pred, axis=(2, 3)) + smooth)
    tsens = (jnp.sum(skel_true * y_pred, axis=(2, 3)) + smooth) / \
            (jnp.sum(skel_true, axis=(2, 3)) + smooth)
    cl = 1.0 - 2.0 * (tprec * tsens) / (tprec + tsens)
    return jnp.mean(cl)


if __name__ == "__main__":
    key = jax.random.PRNGKey(0)
    k1, k2 = jax.random.split(key)
    B, C, H, W = 2, 4, 16, 16

    y_pred = jax.nn.sigmoid(jax.random.normal(k1, (B, C, H, W), jnp.float32))
    y_true = (jax.random.uniform(k2, (B, C, H, W), jnp.float32) > 0.5
              ).astype(jnp.float32)

    out = soft_dice_cldice(y_true, y_pred, alpha=0.5, smooth=1.0, iters=10)
    out = jax.block_until_ready(out)

    ref = _ref_soft_dice_cldice(y_true, y_pred, smooth=1.0, iters=10)
    np.testing.assert_allclose(np.asarray(out), np.asarray(ref),
                               rtol=1e-5, atol=1e-5)
    print("KERNEL_OK")
</pallas_src>

<mosaic_0001>
module attributes {stable_mosaic.version = 11 : i64} {
  func.func @_cldice_sums_kernel(%arg0: i32, %arg1: memref<1x16x128xf32, #tpu.memory_space<vmem>>, %arg2: memref<1x16x128xf32, #tpu.memory_space<vmem>>, %arg3: memref<1x4x128xf32, #tpu.memory_space<vmem>>) attributes {dimension_semantics = [#tpu.dimension_semantics<parallel>], iteration_bounds = array<i64: 1>, scalar_prefetch = 0 : i64, scratch_operands = 0 : i64, tpu.core_type = #tpu.core_type<tc>, window_params = [{transform_indices = @transform_0, window_bounds = array<i64: 1, 16, 128>}, {transform_indices = @transform_1, window_bounds = array<i64: 1, 16, 128>}, {transform_indices = @transform_2, window_bounds = array<i64: 1, 4, 128>}]} {
    %0 = tpu.iota {dimensions = array<i32: 0>} : vector<16x128xi32>
    %1 = tpu.iota {dimensions = array<i32: 1>} : vector<16x128xi32>
    %c1_i32 = arith.constant 1 : i32
    %2 = vector.broadcast %c1_i32 : i32 to vector<16x128xi32>
    %3 = arith.cmpi sge, %0, %2 : vector<16x128xi32>
    %c14_i32 = arith.constant 14 : i32
    %4 = vector.broadcast %c14_i32 : i32 to vector<16x128xi32>
    %5 = arith.cmpi sle, %0, %4 : vector<16x128xi32>
    %c0_i32 = arith.constant 0 : i32
    %6 = vector.broadcast %c0_i32 : i32 to vector<16x128xi32>
    %7 = arith.cmpi eq, %1, %6 : vector<16x128xi32>
    %c15_i32 = arith.constant 15 : i32
    %8 = vector.broadcast %c15_i32 : i32 to vector<16x128xi32>
    %9 = arith.cmpi eq, %1, %8 : vector<16x128xi32>
    %c16_i32 = arith.constant 16 : i32
    %10 = vector.broadcast %c16_i32 : i32 to vector<16x128xi32>
    %11 = arith.cmpi eq, %1, %10 : vector<16x128xi32>
    %12 = arith.ori %7, %11 : vector<16x128xi1>
    %c31_i32 = arith.constant 31 : i32
    %13 = vector.broadcast %c31_i32 : i32 to vector<16x128xi32>
    %14 = arith.cmpi eq, %1, %13 : vector<16x128xi32>
    %15 = arith.ori %9, %14 : vector<16x128xi1>
    %c32_i32 = arith.constant 32 : i32
    %16 = vector.broadcast %c32_i32 : i32 to vector<16x128xi32>
    %17 = arith.cmpi eq, %1, %16 : vector<16x128xi32>
    %18 = arith.ori %12, %17 : vector<16x128xi1>
    %c47_i32 = arith.constant 47 : i32
    %19 = vector.broadcast %c47_i32 : i32 to vector<16x128xi32>
    %20 = arith.cmpi eq, %1, %19 : vector<16x128xi32>
    %21 = arith.ori %15, %20 : vector<16x128xi1>
    %c48_i32 = arith.constant 48 : i32
    %22 = vector.broadcast %c48_i32 : i32 to vector<16x128xi32>
    %23 = arith.cmpi eq, %1, %22 : vector<16x128xi32>
    %24 = arith.ori %18, %23 : vector<16x128xi1>
    %c63_i32 = arith.constant 63 : i32
    %25 = vector.broadcast %c63_i32 : i32 to vector<16x128xi32>
    %26 = arith.cmpi eq, %1, %25 : vector<16x128xi32>
    %27 = arith.ori %21, %26 : vector<16x128xi1>
    %c64_i32 = arith.constant 64 : i32
    %28 = vector.broadcast %c64_i32 : i32 to vector<16x128xi32>
    %29 = arith.cmpi eq, %1, %28 : vector<16x128xi32>
    %30 = arith.ori %24, %29 : vector<16x128xi1>
    %c79_i32 = arith.constant 79 : i32
    %31 = vector.broadcast %c79_i32 : i32 to vector<16x128xi32>
    %32 = arith.cmpi eq, %1, %31 : vector<16x128xi32>
    %33 = arith.ori %27, %32 : vector<16x128xi1>
    %c80_i32 = arith.constant 80 : i32
    %34 = vector.broadcast %c80_i32 : i32 to vector<16x128xi32>
    %35 = arith.cmpi eq, %1, %34 : vector<16x128xi32>
    %36 = arith.ori %30, %35 : vector<16x128xi1>
    %c95_i32 = arith.constant 95 : i32
    %37 = vector.broadcast %c95_i32 : i32 to vector<16x128xi32>
    %38 = arith.cmpi eq, %1, %37 : vector<16x128xi32>
    %39 = arith.ori %33, %38 : vector<16x128xi1>
    %c96_i32 = arith.constant 96 : i32
    %40 = vector.broadcast %c96_i32 : i32 to vector<16x128xi32>
    %41 = arith.cmpi eq, %1, %40 : vector<16x128xi32>
    %42 = arith.ori %36, %41 : vector<16x128xi1>
    %c111_i32 = arith.constant 111 : i32
    %43 = vector.broadcast %c111_i32 : i32 to vector<16x128xi32>
    %44 = arith.cmpi eq, %1, %43 : vector<16x128xi32>
    %45 = arith.ori %39, %44 : vector<16x128xi1>
    %c112_i32 = arith.constant 112 : i32
    %46 = vector.broadcast %c112_i32 : i32 to vector<16x128xi32>
    %47 = arith.cmpi eq, %1, %46 : vector<16x128xi32>
    %48 = arith.ori %42, %47 : vector<16x128xi1>
    %c127_i32 = arith.constant 127 : i32
    %49 = vector.broadcast %c127_i32 : i32 to vector<16x128xi32>
    %50 = arith.cmpi eq, %1, %49 : vector<16x128xi32>
    %51 = arith.ori %45, %50 : vector<16x128xi1>
    %cst = arith.constant dense<true> : vector<16x128xi1>
    %52 = arith.xori %48, %cst : vector<16x128xi1>
    %cst_0 = arith.constant dense<true> : vector<16x128xi1>
    %53 = arith.xori %51, %cst_0 : vector<16x128xi1>
    %c0 = arith.constant 0 : index
    %c0_1 = arith.constant 0 : index
    %c0_2 = arith.constant 0 : index
    %54 = vector.load %arg1[%c0, %c0_1, %c0_2] : memref<1x16x128xf32, #tpu.memory_space<vmem>>, vector<1x16x128xf32>
    %55 = vector.shape_cast %54 : vector<1x16x128xf32> to vector<16x128xf32>
    %c0_3 = arith.constant 0 : index
    %c0_4 = arith.constant 0 : index
    %c0_5 = arith.constant 0 : index
    %56 = vector.load %arg2[%c0_3, %c0_4, %c0_5] : memref<1x16x128xf32, #tpu.memory_space<vmem>>, vector<1x16x128xf32>
    %57 = vector.shape_cast %56 : vector<1x16x128xf32> to vector<16x128xf32>
    %c1_i32_6 = arith.constant 1 : i32
    %58 = tpu.dynamic_rotate %57 by %c1_i32_6 dim 0 : vector<16x128xf32>, i32 -> vector<16x128xf32>
    %cst_7 = arith.constant 0x7F800000 : f32
    %59 = vector.broadcast %cst_7 : f32 to vector<16x128xf32>
    %60 = arith.select %3, %58, %59 : vector<16x128xi1>, vector<16x128xf32>
    %61 = arith.minimumf %57, %60 : vector<16x128xf32>
    %c15_i32_8 = arith.constant 15 : i32
    %62 = tpu.dynamic_rotate %57 by %c15_i32_8 dim 0 : vector<16x128xf32>, i32 -> vector<16x128xf32>
    %cst_9 = arith.constant 0x7F800000 : f32
    %63 = vector.broadcast %cst_9 : f32 to vector<16x128xf32>
    %64 = arith.select %5, %62, %63 : vector<16x128xi1>, vector<16x128xf32>
    %65 = arith.minimumf %61, %64 : vector<16x128xf32>
    %c1_i32_10 = arith.constant 1 : i32
    %66 = tpu.dynamic_rotate %57 by %c1_i32_10 dim 1 : vector<16x128xf32>, i32 -> vector<16x128xf32>
    %cst_11 = arith.constant 0x7F800000 : f32
    %67 = vector.broadcast %cst_11 : f32 to vector<16x128xf32>
    %68 = arith.select %52, %66, %67 : vector<16x128xi1>, vector<16x128xf32>
    %69 = arith.minimumf %57, %68 : vector<16x128xf32>
    %c127_i32_12 = arith.constant 127 : i32
    %70 = tpu.dynamic_rotate %57 by %c127_i32_12 dim 1 : vector<16x128xf32>, i32 -> vector<16x128xf32>
    %cst_13 = arith.constant 0x7F800000 : f32
    %71 = vector.broadcast %cst_13 : f32 to vector<16x128xf32>
    %72 = arith.select %53, %70, %71 : vector<16x128xi1>, vector<16x128xf32>
    %73 = arith.minimumf %69, %72 : vector<16x128xf32>
    %74 = arith.minimumf %65, %73 : vector<16x128xf32>
    %c1_i32_14 = arith.constant 1 : i32
    %75 = tpu.dynamic_rotate %74 by %c1_i32_14 dim 1 : vector<16x128xf32>, i32 -> vector<16x128xf32>
    %cst_15 = arith.constant 0xFF800000 : f32
    %76 = vector.broadcast %cst_15 : f32 to vector<16x128xf32>
    %77 = arith.select %52, %75, %76 : vector<16x128xi1>, vector<16x128xf32>
    %78 = arith.maximumf %74, %77 : vector<16x128xf32>
    %c127_i32_16 = arith.constant 127 : i32
    %79 = tpu.dynamic_rotate %74 by %c127_i32_16 dim 1 : vector<16x128xf32>, i32 -> vector<16x128xf32>
    %cst_17 = arith.constant 0xFF800000 : f32
    %80 = vector.broadcast %cst_17 : f32 to vector<16x128xf32>
    %81 = arith.select %53, %79, %80 : vector<16x128xi1>, vector<16x128xf32>
    %82 = arith.maximumf %78, %81 : vector<16x128xf32>
    %c1_i32_18 = arith.constant 1 : i32
    %83 = tpu.dynamic_rotate %82 by %c1_i32_18 dim 0 : vector<16x128xf32>, i32 -> vector<16x128xf32>
    %cst_19 = arith.constant 0xFF800000 : f32
    %84 = vector.broadcast %cst_19 : f32 to vector<16x128xf32>
    %85 = arith.select %3, %83, %84 : vector<16x128xi1>, vector<16x128xf32>
    %86 = arith.maximumf %82, %85 : vector<16x128xf32>
    %c15_i32_20 = arith.constant 15 : i32
    %87 = tpu.dynamic_rotate %82 by %c15_i32_20 dim 0 : vector<16x128xf32>, i32 -> vector<16x128xf32>
    %cst_21 = arith.constant 0xFF800000 : f32
    %88 = vector.broadcast %cst_21 : f32 to vector<16x128xf32>
    %89 = arith.select %5, %87, %88 : vector<16x128xi1>, vector<16x128xf32>
    %90 = arith.maximumf %86, %89 : vector<16x128xf32>
    %91 = arith.subf %57, %90 : vector<16x128xf32>
    %cst_22 = arith.constant 0.000000e+00 : f32
    %92 = vector.broadcast %cst_22 : f32 to vector<16x128xf32>
    %93 = arith.maximumf %91, %92 : vector<16x128xf32>
    %c1_i32_23 = arith.constant 1 : i32
    %94 = tpu.dynamic_rotate %74 by %c1_i32_23 dim 0 : vector<16x128xf32>, i32 -> vector<16x128xf32>
    %cst_24 = arith.constant 0x7F800000 : f32
    %95 = vector.broadcast %cst_24 : f32 to vector<16x128xf32>
    %96 = arith.select %3, %94, %95 : vector<16x128xi1>, vector<16x128xf32>
    %97 = arith.minimumf %74, %96 : vector<16x128xf32>
    %c15_i32_25 = arith.constant 15 : i32
    %98 = tpu.dynamic_rotate %74 by %c15_i32_25 dim 0 : vector<16x128xf32>, i32 -> vector<16x128xf32>
    %cst_26 = arith.constant 0x7F800000 : f32
    %99 = vector.broadcast %cst_26 : f32 to vector<16x128xf32>
    %100 = arith.select %5, %98, %99 : vector<16x128xi1>, vector<16x128xf32>
    %101 = arith.minimumf %97, %100 : vector<16x128xf32>
    %c1_i32_27 = arith.constant 1 : i32
    %102 = tpu.dynamic_rotate %74 by %c1_i32_27 dim 1 : vector<16x128xf32>, i32 -> vector<16x128xf32>
    %cst_28 = arith.constant 0x7F800000 : f32
    %103 = vector.broadcast %cst_28 : f32 to vector<16x128xf32>
    %104 = arith.select %52, %102, %103 : vector<16x128xi1>, vector<16x128xf32>
    %105 = arith.minimumf %74, %104 : vector<16x128xf32>
    %c127_i32_29 = arith.constant 127 : i32
    %106 = tpu.dynamic_rotate %74 by %c127_i32_29 dim 1 : vector<16x128xf32>, i32 -> vector<16x128xf32>
    %cst_30 = arith.constant 0x7F800000 : f32
    %107 = vector.broadcast %cst_30 : f32 to vector<16x128xf32>
    %108 = arith.select %53, %106, %107 : vector<16x128xi1>, vector<16x128xf32>
    %109 = arith.minimumf %105, %108 : vector<16x128xf32>
    %110 = arith.minimumf %101, %109 : vector<16x128xf32>
    %c1_i32_31 = arith.constant 1 : i32
    %111 = tpu.dynamic_rotate %110 by %c1_i32_31 dim 1 : vector<16x128xf32>, i32 -> vector<16x128xf32>
    %cst_32 = arith.constant 0xFF800000 : f32
    %112 = vector.broadcast %cst_32 : f32 to vector<16x128xf32>
    %113 = arith.select %52, %111, %112 : vector<16x128xi1>, vector<16x128xf32>
    %114 = arith.maximumf %110, %113 : vector<16x128xf32>
    %c127_i32_33 = arith.constant 127 : i32
    %115 = tpu.dynamic_rotate %110 by %c127_i32_33 dim 1 : vector<16x128xf32>, i32 -> vector<16x128xf32>
    %cst_34 = arith.constant 0xFF800000 : f32
    %116 = vector.broadcast %cst_34 : f32 to vector<16x128xf32>
    %117 = arith.select %53, %115, %116 : vector<16x128xi1>, vector<16x128xf32>
    %118 = arith.maximumf %114, %117 : vector<16x128xf32>
    %c1_i32_35 = arith.constant 1 : i32
    %119 = tpu.dynamic_rotate %118 by %c1_i32_35 dim 0 : vector<16x128xf32>, i32 -> vector<16x128xf32>
    %cst_36 = arith.constant 0xFF800000 : f32
    %120 = vector.broadcast %cst_36 : f32 to vector<16x128xf32>
    %121 = arith.select %3, %119, %120 : vector<16x128xi1>, vector<16x128xf32>
    %122 = arith.maximumf %118, %121 : vector<16x128xf32>
    %c15_i32_37 = arith.constant 15 : i32
    %123 = tpu.dynamic_rotate %118 by %c15_i32_37 dim 0 : vector<16x128xf32>, i32 -> vector<16x128xf32>
    %cst_38 = arith.constant 0xFF800000 : f32
    %124 = vector.broadcast %cst_38 : f32 to vector<16x128xf32>
    %125 = arith.select %5, %123, %124 : vector<16x128xi1>, vector<16x128xf32>
    %126 = arith.maximumf %122, %125 : vector<16x128xf32>
    %127 = arith.subf %74, %126 : vector<16x128xf32>
    %cst_39 = arith.constant 0.000000e+00 : f32
    %128 = vector.broadcast %cst_39 : f32 to vector<16x128xf32>
    %129 = arith.maximumf %127, %128 : vector<16x128xf32>
    %130 = arith.mulf %93, %129 : vector<16x128xf32>
    %131 = arith.subf %129, %130 : vector<16x128xf32>
    %cst_40 = arith.constant 0.000000e+00 : f32
    %132 = vector.broadcast %cst_40 : f32 to vector<16x128xf32>
    %133 = arith.maximumf %131, %132 : vector<16x128xf32>
    %134 = arith.addf %93, %133 : vector<16x128xf32>
    %c1_i32_41 = arith.constant 1 : i32
    %135 = tpu.dynamic_rotate %110 by %c1_i32_41 dim 0 : vector<16x128xf32>, i32 -> vector<16x128xf32>
    %cst_42 = arith.constant 0x7F800000 : f32
    %136 = vector.broadcast %cst_42 : f32 to vector<16x128xf32>
    %137 = arith.select %3, %135, %136 : vector<16x128xi1>, vector<16x128xf32>
    %138 = arith.minimumf %110, %137 : vector<16x128xf32>
    %c15_i32_43 = arith.constant 15 : i32
    %139 = tpu.dynamic_rotate %110 by %c15_i32_43 dim 0 : vector<16x128xf32>, i32 -> vector<16x128xf32>
    %cst_44 = arith.constant 0x7F800000 : f32
    %140 = vector.broadcast %cst_44 : f32 to vector<16x128xf32>
    %141 = arith.select %5, %139, %140 : vector<16x128xi1>, vector<16x128xf32>
    %142 = arith.minimumf %138, %141 : vector<16x128xf32>
    %c1_i32_45 = arith.constant 1 : i32
    %143 = tpu.dynamic_rotate %110 by %c1_i32_45 dim 1 : vector<16x128xf32>, i32 -> vector<16x128xf32>
    %cst_46 = arith.constant 0x7F800000 : f32
    %144 = vector.broadcast %cst_46 : f32 to vector<16x128xf32>
    %145 = arith.select %52, %143, %144 : vector<16x128xi1>, vector<16x128xf32>
    %146 = arith.minimumf %110, %145 : vector<16x128xf32>
    %c127_i32_47 = arith.constant 127 : i32
    %147 = tpu.dynamic_rotate %110 by %c127_i32_47 dim 1 : vector<16x128xf32>, i32 -> vector<16x128xf32>
    %cst_48 = arith.constant 0x7F800000 : f32
    %148 = vector.broadcast %cst_48 : f32 to vector<16x128xf32>
    %149 = arith.select %53, %147, %148 : vector<16x128xi1>, vector<16x128xf32>
    %150 = arith.minimumf %146, %149 : vector<16x128xf32>
    %151 = arith.minimumf %142, %150 : vector<16x128xf32>
    %c1_i32_49 = arith.constant 1 : i32
    %152 = tpu.dynamic_rotate %151 by %c1_i32_49 dim 1 : vector<16x128xf32>, i32 -> vector<16x128xf32>
    %cst_50 = arith.constant 0xFF800000 : f32
    %153 = vector.broadcast %cst_50 : f32 to vector<16x128xf32>
    %154 = arith.select %52, %152, %153 : vector<16x128xi1>, vector<16x128xf32>
    %155 = arith.maximumf %151, %154 : vector<16x128xf32>
    %c127_i32_51 = arith.constant 127 : i32
    %156 = tpu.dynamic_rotate %151 by %c127_i32_51 dim 1 : vector<16x128xf32>, i32 -> vector<16x128xf32>
    %cst_52 = arith.constant 0xFF800000 : f32
    %157 = vector.broadcast %cst_52 : f32 to vector<16x128xf32>
    %158 = arith.select %53, %156, %157 : vector<16x128xi1>, vector<16x128xf32>
    %159 = arith.maximumf %155, %158 : vector<16x128xf32>
    %c1_i32_53 = arith.constant 1 : i32
    %160 = tpu.dynamic_rotate %159 by %c1_i32_53 dim 0 : vector<16x128xf32>, i32 -> vector<16x128xf32>
    %cst_54 = arith.constant 0xFF800000 : f32
    %161 = vector.broadcast %cst_54 : f32 to vector<16x128xf32>
    %162 = arith.select %3, %160, %161 : vector<16x128xi1>, vector<16x128xf32>
    %163 = arith.maximumf %159, %162 : vector<16x128xf32>
    %c15_i32_55 = arith.constant 15 : i32
    %164 = tpu.dynamic_rotate %159 by %c15_i32_55 dim 0 : vector<16x128xf32>, i32 -> vector<16x128xf32>
    %cst_56 = arith.constant 0xFF800000 : f32
    %165 = vector.broadcast %cst_56 : f32 to vector<16x128xf32>
    %166 = arith.select %5, %164, %165 : vector<16x128xi1>, vector<16x128xf32>
    %167 = arith.maximumf %163, %166 : vector<16x128xf32>
    %168 = arith.subf %110, %167 : vector<16x128xf32>
    %cst_57 = arith.constant 0.000000e+00 : f32
    %169 = vector.broadcast %cst_57 : f32 to vector<16x128xf32>
    %170 = arith.maximumf %168, %169 : vector<16x128xf32>
    %171 = arith.mulf %134, %170 : vector<16x128xf32>
    %172 = arith.subf %170, %171 : vector<16x128xf32>
    %cst_58 = arith.constant 0.000000e+00 : f32
    %173 = vector.broadcast %cst_58 : f32 to vector<16x128xf32>
    %174 = arith.maximumf %172, %173 : vector<16x128xf32>
    %175 = arith.addf %134, %174 : vector<16x128xf32>
    %c1_i32_59 = arith.constant 1 : i32
    %176 = tpu.dynamic_rotate %151 by %c1_i32_59 dim 0 : vector<16x128xf32>, i32 -> vector<16x128xf32>
    %cst_60 = arith.constant 0x7F800000 : f32
    %177 = vector.broadcast %cst_60 : f32 to vector<16x128xf32>
    %178 = arith.select %3, %176, %177 : vector<16x128xi1>, vector<16x128xf32>
    %179 = arith.minimumf %151, %178 : vector<16x128xf32>
    %c15_i32_61 = arith.constant 15 : i32
    %180 = tpu.dynamic_rotate %151 by %c15_i32_61 dim 0 : vector<16x128xf32>, i32 -> vector<16x128xf32>
    %cst_62 = arith.constant 0x7F800000 : f32
    %181 = vector.broadcast %cst_62 : f32 to vector<16x128xf32>
    %182 = arith.select %5, %180, %181 : vector<16x128xi1>, vector<16x128xf32>
    %183 = arith.minimumf %179, %182 : vector<16x128xf32>
    %c1_i32_63 = arith.constant 1 : i32
    %184 = tpu.dynamic_rotate %151 by %c1_i32_63 dim 1 : vector<16x128xf32>, i32 -> vector<16x128xf32>
    %cst_64 = arith.constant 0x7F800000 : f32
    %185 = vector.broadcast %cst_64 : f32 to vector<16x128xf32>
    %186 = arith.select %52, %184, %185 : vector<16x128xi1>, vector<16x128xf32>
    %187 = arith.minimumf %151, %186 : vector<16x128xf32>
    %c127_i32_65 = arith.constant 127 : i32
    %188 = tpu.dynamic_rotate %151 by %c127_i32_65 dim 1 : vector<16x128xf32>, i32 -> vector<16x128xf32>
    %cst_66 = arith.constant 0x7F800000 : f32
    %189 = vector.broadcast %cst_66 : f32 to vector<16x128xf32>
    %190 = arith.select %53, %188, %189 : vector<16x128xi1>, vector<16x128xf32>
    %191 = arith.minimumf %187, %190 : vector<16x128xf32>
    %192 = arith.minimumf %183, %191 : vector<16x128xf32>
    %c1_i32_67 = arith.constant 1 : i32
    %193 = tpu.dynamic_rotate %192 by %c1_i32_67 dim 1 : vector<16x128xf32>, i32 -> vector<16x128xf32>
    %cst_68 = arith.constant 0xFF800000 : f32
    %194 = vector.broadcast %cst_68 : f32 to vector<16x128xf32>
    %195 = arith.select %52, %193, %194 : vector<16x128xi1>, vector<16x128xf32>
    %196 = arith.maximumf %192, %195 : vector<16x128xf32>
    %c127_i32_69 = arith.constant 127 : i32
    %197 = tpu.dynamic_rotate %192 by %c127_i32_69 dim 1 : vector<16x128xf32>, i32 -> vector<16x128xf32>
    %cst_70 = arith.constant 0xFF800000 : f32
    %198 = vector.broadcast %cst_70 : f32 to vector<16x128xf32>
    %199 = arith.select %53, %197, %198 : vector<16x128xi1>, vector<16x128xf32>
    %200 = arith.maximumf %196, %199 : vector<16x128xf32>
    %c1_i32_71 = arith.constant 1 : i32
    %201 = tpu.dynamic_rotate %200 by %c1_i32_71 dim 0 : vector<16x128xf32>, i32 -> vector<16x128xf32>
    %cst_72 = arith.constant 0xFF800000 : f32
    %202 = vector.broadcast %cst_72 : f32 to vector<16x128xf32>
    %203 = arith.select %3, %201, %202 : vector<16x128xi1>, vector<16x128xf32>
    %204 = arith.maximumf %200, %203 : vector<16x128xf32>
    %c15_i32_73 = arith.constant 15 : i32
    %205 = tpu.dynamic_rotate %200 by %c15_i32_73 dim 0 : vector<16x128xf32>, i32 -> vector<16x128xf32>
    %cst_74 = arith.constant 0xFF800000 : f32
    %206 = vector.broadcast %cst_74 : f32 to vector<16x128xf32>
    %207 = arith.select %5, %205, %206 : vector<16x128xi1>, vector<16x128xf32>
    %208 = arith.maximumf %204, %207 : vector<16x128xf32>
    %209 = arith.subf %151, %208 : vector<16x128xf32>
    %cst_75 = arith.constant 0.000000e+00 : f32
    %210 = vector.broadcast %cst_75 : f32 to vector<16x128xf32>
    %211 = arith.maximumf %209, %210 : vector<16x128xf32>
    %212 = arith.mulf %175, %211 : vector<16x128xf32>
    %213 = arith.subf %211, %212 : vector<16x128xf32>
    %cst_76 = arith.constant 0.000000e+00 : f32
    %214 = vector.broadcast %cst_76 : f32 to vector<16x128xf32>
    %215 = arith.maximumf %213, %214 : vector<16x128xf32>
    %216 = arith.addf %175, %215 : vector<16x128xf32>
    %c1_i32_77 = arith.constant 1 : i32
    %217 = tpu.dynamic_rotate %192 by %c1_i32_77 dim 0 : vector<16x128xf32>, i32 -> vector<16x128xf32>
    %cst_78 = arith.constant 0x7F800000 : f32
    %218 = vector.broadcast %cst_78 : f32 to vector<16x128xf32>
    %219 = arith.select %3, %217, %218 : vector<16x128xi1>, vector<16x128xf32>
    %220 = arith.minimumf %192, %219 : vector<16x128xf32>
    %c15_i32_79 = arith.constant 15 : i32
    %221 = tpu.dynamic_rotate %192 by %c15_i32_79 dim 0 : vector<16x128xf32>, i32 -> vector<16x128xf32>
    %cst_80 = arith.constant 0x7F800000 : f32
    %222 = vector.broadcast %cst_80 : f32 to vector<16x128xf32>
    %223 = arith.select %5, %221, %222 : vector<16x128xi1>, vector<16x128xf32>
    %224 = arith.minimumf %220, %223 : vector<16x128xf32>
    %c1_i32_81 = arith.constant 1 : i32
    %225 = tpu.dynamic_rotate %192 by %c1_i32_81 dim 1 : vector<16x128xf32>, i32 -> vector<16x128xf32>
    %cst_82 = arith.constant 0x7F800000 : f32
    %226 = vector.broadcast %cst_82 : f32 to vector<16x128xf32>
    %227 = arith.select %52, %225, %226 : vector<16x128xi1>, vector<16x128xf32>
    %228 = arith.minimumf %192, %227 : vector<16x128xf32>
    %c127_i32_83 = arith.constant 127 : i32
    %229 = tpu.dynamic_rotate %192 by %c127_i32_83 dim 1 : vector<16x128xf32>, i32 -> vector<16x128xf32>
    %cst_84 = arith.constant 0x7F800000 : f32
    %230 = vector.broadcast %cst_84 : f32 to vector<16x128xf32>
    %231 = arith.select %53, %229, %230 : vector<16x128xi1>, vector<16x128xf32>
    %232 = arith.minimumf %228, %231 : vector<16x128xf32>
    %233 = arith.minimumf %224, %232 : vector<16x128xf32>
    %c1_i32_85 = arith.constant 1 : i32
    %234 = tpu.dynamic_rotate %233 by %c1_i32_85 dim 1 : vector<16x128xf32>, i32 -> vector<16x128xf32>
    %cst_86 = arith.constant 0xFF800000 : f32
    %235 = vector.broadcast %cst_86 : f32 to vector<16x128xf32>
    %236 = arith.select %52, %234, %235 : vector<16x128xi1>, vector<16x128xf32>
    %237 = arith.maximumf %233, %236 : vector<16x128xf32>
    %c127_i32_87 = arith.constant 127 : i32
    %238 = tpu.dynamic_rotate %233 by %c127_i32_87 dim 1 : vector<16x128xf32>, i32 -> vector<16x128xf32>
    %cst_88 = arith.constant 0xFF800000 : f32
    %239 = vector.broadcast %cst_88 : f32 to vector<16x128xf32>
    %240 = arith.select %53, %238, %239 : vector<16x128xi1>, vector<16x128xf32>
    %241 = arith.maximumf %237, %240 : vector<16x128xf32>
    %c1_i32_89 = arith.constant 1 : i32
    %242 = tpu.dynamic_rotate %241 by %c1_i32_89 dim 0 : vector<16x128xf32>, i32 -> vector<16x128xf32>
    %cst_90 = arith.constant 0xFF800000 : f32
    %243 = vector.broadcast %cst_90 : f32 to vector<16x128xf32>
    %244 = arith.select %3, %242, %243 : vector<16x128xi1>, vector<16x128xf32>
    %245 = arith.maximumf %241, %244 : vector<16x128xf32>
    %c15_i32_91 = arith.constant 15 : i32
    %246 = tpu.dynamic_rotate %241 by %c15_i32_91 dim 0 : vector<16x128xf32>, i32 -> vector<16x128xf32>
    %cst_92 = arith.constant 0xFF800000 : f32
    %247 = vector.broadcast %cst_92 : f32 to vector<16x128xf32>
    %248 = arith.select %5, %246, %247 : vector<16x128xi1>, vector<16x128xf32>
    %249 = arith.maximumf %245, %248 : vector<16x128xf32>
    %250 = arith.subf %192, %249 : vector<16x128xf32>
    %cst_93 = arith.constant 0.000000e+00 : f32
    %251 = vector.broadcast %cst_93 : f32 to vector<16x128xf32>
    %252 = arith.maximumf %250, %251 : vector<16x128xf32>
    %253 = arith.mulf %216, %252 : vector<16x128xf32>
    %254 = arith.subf %252, %253 : vector<16x128xf32>
    %cst_94 = arith.constant 0.000000e+00 : f32
    %255 = vector.broadcast %cst_94 : f32 to vector<16x128xf32>
    %256 = arith.maximumf %254, %255 : vector<16x128xf32>
    %257 = arith.addf %216, %256 : vector<16x128xf32>
    %c1_i32_95 = arith.constant 1 : i32
    %258 = tpu.dynamic_rotate %233 by %c1_i32_95 dim 0 : vector<16x128xf32>, i32 -> vector<16x128xf32>
    %cst_96 = arith.constant 0x7F800000 : f32
    %259 = vector.broadcast %cst_96 : f32 to vector<16x128xf32>
    %260 = arith.select %3, %258, %259 : vector<16x128xi1>, vector<16x128xf32>
    %261 = arith.minimumf %233, %260 : vector<16x128xf32>
    %c15_i32_97 = arith.constant 15 : i32
    %262 = tpu.dynamic_rotate %233 by %c15_i32_97 dim 0 : vector<16x128xf32>, i32 -> vector<16x128xf32>
    %cst_98 = arith.constant 0x7F800000 : f32
    %263 = vector.broadcast %cst_98 : f32 to vector<16x128xf32>
    %264 = arith.select %5, %262, %263 : vector<16x128xi1>, vector<16x128xf32>
    %265 = arith.minimumf %261, %264 : vector<16x128xf32>
    %c1_i32_99 = arith.constant 1 : i32
    %266 = tpu.dynamic_rotate %233 by %c1_i32_99 dim 1 : vector<16x128xf32>, i32 -> vector<16x128xf32>
    %cst_100 = arith.constant 0x7F800000 : f32
    %267 = vector.broadcast %cst_100 : f32 to vector<16x128xf32>
    %268 = arith.select %52, %266, %267 : vector<16x128xi1>, vector<16x128xf32>
    %269 = arith.minimumf %233, %268 : vector<16x128xf32>
    %c127_i32_101 = arith.constant 127 : i32
    %270 = tpu.dynamic_rotate %233 by %c127_i32_101 dim 1 : vector<16x128xf32>, i32 -> vector<16x128xf32>
    %cst_102 = arith.constant 0x7F800000 : f32
    %271 = vector.broadcast %cst_102 : f32 to vector<16x128xf32>
    %272 = arith.select %53, %270, %271 : vector<16x128xi1>, vector<16x128xf32>
    %273 = arith.minimumf %269, %272 : vector<16x128xf32>
    %274 = arith.minimumf %265, %273 : vector<16x128xf32>
    %c1_i32_103 = arith.constant 1 : i32
    %275 = tpu.dynamic_rotate %274 by %c1_i32_103 dim 1 : vector<16x128xf32>, i32 -> vector<16x128xf32>
    %cst_104 = arith.constant 0xFF800000 : f32
    %276 = vector.broadcast %cst_104 : f32 to vector<16x128xf32>
    %277 = arith.select %52, %275, %276 : vector<16x128xi1>, vector<16x128xf32>
    %278 = arith.maximumf %274, %277 : vector<16x128xf32>
    %c127_i32_105 = arith.constant 127 : i32
    %279 = tpu.dynamic_rotate %274 by %c127_i32_105 dim 1 : vector<16x128xf32>, i32 -> vector<16x128xf32>
    %cst_106 = arith.constant 0xFF800000 : f32
    %280 = vector.broadcast %cst_106 : f32 to vector<16x128xf32>
    %281 = arith.select %53, %279, %280 : vector<16x128xi1>, vector<16x128xf32>
    %282 = arith.maximumf %278, %281 : vector<16x128xf32>
    %c1_i32_107 = arith.constant 1 : i32
    %283 = tpu.dynamic_rotate %282 by %c1_i32_107 dim 0 : vector<16x128xf32>, i32 -> vector<16x128xf32>
    %cst_108 = arith.constant 0xFF800000 : f32
    %284 = vector.broadcast %cst_108 : f32 to vector<16x128xf32>
    %285 = arith.select %3, %283, %284 : vector<16x128xi1>, vector<16x128xf32>
    %286 = arith.maximumf %282, %285 : vector<16x128xf32>
    %c15_i32_109 = arith.constant 15 : i32
    %287 = tpu.dynamic_rotate %282 by %c15_i32_109 dim 0 : vector<16x128xf32>, i32 -> vector<16x128xf32>
    %cst_110 = arith.constant 0xFF800000 : f32
    %288 = vector.broadcast %cst_110 : f32 to vector<16x128xf32>
    %289 = arith.select %5, %287, %288 : vector<16x128xi1>, vector<16x128xf32>
    %290 = arith.maximumf %286, %289 : vector<16x128xf32>
    %291 = arith.subf %233, %290 : vector<16x128xf32>
    %cst_111 = arith.constant 0.000000e+00 : f32
    %292 = vector.broadcast %cst_111 : f32 to vector<16x128xf32>
    %293 = arith.maximumf %291, %292 : vector<16x128xf32>
    %294 = arith.mulf %257, %293 : vector<16x128xf32>
    %295 = arith.subf %293, %294 : vector<16x128xf32>
    %cst_112 = arith.constant 0.000000e+00 : f32
    %296 = vector.broadcast %cst_112 : f32 to vector<16x128xf32>
    %297 = arith.maximumf %295, %296 : vector<16x128xf32>
    %298 = arith.addf %257, %297 : vector<16x128xf32>
    %c1_i32_113 = arith.constant 1 : i32
    %299 = tpu.dynamic_rotate %274 by %c1_i32_113 dim 0 : vector<16x128xf32>, i32 -> vector<16x128xf32>
    %cst_114 = arith.constant 0x7F800000 : f32
    %300 = vector.broadcast %cst_114 : f32 to vector<16x128xf32>
    %301 = arith.select %3, %299, %300 : vector<16x128xi1>, vector<16x128xf32>
    %302 = arith.minimumf %274, %301 : vector<16x128xf32>
    %c15_i32_115 = arith.constant 15 : i32
    %303 = tpu.dynamic_rotate %274 by %c15_i32_115 dim 0 : vector<16x128xf32>, i32 -> vector<16x128xf32>
    %cst_116 = arith.constant 0x7F800000 : f32
    %304 = vector.broadcast %cst_116 : f32 to vector<16x128xf32>
    %305 = arith.select %5, %303, %304 : vector<16x128xi1>, vector<16x128xf32>
    %306 = arith.minimumf %302, %305 : vector<16x128xf32>
    %c1_i32_117 = arith.constant 1 : i32
    %307 = tpu.dynamic_rotate %274 by %c1_i32_117 dim 1 : vector<16x128xf32>, i32 -> vector<16x128xf32>
    %cst_118 = arith.constant 0x7F800000 : f32
    %308 = vector.broadcast %cst_118 : f32 to vector<16x128xf32>
    %309 = arith.select %52, %307, %308 : vector<16x128xi1>, vector<16x128xf32>
    %310 = arith.minimumf %274, %309 : vector<16x128xf32>
    %c127_i32_119 = arith.constant 127 : i32
    %311 = tpu.dynamic_rotate %274 by %c127_i32_119 dim 1 : vector<16x128xf32>, i32 -> vector<16x128xf32>
    %cst_120 = arith.constant 0x7F800000 : f32
    %312 = vector.broadcast %cst_120 : f32 to vector<16x128xf32>
    %313 = arith.select %53, %311, %312 : vector<16x128xi1>, vector<16x128xf32>
    %314 = arith.minimumf %310, %313 : vector<16x128xf32>
    %315 = arith.minimumf %306, %314 : vector<16x128xf32>
    %c1_i32_121 = arith.constant 1 : i32
    %316 = tpu.dynamic_rotate %315 by %c1_i32_121 dim 1 : vector<16x128xf32>, i32 -> vector<16x128xf32>
    %cst_122 = arith.constant 0xFF800000 : f32
    %317 = vector.broadcast %cst_122 : f32 to vector<16x128xf32>
    %318 = arith.select %52, %316, %317 : vector<16x128xi1>, vector<16x128xf32>
    %319 = arith.maximumf %315, %318 : vector<16x128xf32>
    %c127_i32_123 = arith.constant 127 : i32
    %320 = tpu.dynamic_rotate %315 by %c127_i32_123 dim 1 : vector<16x128xf32>, i32 -> vector<16x128xf32>
    %cst_124 = arith.constant 0xFF800000 : f32
    %321 = vector.broadcast %cst_124 : f32 to vector<16x128xf32>
    %322 = arith.select %53, %320, %321 : vector<16x128xi1>, vector<16x128xf32>
    %323 = arith.maximumf %319, %322 : vector<16x128xf32>
    %c1_i32_125 = arith.constant 1 : i32
    %324 = tpu.dynamic_rotate %323 by %c1_i32_125 dim 0 : vector<16x128xf32>, i32 -> vector<16x128xf32>
    %cst_126 = arith.constant 0xFF800000 : f32
    %325 = vector.broadcast %cst_126 : f32 to vector<16x128xf32>
    %326 = arith.select %3, %324, %325 : vector<16x128xi1>, vector<16x128xf32>
    %327 = arith.maximumf %323, %326 : vector<16x128xf32>
    %c15_i32_127 = arith.constant 15 : i32
    %328 = tpu.dynamic_rotate %323 by %c15_i32_127 dim 0 : vector<16x128xf32>, i32 -> vector<16x128xf32>
    %cst_128 = arith.constant 0xFF800000 : f32
    %329 = vector.broadcast %cst_128 : f32 to vector<16x128xf32>
    %330 = arith.select %5, %328, %329 : vector<16x128xi1>, vector<16x128xf32>
    %331 = arith.maximumf %327, %330 : vector<16x128xf32>
    %332 = arith.subf %274, %331 : vector<16x128xf32>
    %cst_129 = arith.constant 0.000000e+00 : f32
    %333 = vector.broadcast %cst_129 : f32 to vector<16x128xf32>
    %334 = arith.maximumf %332, %333 : vector<16x128xf32>
    %335 = arith.mulf %298, %334 : vector<16x128xf32>
    %336 = arith.subf %334, %335 : vector<16x128xf32>
    %cst_130 = arith.constant 0.000000e+00 : f32
    %337 = vector.broadcast %cst_130 : f32 to vector<16x128xf32>
    %338 = arith.maximumf %336, %337 : vector<16x128xf32>
    %339 = arith.addf %298, %338 : vector<16x128xf32>
    %c1_i32_131 = arith.constant 1 : i32
    %340 = tpu.dynamic_rotate %315 by %c1_i32_131 dim 0 : vector<16x128xf32>, i32 -> vector<16x128xf32>
    %cst_132 = arith.constant 0x7F800000 : f32
    %341 = vector.broadcast %cst_132 : f32 to vector<16x128xf32>
    %342 = arith.select %3, %340, %341 : vector<16x128xi1>, vector<16x128xf32>
    %343 = arith.minimumf %315, %342 : vector<16x128xf32>
    %c15_i32_133 = arith.constant 15 : i32
    %344 = tpu.dynamic_rotate %315 by %c15_i32_133 dim 0 : vector<16x128xf32>, i32 -> vector<16x128xf32>
    %cst_134 = arith.constant 0x7F800000 : f32
    %345 = vector.broadcast %cst_134 : f32 to vector<16x128xf32>
    %346 = arith.select %5, %344, %345 : vector<16x128xi1>, vector<16x128xf32>
    %347 = arith.minimumf %343, %346 : vector<16x128xf32>
    %c1_i32_135 = arith.constant 1 : i32
    %348 = tpu.dynamic_rotate %315 by %c1_i32_135 dim 1 : vector<16x128xf32>, i32 -> vector<16x128xf32>
    %cst_136 = arith.constant 0x7F800000 : f32
    %349 = vector.broadcast %cst_136 : f32 to vector<16x128xf32>
    %350 = arith.select %52, %348, %349 : vector<16x128xi1>, vector<16x128xf32>
    %351 = arith.minimumf %315, %350 : vector<16x128xf32>
    %c127_i32_137 = arith.constant 127 : i32
    %352 = tpu.dynamic_rotate %315 by %c127_i32_137 dim 1 : vector<16x128xf32>, i32 -> vector<16x128xf32>
    %cst_138 = arith.constant 0x7F800000 : f32
    %353 = vector.broadcast %cst_138 : f32 to vector<16x128xf32>
    %354 = arith.select %53, %352, %353 : vector<16x128xi1>, vector<16x128xf32>
    %355 = arith.minimumf %351, %354 : vector<16x128xf32>
    %356 = arith.minimumf %347, %355 : vector<16x128xf32>
    %c1_i32_139 = arith.constant 1 : i32
    %357 = tpu.dynamic_rotate %356 by %c1_i32_139 dim 1 : vector<16x128xf32>, i32 -> vector<16x128xf32>
    %cst_140 = arith.constant 0xFF800000 : f32
    %358 = vector.broadcast %cst_140 : f32 to vector<16x128xf32>
    %359 = arith.select %52, %357, %358 : vector<16x128xi1>, vector<16x128xf32>
    %360 = arith.maximumf %356, %359 : vector<16x128xf32>
    %c127_i32_141 = arith.constant 127 : i32
    %361 = tpu.dynamic_rotate %356 by %c127_i32_141 dim 1 : vector<16x128xf32>, i32 -> vector<16x128xf32>
    %cst_142 = arith.constant 0xFF800000 : f32
    %362 = vector.broadcast %cst_142 : f32 to vector<16x128xf32>
    %363 = arith.select %53, %361, %362 : vector<16x128xi1>, vector<16x128xf32>
    %364 = arith.maximumf %360, %363 : vector<16x128xf32>
    %c1_i32_143 = arith.constant 1 : i32
    %365 = tpu.dynamic_rotate %364 by %c1_i32_143 dim 0 : vector<16x128xf32>, i32 -> vector<16x128xf32>
    %cst_144 = arith.constant 0xFF800000 : f32
    %366 = vector.broadcast %cst_144 : f32 to vector<16x128xf32>
    %367 = arith.select %3, %365, %366 : vector<16x128xi1>, vector<16x128xf32>
    %368 = arith.maximumf %364, %367 : vector<16x128xf32>
    %c15_i32_145 = arith.constant 15 : i32
    %369 = tpu.dynamic_rotate %364 by %c15_i32_145 dim 0 : vector<16x128xf32>, i32 -> vector<16x128xf32>
    %cst_146 = arith.constant 0xFF800000 : f32
    %370 = vector.broadcast %cst_146 : f32 to vector<16x128xf32>
    %371 = arith.select %5, %369, %370 : vector<16x128xi1>, vector<16x128xf32>
    %372 = arith.maximumf %368, %371 : vector<16x128xf32>
    %373 = arith.subf %315, %372 : vector<16x128xf32>
    %cst_147 = arith.constant 0.000000e+00 : f32
    %374 = vector.broadcast %cst_147 : f32 to vector<16x128xf32>
    %375 = arith.maximumf %373, %374 : vector<16x128xf32>
    %376 = arith.mulf %339, %375 : vector<16x128xf32>
    %377 = arith.subf %375, %376 : vector<16x128xf32>
    %cst_148 = arith.constant 0.000000e+00 : f32
    %378 = vector.broadcast %cst_148 : f32 to vector<16x128xf32>
    %379 = arith.maximumf %377, %378 : vector<16x128xf32>
    %380 = arith.addf %339, %379 : vector<16x128xf32>
    %c1_i32_149 = arith.constant 1 : i32
    %381 = tpu.dynamic_rotate %356 by %c1_i32_149 dim 0 : vector<16x128xf32>, i32 -> vector<16x128xf32>
    %cst_150 = arith.constant 0x7F800000 : f32
    %382 = vector.broadcast %cst_150 : f32 to vector<16x128xf32>
    %383 = arith.select %3, %381, %382 : vector<16x128xi1>, vector<16x128xf32>
    %384 = arith.minimumf %356, %383 : vector<16x128xf32>
    %c15_i32_151 = arith.constant 15 : i32
    %385 = tpu.dynamic_rotate %356 by %c15_i32_151 dim 0 : vector<16x128xf32>, i32 -> vector<16x128xf32>
    %cst_152 = arith.constant 0x7F800000 : f32
    %386 = vector.broadcast %cst_152 : f32 to vector<16x128xf32>
    %387 = arith.select %5, %385, %386 : vector<16x128xi1>, vector<16x128xf32>
    %388 = arith.minimumf %384, %387 : vector<16x128xf32>
    %c1_i32_153 = arith.constant 1 : i32
    %389 = tpu.dynamic_rotate %356 by %c1_i32_153 dim 1 : vector<16x128xf32>, i32 -> vector<16x128xf32>
    %cst_154 = arith.constant 0x7F800000 : f32
    %390 = vector.broadcast %cst_154 : f32 to vector<16x128xf32>
    %391 = arith.select %52, %389, %390 : vector<16x128xi1>, vector<16x128xf32>
    %392 = arith.minimumf %356, %391 : vector<16x128xf32>
    %c127_i32_155 = arith.constant 127 : i32
    %393 = tpu.dynamic_rotate %356 by %c127_i32_155 dim 1 : vector<16x128xf32>, i32 -> vector<16x128xf32>
    %cst_156 = arith.constant 0x7F800000 : f32
    %394 = vector.broadcast %cst_156 : f32 to vector<16x128xf32>
    %395 = arith.select %53, %393, %394 : vector<16x128xi1>, vector<16x128xf32>
    %396 = arith.minimumf %392, %395 : vector<16x128xf32>
    %397 = arith.minimumf %388, %396 : vector<16x128xf32>
    %c1_i32_157 = arith.constant 1 : i32
    %398 = tpu.dynamic_rotate %397 by %c1_i32_157 dim 1 : vector<16x128xf32>, i32 -> vector<16x128xf32>
    %cst_158 = arith.constant 0xFF800000 : f32
    %399 = vector.broadcast %cst_158 : f32 to vector<16x128xf32>
    %400 = arith.select %52, %398, %399 : vector<16x128xi1>, vector<16x128xf32>
    %401 = arith.maximumf %397, %400 : vector<16x128xf32>
    %c127_i32_159 = arith.constant 127 : i32
    %402 = tpu.dynamic_rotate %397 by %c127_i32_159 dim 1 : vector<16x128xf32>, i32 -> vector<16x128xf32>
    %cst_160 = arith.constant 0xFF800000 : f32
    %403 = vector.broadcast %cst_160 : f32 to vector<16x128xf32>
    %404 = arith.select %53, %402, %403 : vector<16x128xi1>, vector<16x128xf32>
    %405 = arith.maximumf %401, %404 : vector<16x128xf32>
    %c1_i32_161 = arith.constant 1 : i32
    %406 = tpu.dynamic_rotate %405 by %c1_i32_161 dim 0 : vector<16x128xf32>, i32 -> vector<16x128xf32>
    %cst_162 = arith.constant 0xFF800000 : f32
    %407 = vector.broadcast %cst_162 : f32 to vector<16x128xf32>
    %408 = arith.select %3, %406, %407 : vector<16x128xi1>, vector<16x128xf32>
    %409 = arith.maximumf %405, %408 : vector<16x128xf32>
    %c15_i32_163 = arith.constant 15 : i32
    %410 = tpu.dynamic_rotate %405 by %c15_i32_163 dim 0 : vector<16x128xf32>, i32 -> vector<16x128xf32>
    %cst_164 = arith.constant 0xFF800000 : f32
    %411 = vector.broadcast %cst_164 : f32 to vector<16x128xf32>
    %412 = arith.select %5, %410, %411 : vector<16x128xi1>, vector<16x128xf32>
    %413 = arith.maximumf %409, %412 : vector<16x128xf32>
    %414 = arith.subf %356, %413 : vector<16x128xf32>
    %cst_165 = arith.constant 0.000000e+00 : f32
    %415 = vector.broadcast %cst_165 : f32 to vector<16x128xf32>
    %416 = arith.maximumf %414, %415 : vector<16x128xf32>
    %417 = arith.mulf %380, %416 : vector<16x128xf32>
    %418 = arith.subf %416, %417 : vector<16x128xf32>
    %cst_166 = arith.constant 0.000000e+00 : f32
    %419 = vector.broadcast %cst_166 : f32 to vector<16x128xf32>
    %420 = arith.maximumf %418, %419 : vector<16x128xf32>
    %421 = arith.addf %380, %420 : vector<16x128xf32>
    %c1_i32_167 = arith.constant 1 : i32
    %422 = tpu.dynamic_rotate %397 by %c1_i32_167 dim 0 : vector<16x128xf32>, i32 -> vector<16x128xf32>
    %cst_168 = arith.constant 0x7F800000 : f32
    %423 = vector.broadcast %cst_168 : f32 to vector<16x128xf32>
    %424 = arith.select %3, %422, %423 : vector<16x128xi1>, vector<16x128xf32>
    %425 = arith.minimumf %397, %424 : vector<16x128xf32>
    %c15_i32_169 = arith.constant 15 : i32
    %426 = tpu.dynamic_rotate %397 by %c15_i32_169 dim 0 : vector<16x128xf32>, i32 -> vector<16x128xf32>
    %cst_170 = arith.constant 0x7F800000 : f32
    %427 = vector.broadcast %cst_170 : f32 to vector<16x128xf32>
    %428 = arith.select %5, %426, %427 : vector<16x128xi1>, vector<16x128xf32>
    %429 = arith.minimumf %425, %428 : vector<16x128xf32>
    %c1_i32_171 = arith.constant 1 : i32
    %430 = tpu.dynamic_rotate %397 by %c1_i32_171 dim 1 : vector<16x128xf32>, i32 -> vector<16x128xf32>
    %cst_172 = arith.constant 0x7F800000 : f32
    %431 = vector.broadcast %cst_172 : f32 to vector<16x128xf32>
    %432 = arith.select %52, %430, %431 : vector<16x128xi1>, vector<16x128xf32>
    %433 = arith.minimumf %397, %432 : vector<16x128xf32>
    %c127_i32_173 = arith.constant 127 : i32
    %434 = tpu.dynamic_rotate %397 by %c127_i32_173 dim 1 : vector<16x128xf32>, i32 -> vector<16x128xf32>
    %cst_174 = arith.constant 0x7F800000 : f32
    %435 = vector.broadcast %cst_174 : f32 to vector<16x128xf32>
    %436 = arith.select %53, %434, %435 : vector<16x128xi1>, vector<16x128xf32>
    %437 = arith.minimumf %433, %436 : vector<16x128xf32>
    %438 = arith.minimumf %429, %437 : vector<16x128xf32>
    %c1_i32_175 = arith.constant 1 : i32
    %439 = tpu.dynamic_rotate %438 by %c1_i32_175 dim 1 : vector<16x128xf32>, i32 -> vector<16x128xf32>
    %cst_176 = arith.constant 0xFF800000 : f32
    %440 = vector.broadcast %cst_176 : f32 to vector<16x128xf32>
    %441 = arith.select %52, %439, %440 : vector<16x128xi1>, vector<16x128xf32>
    %442 = arith.maximumf %438, %441 : vector<16x128xf32>
    %c127_i32_177 = arith.constant 127 : i32
    %443 = tpu.dynamic_rotate %438 by %c127_i32_177 dim 1 : vector<16x128xf32>, i32 -> vector<16x128xf32>
    %cst_178 = arith.constant 0xFF800000 : f32
    %444 = vector.broadcast %cst_178 : f32 to vector<16x128xf32>
    %445 = arith.select %53, %443, %444 : vector<16x128xi1>, vector<16x128xf32>
    %446 = arith.maximumf %442, %445 : vector<16x128xf32>
    %c1_i32_179 = arith.constant 1 : i32
    %447 = tpu.dynamic_rotate %446 by %c1_i32_179 dim 0 : vector<16x128xf32>, i32 -> vector<16x128xf32>
    %cst_180 = arith.constant 0xFF800000 : f32
    %448 = vector.broadcast %cst_180 : f32 to vector<16x128xf32>
    %449 = arith.select %3, %447, %448 : vector<16x128xi1>, vector<16x128xf32>
    %450 = arith.maximumf %446, %449 : vector<16x128xf32>
    %c15_i32_181 = arith.constant 15 : i32
    %451 = tpu.dynamic_rotate %446 by %c15_i32_181 dim 0 : vector<16x128xf32>, i32 -> vector<16x128xf32>
    %cst_182 = arith.constant 0xFF800000 : f32
    %452 = vector.broadcast %cst_182 : f32 to vector<16x128xf32>
    %453 = arith.select %5, %451, %452 : vector<16x128xi1>, vector<16x128xf32>
    %454 = arith.maximumf %450, %453 : vector<16x128xf32>
    %455 = arith.subf %397, %454 : vector<16x128xf32>
    %cst_183 = arith.constant 0.000000e+00 : f32
    %456 = vector.broadcast %cst_183 : f32 to vector<16x128xf32>
    %457 = arith.maximumf %455, %456 : vector<16x128xf32>
    %458 = arith.mulf %421, %457 : vector<16x128xf32>
    %459 = arith.subf %457, %458 : vector<16x128xf32>
    %cst_184 = arith.constant 0.000000e+00 : f32
    %460 = vector.broadcast %cst_184 : f32 to vector<16x128xf32>
    %461 = arith.maximumf %459, %460 : vector<16x128xf32>
    %462 = arith.addf %421, %461 : vector<16x128xf32>
    %c1_i32_185 = arith.constant 1 : i32
    %463 = tpu.dynamic_rotate %438 by %c1_i32_185 dim 0 : vector<16x128xf32>, i32 -> vector<16x128xf32>
    %cst_186 = arith.constant 0x7F800000 : f32
    %464 = vector.broadcast %cst_186 : f32 to vector<16x128xf32>
    %465 = arith.select %3, %463, %464 : vector<16x128xi1>, vector<16x128xf32>
    %466 = arith.minimumf %438, %465 : vector<16x128xf32>
    %c15_i32_187 = arith.constant 15 : i32
    %467 = tpu.dynamic_rotate %438 by %c15_i32_187 dim 0 : vector<16x128xf32>, i32 -> vector<16x128xf32>
    %cst_188 = arith.constant 0x7F800000 : f32
    %468 = vector.broadcast %cst_188 : f32 to vector<16x128xf32>
    %469 = arith.select %5, %467, %468 : vector<16x128xi1>, vector<16x128xf32>
    %470 = arith.minimumf %466, %469 : vector<16x128xf32>
    %c1_i32_189 = arith.constant 1 : i32
    %471 = tpu.dynamic_rotate %438 by %c1_i32_189 dim 1 : vector<16x128xf32>, i32 -> vector<16x128xf32>
    %cst_190 = arith.constant 0x7F800000 : f32
    %472 = vector.broadcast %cst_190 : f32 to vector<16x128xf32>
    %473 = arith.select %52, %471, %472 : vector<16x128xi1>, vector<16x128xf32>
    %474 = arith.minimumf %438, %473 : vector<16x128xf32>
    %c127_i32_191 = arith.constant 127 : i32
    %475 = tpu.dynamic_rotate %438 by %c127_i32_191 dim 1 : vector<16x128xf32>, i32 -> vector<16x128xf32>
    %cst_192 = arith.constant 0x7F800000 : f32
    %476 = vector.broadcast %cst_192 : f32 to vector<16x128xf32>
    %477 = arith.select %53, %475, %476 : vector<16x128xi1>, vector<16x128xf32>
    %478 = arith.minimumf %474, %477 : vector<16x128xf32>
    %479 = arith.minimumf %470, %478 : vector<16x128xf32>
    %c1_i32_193 = arith.constant 1 : i32
    %480 = tpu.dynamic_rotate %479 by %c1_i32_193 dim 1 : vector<16x128xf32>, i32 -> vector<16x128xf32>
    %cst_194 = arith.constant 0xFF800000 : f32
    %481 = vector.broadcast %cst_194 : f32 to vector<16x128xf32>
    %482 = arith.select %52, %480, %481 : vector<16x128xi1>, vector<16x128xf32>
    %483 = arith.maximumf %479, %482 : vector<16x128xf32>
    %c127_i32_195 = arith.constant 127 : i32
    %484 = tpu.dynamic_rotate %479 by %c127_i32_195 dim 1 : vector<16x128xf32>, i32 -> vector<16x128xf32>
    %cst_196 = arith.constant 0xFF800000 : f32
    %485 = vector.broadcast %cst_196 : f32 to vector<16x128xf32>
    %486 = arith.select %53, %484, %485 : vector<16x128xi1>, vector<16x128xf32>
    %487 = arith.maximumf %483, %486 : vector<16x128xf32>
    %c1_i32_197 = arith.constant 1 : i32
    %488 = tpu.dynamic_rotate %487 by %c1_i32_197 dim 0 : vector<16x128xf32>, i32 -> vector<16x128xf32>
    %cst_198 = arith.constant 0xFF800000 : f32
    %489 = vector.broadcast %cst_198 : f32 to vector<16x128xf32>
    %490 = arith.select %3, %488, %489 : vector<16x128xi1>, vector<16x128xf32>
    %491 = arith.maximumf %487, %490 : vector<16x128xf32>
    %c15_i32_199 = arith.constant 15 : i32
    %492 = tpu.dynamic_rotate %487 by %c15_i32_199 dim 0 : vector<16x128xf32>, i32 -> vector<16x128xf32>
    %cst_200 = arith.constant 0xFF800000 : f32
    %493 = vector.broadcast %cst_200 : f32 to vector<16x128xf32>
    %494 = arith.select %5, %492, %493 : vector<16x128xi1>, vector<16x128xf32>
    %495 = arith.maximumf %491, %494 : vector<16x128xf32>
    %496 = arith.subf %438, %495 : vector<16x128xf32>
    %cst_201 = arith.constant 0.000000e+00 : f32
    %497 = vector.broadcast %cst_201 : f32 to vector<16x128xf32>
    %498 = arith.maximumf %496, %497 : vector<16x128xf32>
    %499 = arith.mulf %462, %498 : vector<16x128xf32>
    %500 = arith.subf %498, %499 : vector<16x128xf32>
    %cst_202 = arith.constant 0.000000e+00 : f32
    %501 = vector.broadcast %cst_202 : f32 to vector<16x128xf32>
    %502 = arith.maximumf %500, %501 : vector<16x128xf32>
    %503 = arith.addf %462, %502 : vector<16x128xf32>
    %c1_i32_203 = arith.constant 1 : i32
    %504 = tpu.dynamic_rotate %55 by %c1_i32_203 dim 0 : vector<16x128xf32>, i32 -> vector<16x128xf32>
    %cst_204 = arith.constant 0x7F800000 : f32
    %505 = vector.broadcast %cst_204 : f32 to vector<16x128xf32>
    %506 = arith.select %3, %504, %505 : vector<16x128xi1>, vector<16x128xf32>
    %507 = arith.minimumf %55, %506 : vector<16x128xf32>
    %c15_i32_205 = arith.constant 15 : i32
    %508 = tpu.dynamic_rotate %55 by %c15_i32_205 dim 0 : vector<16x128xf32>, i32 -> vector<16x128xf32>
    %cst_206 = arith.constant 0x7F800000 : f32
    %509 = vector.broadcast %cst_206 : f32 to vector<16x128xf32>
    %510 = arith.select %5, %508, %509 : vector<16x128xi1>, vector<16x128xf32>
    %511 = arith.minimumf %507, %510 : vector<16x128xf32>
    %c1_i32_207 = arith.constant 1 : i32
    %512 = tpu.dynamic_rotate %55 by %c1_i32_207 dim 1 : vector<16x128xf32>, i32 -> vector<16x128xf32>
    %cst_208 = arith.constant 0x7F800000 : f32
    %513 = vector.broadcast %cst_208 : f32 to vector<16x128xf32>
    %514 = arith.select %52, %512, %513 : vector<16x128xi1>, vector<16x128xf32>
    %515 = arith.minimumf %55, %514 : vector<16x128xf32>
    %c127_i32_209 = arith.constant 127 : i32
    %516 = tpu.dynamic_rotate %55 by %c127_i32_209 dim 1 : vector<16x128xf32>, i32 -> vector<16x128xf32>
    %cst_210 = arith.constant 0x7F800000 : f32
    %517 = vector.broadcast %cst_210 : f32 to vector<16x128xf32>
    %518 = arith.select %53, %516, %517 : vector<16x128xi1>, vector<16x128xf32>
    %519 = arith.minimumf %515, %518 : vector<16x128xf32>
    %520 = arith.minimumf %511, %519 : vector<16x128xf32>
    %c1_i32_211 = arith.constant 1 : i32
    %521 = tpu.dynamic_rotate %520 by %c1_i32_211 dim 1 : vector<16x128xf32>, i32 -> vector<16x128xf32>
    %cst_212 = arith.constant 0xFF800000 : f32
    %522 = vector.broadcast %cst_212 : f32 to vector<16x128xf32>
    %523 = arith.select %52, %521, %522 : vector<16x128xi1>, vector<16x128xf32>
    %524 = arith.maximumf %520, %523 : vector<16x128xf32>
    %c127_i32_213 = arith.constant 127 : i32
    %525 = tpu.dynamic_rotate %520 by %c127_i32_213 dim 1 : vector<16x128xf32>, i32 -> vector<16x128xf32>
    %cst_214 = arith.constant 0xFF800000 : f32
    %526 = vector.broadcast %cst_214 : f32 to vector<16x128xf32>
    %527 = arith.select %53, %525, %526 : vector<16x128xi1>, vector<16x128xf32>
    %528 = arith.maximumf %524, %527 : vector<16x128xf32>
    %c1_i32_215 = arith.constant 1 : i32
    %529 = tpu.dynamic_rotate %528 by %c1_i32_215 dim 0 : vector<16x128xf32>, i32 -> vector<16x128xf32>
    %cst_216 = arith.constant 0xFF800000 : f32
    %530 = vector.broadcast %cst_216 : f32 to vector<16x128xf32>
    %531 = arith.select %3, %529, %530 : vector<16x128xi1>, vector<16x128xf32>
    %532 = arith.maximumf %528, %531 : vector<16x128xf32>
    %c15_i32_217 = arith.constant 15 : i32
    %533 = tpu.dynamic_rotate %528 by %c15_i32_217 dim 0 : vector<16x128xf32>, i32 -> vector<16x128xf32>
    %cst_218 = arith.constant 0xFF800000 : f32
    %534 = vector.broadcast %cst_218 : f32 to vector<16x128xf32>
    %535 = arith.select %5, %533, %534 : vector<16x128xi1>, vector<16x128xf32>
    %536 = arith.maximumf %532, %535 : vector<16x128xf32>
    %537 = arith.subf %55, %536 : vector<16x128xf32>
    %cst_219 = arith.constant 0.000000e+00 : f32
    %538 = vector.broadcast %cst_219 : f32 to vector<16x128xf32>
    %539 = arith.maximumf %537, %538 : vector<16x128xf32>
    %c1_i32_220 = arith.constant 1 : i32
    %540 = tpu.dynamic_rotate %520 by %c1_i32_220 dim 0 : vector<16x128xf32>, i32 -> vector<16x128xf32>
    %cst_221 = arith.constant 0x7F800000 : f32
    %541 = vector.broadcast %cst_221 : f32 to vector<16x128xf32>
    %542 = arith.select %3, %540, %541 : vector<16x128xi1>, vector<16x128xf32>
    %543 = arith.minimumf %520, %542 : vector<16x128xf32>
    %c15_i32_222 = arith.constant 15 : i32
    %544 = tpu.dynamic_rotate %520 by %c15_i32_222 dim 0 : vector<16x128xf32>, i32 -> vector<16x128xf32>
    %cst_223 = arith.constant 0x7F800000 : f32
    %545 = vector.broadcast %cst_223 : f32 to vector<16x128xf32>
    %546 = arith.select %5, %544, %545 : vector<16x128xi1>, vector<16x128xf32>
    %547 = arith.minimumf %543, %546 : vector<16x128xf32>
    %c1_i32_224 = arith.constant 1 : i32
    %548 = tpu.dynamic_rotate %520 by %c1_i32_224 dim 1 : vector<16x128xf32>, i32 -> vector<16x128xf32>
    %cst_225 = arith.constant 0x7F800000 : f32
    %549 = vector.broadcast %cst_225 : f32 to vector<16x128xf32>
    %550 = arith.select %52, %548, %549 : vector<16x128xi1>, vector<16x128xf32>
    %551 = arith.minimumf %520, %550 : vector<16x128xf32>
    %c127_i32_226 = arith.constant 127 : i32
    %552 = tpu.dynamic_rotate %520 by %c127_i32_226 dim 1 : vector<16x128xf32>, i32 -> vector<16x128xf32>
    %cst_227 = arith.constant 0x7F800000 : f32
    %553 = vector.broadcast %cst_227 : f32 to vector<16x128xf32>
    %554 = arith.select %53, %552, %553 : vector<16x128xi1>, vector<16x128xf32>
    %555 = arith.minimumf %551, %554 : vector<16x128xf32>
    %556 = arith.minimumf %547, %555 : vector<16x128xf32>
    %c1_i32_228 = arith.constant 1 : i32
    %557 = tpu.dynamic_rotate %556 by %c1_i32_228 dim 1 : vector<16x128xf32>, i32 -> vector<16x128xf32>
    %cst_229 = arith.constant 0xFF800000 : f32
    %558 = vector.broadcast %cst_229 : f32 to vector<16x128xf32>
    %559 = arith.select %52, %557, %558 : vector<16x128xi1>, vector<16x128xf32>
    %560 = arith.maximumf %556, %559 : vector<16x128xf32>
    %c127_i32_230 = arith.constant 127 : i32
    %561 = tpu.dynamic_rotate %556 by %c127_i32_230 dim 1 : vector<16x128xf32>, i32 -> vector<16x128xf32>
    %cst_231 = arith.constant 0xFF800000 : f32
    %562 = vector.broadcast %cst_231 : f32 to vector<16x128xf32>
    %563 = arith.select %53, %561, %562 : vector<16x128xi1>, vector<16x128xf32>
    %564 = arith.maximumf %560, %563 : vector<16x128xf32>
    %c1_i32_232 = arith.constant 1 : i32
    %565 = tpu.dynamic_rotate %564 by %c1_i32_232 dim 0 : vector<16x128xf32>, i32 -> vector<16x128xf32>
    %cst_233 = arith.constant 0xFF800000 : f32
    %566 = vector.broadcast %cst_233 : f32 to vector<16x128xf32>
    %567 = arith.select %3, %565, %566 : vector<16x128xi1>, vector<16x128xf32>
    %568 = arith.maximumf %564, %567 : vector<16x128xf32>
    %c15_i32_234 = arith.constant 15 : i32
    %569 = tpu.dynamic_rotate %564 by %c15_i32_234 dim 0 : vector<16x128xf32>, i32 -> vector<16x128xf32>
    %cst_235 = arith.constant 0xFF800000 : f32
    %570 = vector.broadcast %cst_235 : f32 to vector<16x128xf32>
    %571 = arith.select %5, %569, %570 : vector<16x128xi1>, vector<16x128xf32>
    %572 = arith.maximumf %568, %571 : vector<16x128xf32>
    %573 = arith.subf %520, %572 : vector<16x128xf32>
    %cst_236 = arith.constant 0.000000e+00 : f32
    %574 = vector.broadcast %cst_236 : f32 to vector<16x128xf32>
    %575 = arith.maximumf %573, %574 : vector<16x128xf32>
    %576 = arith.mulf %539, %575 : vector<16x128xf32>
    %577 = arith.subf %575, %576 : vector<16x128xf32>
    %cst_237 = arith.constant 0.000000e+00 : f32
    %578 = vector.broadcast %cst_237 : f32 to vector<16x128xf32>
    %579 = arith.maximumf %577, %578 : vector<16x128xf32>
    %580 = arith.addf %539, %579 : vector<16x128xf32>
    %c1_i32_238 = arith.constant 1 : i32
    %581 = tpu.dynamic_rotate %556 by %c1_i32_238 dim 0 : vector<16x128xf32>, i32 -> vector<16x128xf32>
    %cst_239 = arith.constant 0x7F800000 : f32
    %582 = vector.broadcast %cst_239 : f32 to vector<16x128xf32>
    %583 = arith.select %3, %581, %582 : vector<16x128xi1>, vector<16x128xf32>
    %584 = arith.minimumf %556, %583 : vector<16x128xf32>
    %c15_i32_240 = arith.constant 15 : i32
    %585 = tpu.dynamic_rotate %556 by %c15_i32_240 dim 0 : vector<16x128xf32>, i32 -> vector<16x128xf32>
    %cst_241 = arith.constant 0x7F800000 : f32
    %586 = vector.broadcast %cst_241 : f32 to vector<16x128xf32>
    %587 = arith.select %5, %585, %586 : vector<16x128xi1>, vector<16x128xf32>
    %588 = arith.minimumf %584, %587 : vector<16x128xf32>
    %c1_i32_242 = arith.constant 1 : i32
    %589 = tpu.dynamic_rotate %556 by %c1_i32_242 dim 1 : vector<16x128xf32>, i32 -> vector<16x128xf32>
    %cst_243 = arith.constant 0x7F800000 : f32
    %590 = vector.broadcast %cst_243 : f32 to vector<16x128xf32>
    %591 = arith.select %52, %589, %590 : vector<16x128xi1>, vector<16x128xf32>
    %592 = arith.minimumf %556, %591 : vector<16x128xf32>
    %c127_i32_244 = arith.constant 127 : i32
    %593 = tpu.dynamic_rotate %556 by %c127_i32_244 dim 1 : vector<16x128xf32>, i32 -> vector<16x128xf32>
    %cst_245 = arith.constant 0x7F800000 : f32
    %594 = vector.broadcast %cst_245 : f32 to vector<16x128xf32>
    %595 = arith.select %53, %593, %594 : vector<16x128xi1>, vector<16x128xf32>
    %596 = arith.minimumf %592, %595 : vector<16x128xf32>
    %597 = arith.minimumf %588, %596 : vector<16x128xf32>
    %c1_i32_246 = arith.constant 1 : i32
    %598 = tpu.dynamic_rotate %597 by %c1_i32_246 dim 1 : vector<16x128xf32>, i32 -> vector<16x128xf32>
    %cst_247 = arith.constant 0xFF800000 : f32
    %599 = vector.broadcast %cst_247 : f32 to vector<16x128xf32>
    %600 = arith.select %52, %598, %599 : vector<16x128xi1>, vector<16x128xf32>
    %601 = arith.maximumf %597, %600 : vector<16x128xf32>
    %c127_i32_248 = arith.constant 127 : i32
    %602 = tpu.dynamic_rotate %597 by %c127_i32_248 dim 1 : vector<16x128xf32>, i32 -> vector<16x128xf32>
    %cst_249 = arith.constant 0xFF800000 : f32
    %603 = vector.broadcast %cst_249 : f32 to vector<16x128xf32>
    %604 = arith.select %53, %602, %603 : vector<16x128xi1>, vector<16x128xf32>
    %605 = arith.maximumf %601, %604 : vector<16x128xf32>
    %c1_i32_250 = arith.constant 1 : i32
    %606 = tpu.dynamic_rotate %605 by %c1_i32_250 dim 0 : vector<16x128xf32>, i32 -> vector<16x128xf32>
    %cst_251 = arith.constant 0xFF800000 : f32
    %607 = vector.broadcast %cst_251 : f32 to vector<16x128xf32>
    %608 = arith.select %3, %606, %607 : vector<16x128xi1>, vector<16x128xf32>
    %609 = arith.maximumf %605, %608 : vector<16x128xf32>
    %c15_i32_252 = arith.constant 15 : i32
    %610 = tpu.dynamic_rotate %605 by %c15_i32_252 dim 0 : vector<16x128xf32>, i32 -> vector<16x128xf32>
    %cst_253 = arith.constant 0xFF800000 : f32
    %611 = vector.broadcast %cst_253 : f32 to vector<16x128xf32>
    %612 = arith.select %5, %610, %611 : vector<16x128xi1>, vector<16x128xf32>
    %613 = arith.maximumf %609, %612 : vector<16x128xf32>
    %614 = arith.subf %556, %613 : vector<16x128xf32>
    %cst_254 = arith.constant 0.000000e+00 : f32
    %615 = vector.broadcast %cst_254 : f32 to vector<16x128xf32>
    %616 = arith.maximumf %614, %615 : vector<16x128xf32>
    %617 = arith.mulf %580, %616 : vector<16x128xf32>
    %618 = arith.subf %616, %617 : vector<16x128xf32>
    %cst_255 = arith.constant 0.000000e+00 : f32
    %619 = vector.broadcast %cst_255 : f32 to vector<16x128xf32>
    %620 = arith.maximumf %618, %619 : vector<16x128xf32>
    %621 = arith.addf %580, %620 : vector<16x128xf32>
    %c1_i32_256 = arith.constant 1 : i32
    %622 = tpu.dynamic_rotate %597 by %c1_i32_256 dim 0 : vector<16x128xf32>, i32 -> vector<16x128xf32>
    %cst_257 = arith.constant 0x7F800000 : f32
    %623 = vector.broadcast %cst_257 : f32 to vector<16x128xf32>
    %624 = arith.select %3, %622, %623 : vector<16x128xi1>, vector<16x128xf32>
    %625 = arith.minimumf %597, %624 : vector<16x128xf32>
    %c15_i32_258 = arith.constant 15 : i32
    %626 = tpu.dynamic_rotate %597 by %c15_i32_258 dim 0 : vector<16x128xf32>, i32 -> vector<16x128xf32>
    %cst_259 = arith.constant 0x7F800000 : f32
    %627 = vector.broadcast %cst_259 : f32 to vector<16x128xf32>
    %628 = arith.select %5, %626, %627 : vector<16x128xi1>, vector<16x128xf32>
    %629 = arith.minimumf %625, %628 : vector<16x128xf32>
    %c1_i32_260 = arith.constant 1 : i32
    %630 = tpu.dynamic_rotate %597 by %c1_i32_260 dim 1 : vector<16x128xf32>, i32 -> vector<16x128xf32>
    %cst_261 = arith.constant 0x7F800000 : f32
    %631 = vector.broadcast %cst_261 : f32 to vector<16x128xf32>
    %632 = arith.select %52, %630, %631 : vector<16x128xi1>, vector<16x128xf32>
    %633 = arith.minimumf %597, %632 : vector<16x128xf32>
    %c127_i32_262 = arith.constant 127 : i32
    %634 = tpu.dynamic_rotate %597 by %c127_i32_262 dim 1 : vector<16x128xf32>, i32 -> vector<16x128xf32>
    %cst_263 = arith.constant 0x7F800000 : f32
    %635 = vector.broadcast %cst_263 : f32 to vector<16x128xf32>
    %636 = arith.select %53, %634, %635 : vector<16x128xi1>, vector<16x128xf32>
    %637 = arith.minimumf %633, %636 : vector<16x128xf32>
    %638 = arith.minimumf %629, %637 : vector<16x128xf32>
    %c1_i32_264 = arith.constant 1 : i32
    %639 = tpu.dynamic_rotate %638 by %c1_i32_264 dim 1 : vector<16x128xf32>, i32 -> vector<16x128xf32>
    %cst_265 = arith.constant 0xFF800000 : f32
    %640 = vector.broadcast %cst_265 : f32 to vector<16x128xf32>
    %641 = arith.select %52, %639, %640 : vector<16x128xi1>, vector<16x128xf32>
    %642 = arith.maximumf %638, %641 : vector<16x128xf32>
    %c127_i32_266 = arith.constant 127 : i32
    %643 = tpu.dynamic_rotate %638 by %c127_i32_266 dim 1 : vector<16x128xf32>, i32 -> vector<16x128xf32>
    %cst_267 = arith.constant 0xFF800000 : f32
    %644 = vector.broadcast %cst_267 : f32 to vector<16x128xf32>
    %645 = arith.select %53, %643, %644 : vector<16x128xi1>, vector<16x128xf32>
    %646 = arith.maximumf %642, %645 : vector<16x128xf32>
    %c1_i32_268 = arith.constant 1 : i32
    %647 = tpu.dynamic_rotate %646 by %c1_i32_268 dim 0 : vector<16x128xf32>, i32 -> vector<16x128xf32>
    %cst_269 = arith.constant 0xFF800000 : f32
    %648 = vector.broadcast %cst_269 : f32 to vector<16x128xf32>
    %649 = arith.select %3, %647, %648 : vector<16x128xi1>, vector<16x128xf32>
    %650 = arith.maximumf %646, %649 : vector<16x128xf32>
    %c15_i32_270 = arith.constant 15 : i32
    %651 = tpu.dynamic_rotate %646 by %c15_i32_270 dim 0 : vector<16x128xf32>, i32 -> vector<16x128xf32>
    %cst_271 = arith.constant 0xFF800000 : f32
    %652 = vector.broadcast %cst_271 : f32 to vector<16x128xf32>
    %653 = arith.select %5, %651, %652 : vector<16x128xi1>, vector<16x128xf32>
    %654 = arith.maximumf %650, %653 : vector<16x128xf32>
    %655 = arith.subf %597, %654 : vector<16x128xf32>
    %cst_272 = arith.constant 0.000000e+00 : f32
    %656 = vector.broadcast %cst_272 : f32 to vector<16x128xf32>
    %657 = arith.maximumf %655, %656 : vector<16x128xf32>
    %658 = arith.mulf %621, %657 : vector<16x128xf32>
    %659 = arith.subf %657, %658 : vector<16x128xf32>
    %cst_273 = arith.constant 0.000000e+00 : f32
    %660 = vector.broadcast %cst_273 : f32 to vector<16x128xf32>
    %661 = arith.maximumf %659, %660 : vector<16x128xf32>
    %662 = arith.addf %621, %661 : vector<16x128xf32>
    %c1_i32_274 = arith.constant 1 : i32
    %663 = tpu.dynamic_rotate %638 by %c1_i32_274 dim 0 : vector<16x128xf32>, i32 -> vector<16x128xf32>
    %cst_275 = arith.constant 0x7F800000 : f32
    %664 = vector.broadcast %cst_275 : f32 to vector<16x128xf32>
    %665 = arith.select %3, %663, %664 : vector<16x128xi1>, vector<16x128xf32>
    %666 = arith.minimumf %638, %665 : vector<16x128xf32>
    %c15_i32_276 = arith.constant 15 : i32
    %667 = tpu.dynamic_rotate %638 by %c15_i32_276 dim 0 : vector<16x128xf32>, i32 -> vector<16x128xf32>
    %cst_277 = arith.constant 0x7F800000 : f32
    %668 = vector.broadcast %cst_277 : f32 to vector<16x128xf32>
    %669 = arith.select %5, %667, %668 : vector<16x128xi1>, vector<16x128xf32>
    %670 = arith.minimumf %666, %669 : vector<16x128xf32>
    %c1_i32_278 = arith.constant 1 : i32
    %671 = tpu.dynamic_rotate %638 by %c1_i32_278 dim 1 : vector<16x128xf32>, i32 -> vector<16x128xf32>
    %cst_279 = arith.constant 0x7F800000 : f32
    %672 = vector.broadcast %cst_279 : f32 to vector<16x128xf32>
    %673 = arith.select %52, %671, %672 : vector<16x128xi1>, vector<16x128xf32>
    %674 = arith.minimumf %638, %673 : vector<16x128xf32>
    %c127_i32_280 = arith.constant 127 : i32
    %675 = tpu.dynamic_rotate %638 by %c127_i32_280 dim 1 : vector<16x128xf32>, i32 -> vector<16x128xf32>
    %cst_281 = arith.constant 0x7F800000 : f32
    %676 = vector.broadcast %cst_281 : f32 to vector<16x128xf32>
    %677 = arith.select %53, %675, %676 : vector<16x128xi1>, vector<16x128xf32>
    %678 = arith.minimumf %674, %677 : vector<16x128xf32>
    %679 = arith.minimumf %670, %678 : vector<16x128xf32>
    %c1_i32_282 = arith.constant 1 : i32
    %680 = tpu.dynamic_rotate %679 by %c1_i32_282 dim 1 : vector<16x128xf32>, i32 -> vector<16x128xf32>
    %cst_283 = arith.constant 0xFF800000 : f32
    %681 = vector.broadcast %cst_283 : f32 to vector<16x128xf32>
    %682 = arith.select %52, %680, %681 : vector<16x128xi1>, vector<16x128xf32>
    %683 = arith.maximumf %679, %682 : vector<16x128xf32>
    %c127_i32_284 = arith.constant 127 : i32
    %684 = tpu.dynamic_rotate %679 by %c127_i32_284 dim 1 : vector<16x128xf32>, i32 -> vector<16x128xf32>
    %cst_285 = arith.constant 0xFF800000 : f32
    %685 = vector.broadcast %cst_285 : f32 to vector<16x128xf32>
    %686 = arith.select %53, %684, %685 : vector<16x128xi1>, vector<16x128xf32>
    %687 = arith.maximumf %683, %686 : vector<16x128xf32>
    %c1_i32_286 = arith.constant 1 : i32
    %688 = tpu.dynamic_rotate %687 by %c1_i32_286 dim 0 : vector<16x128xf32>, i32 -> vector<16x128xf32>
    %cst_287 = arith.constant 0xFF800000 : f32
    %689 = vector.broadcast %cst_287 : f32 to vector<16x128xf32>
    %690 = arith.select %3, %688, %689 : vector<16x128xi1>, vector<16x128xf32>
    %691 = arith.maximumf %687, %690 : vector<16x128xf32>
    %c15_i32_288 = arith.constant 15 : i32
    %692 = tpu.dynamic_rotate %687 by %c15_i32_288 dim 0 : vector<16x128xf32>, i32 -> vector<16x128xf32>
    %cst_289 = arith.constant 0xFF800000 : f32
    %693 = vector.broadcast %cst_289 : f32 to vector<16x128xf32>
    %694 = arith.select %5, %692, %693 : vector<16x128xi1>, vector<16x128xf32>
    %695 = arith.maximumf %691, %694 : vector<16x128xf32>
    %696 = arith.subf %638, %695 : vector<16x128xf32>
    %cst_290 = arith.constant 0.000000e+00 : f32
    %697 = vector.broadcast %cst_290 : f32 to vector<16x128xf32>
    %698 = arith.maximumf %696, %697 : vector<16x128xf32>
    %699 = arith.mulf %662, %698 : vector<16x128xf32>
    %700 = arith.subf %698, %699 : vector<16x128xf32>
    %cst_291 = arith.constant 0.000000e+00 : f32
    %701 = vector.broadcast %cst_291 : f32 to vector<16x128xf32>
    %702 = arith.maximumf %700, %701 : vector<16x128xf32>
    %703 = arith.addf %662, %702 : vector<16x128xf32>
    %c1_i32_292 = arith.constant 1 : i32
    %704 = tpu.dynamic_rotate %679 by %c1_i32_292 dim 0 : vector<16x128xf32>, i32 -> vector<16x128xf32>
    %cst_293 = arith.constant 0x7F800000 : f32
    %705 = vector.broadcast %cst_293 : f32 to vector<16x128xf32>
    %706 = arith.select %3, %704, %705 : vector<16x128xi1>, vector<16x128xf32>
    %707 = arith.minimumf %679, %706 : vector<16x128xf32>
    %c15_i32_294 = arith.constant 15 : i32
    %708 = tpu.dynamic_rotate %679 by %c15_i32_294 dim 0 : vector<16x128xf32>, i32 -> vector<16x128xf32>
    %cst_295 = arith.constant 0x7F800000 : f32
    %709 = vector.broadcast %cst_295 : f32 to vector<16x128xf32>
    %710 = arith.select %5, %708, %709 : vector<16x128xi1>, vector<16x128xf32>
    %711 = arith.minimumf %707, %710 : vector<16x128xf32>
    %c1_i32_296 = arith.constant 1 : i32
    %712 = tpu.dynamic_rotate %679 by %c1_i32_296 dim 1 : vector<16x128xf32>, i32 -> vector<16x128xf32>
    %cst_297 = arith.constant 0x7F800000 : f32
    %713 = vector.broadcast %cst_297 : f32 to vector<16x128xf32>
    %714 = arith.select %52, %712, %713 : vector<16x128xi1>, vector<16x128xf32>
    %715 = arith.minimumf %679, %714 : vector<16x128xf32>
    %c127_i32_298 = arith.constant 127 : i32
    %716 = tpu.dynamic_rotate %679 by %c127_i32_298 dim 1 : vector<16x128xf32>, i32 -> vector<16x128xf32>
    %cst_299 = arith.constant 0x7F800000 : f32
    %717 = vector.broadcast %cst_299 : f32 to vector<16x128xf32>
    %718 = arith.select %53, %716, %717 : vector<16x128xi1>, vector<16x128xf32>
    %719 = arith.minimumf %715, %718 : vector<16x128xf32>
    %720 = arith.minimumf %711, %719 : vector<16x128xf32>
    %c1_i32_300 = arith.constant 1 : i32
    %721 = tpu.dynamic_rotate %720 by %c1_i32_300 dim 1 : vector<16x128xf32>, i32 -> vector<16x128xf32>
    %cst_301 = arith.constant 0xFF800000 : f32
    %722 = vector.broadcast %cst_301 : f32 to vector<16x128xf32>
    %723 = arith.select %52, %721, %722 : vector<16x128xi1>, vector<16x128xf32>
    %724 = arith.maximumf %720, %723 : vector<16x128xf32>
    %c127_i32_302 = arith.constant 127 : i32
    %725 = tpu.dynamic_rotate %720 by %c127_i32_302 dim 1 : vector<16x128xf32>, i32 -> vector<16x128xf32>
    %cst_303 = arith.constant 0xFF800000 : f32
    %726 = vector.broadcast %cst_303 : f32 to vector<16x128xf32>
    %727 = arith.select %53, %725, %726 : vector<16x128xi1>, vector<16x128xf32>
    %728 = arith.maximumf %724, %727 : vector<16x128xf32>
    %c1_i32_304 = arith.constant 1 : i32
    %729 = tpu.dynamic_rotate %728 by %c1_i32_304 dim 0 : vector<16x128xf32>, i32 -> vector<16x128xf32>
    %cst_305 = arith.constant 0xFF800000 : f32
    %730 = vector.broadcast %cst_305 : f32 to vector<16x128xf32>
    %731 = arith.select %3, %729, %730 : vector<16x128xi1>, vector<16x128xf32>
    %732 = arith.maximumf %728, %731 : vector<16x128xf32>
    %c15_i32_306 = arith.constant 15 : i32
    %733 = tpu.dynamic_rotate %728 by %c15_i32_306 dim 0 : vector<16x128xf32>, i32 -> vector<16x128xf32>
    %cst_307 = arith.constant 0xFF800000 : f32
    %734 = vector.broadcast %cst_307 : f32 to vector<16x128xf32>
    %735 = arith.select %5, %733, %734 : vector<16x128xi1>, vector<16x128xf32>
    %736 = arith.maximumf %732, %735 : vector<16x128xf32>
    %737 = arith.subf %679, %736 : vector<16x128xf32>
    %cst_308 = arith.constant 0.000000e+00 : f32
    %738 = vector.broadcast %cst_308 : f32 to vector<16x128xf32>
    %739 = arith.maximumf %737, %738 : vector<16x128xf32>
    %740 = arith.mulf %703, %739 : vector<16x128xf32>
    %741 = arith.subf %739, %740 : vector<16x128xf32>
    %cst_309 = arith.constant 0.000000e+00 : f32
    %742 = vector.broadcast %cst_309 : f32 to vector<16x128xf32>
    %743 = arith.maximumf %741, %742 : vector<16x128xf32>
    %744 = arith.addf %703, %743 : vector<16x128xf32>
    %c1_i32_310 = arith.constant 1 : i32
    %745 = tpu.dynamic_rotate %720 by %c1_i32_310 dim 0 : vector<16x128xf32>, i32 -> vector<16x128xf32>
    %cst_311 = arith.constant 0x7F800000 : f32
    %746 = vector.broadcast %cst_311 : f32 to vector<16x128xf32>
    %747 = arith.select %3, %745, %746 : vector<16x128xi1>, vector<16x128xf32>
    %748 = arith.minimumf %720, %747 : vector<16x128xf32>
    %c15_i32_312 = arith.constant 15 : i32
    %749 = tpu.dynamic_rotate %720 by %c15_i32_312 dim 0 : vector<16x128xf32>, i32 -> vector<16x128xf32>
    %cst_313 = arith.constant 0x7F800000 : f32
    %750 = vector.broadcast %cst_313 : f32 to vector<16x128xf32>
    %751 = arith.select %5, %749, %750 : vector<16x128xi1>, vector<16x128xf32>
    %752 = arith.minimumf %748, %751 : vector<16x128xf32>
    %c1_i32_314 = arith.constant 1 : i32
    %753 = tpu.dynamic_rotate %720 by %c1_i32_314 dim 1 : vector<16x128xf32>, i32 -> vector<16x128xf32>
    %cst_315 = arith.constant 0x7F800000 : f32
    %754 = vector.broadcast %cst_315 : f32 to vector<16x128xf32>
    %755 = arith.select %52, %753, %754 : vector<16x128xi1>, vector<16x128xf32>
    %756 = arith.minimumf %720, %755 : vector<16x128xf32>
    %c127_i32_316 = arith.constant 127 : i32
    %757 = tpu.dynamic_rotate %720 by %c127_i32_316 dim 1 : vector<16x128xf32>, i32 -> vector<16x128xf32>
    %cst_317 = arith.constant 0x7F800000 : f32
    %758 = vector.broadcast %cst_317 : f32 to vector<16x128xf32>
    %759 = arith.select %53, %757, %758 : vector<16x128xi1>, vector<16x128xf32>
    %760 = arith.minimumf %756, %759 : vector<16x128xf32>
    %761 = arith.minimumf %752, %760 : vector<16x128xf32>
    %c1_i32_318 = arith.constant 1 : i32
    %762 = tpu.dynamic_rotate %761 by %c1_i32_318 dim 1 : vector<16x128xf32>, i32 -> vector<16x128xf32>
    %cst_319 = arith.constant 0xFF800000 : f32
    %763 = vector.broadcast %cst_319 : f32 to vector<16x128xf32>
    %764 = arith.select %52, %762, %763 : vector<16x128xi1>, vector<16x128xf32>
    %765 = arith.maximumf %761, %764 : vector<16x128xf32>
    %c127_i32_320 = arith.constant 127 : i32
    %766 = tpu.dynamic_rotate %761 by %c127_i32_320 dim 1 : vector<16x128xf32>, i32 -> vector<16x128xf32>
    %cst_321 = arith.constant 0xFF800000 : f32
    %767 = vector.broadcast %cst_321 : f32 to vector<16x128xf32>
    %768 = arith.select %53, %766, %767 : vector<16x128xi1>, vector<16x128xf32>
    %769 = arith.maximumf %765, %768 : vector<16x128xf32>
    %c1_i32_322 = arith.constant 1 : i32
    %770 = tpu.dynamic_rotate %769 by %c1_i32_322 dim 0 : vector<16x128xf32>, i32 -> vector<16x128xf32>
    %cst_323 = arith.constant 0xFF800000 : f32
    %771 = vector.broadcast %cst_323 : f32 to vector<16x128xf32>
    %772 = arith.select %3, %770, %771 : vector<16x128xi1>, vector<16x128xf32>
    %773 = arith.maximumf %769, %772 : vector<16x128xf32>
    %c15_i32_324 = arith.constant 15 : i32
    %774 = tpu.dynamic_rotate %769 by %c15_i32_324 dim 0 : vector<16x128xf32>, i32 -> vector<16x128xf32>
    %cst_325 = arith.constant 0xFF800000 : f32
    %775 = vector.broadcast %cst_325 : f32 to vector<16x128xf32>
    %776 = arith.select %5, %774, %775 : vector<16x128xi1>, vector<16x128xf32>
    %777 = arith.maximumf %773, %776 : vector<16x128xf32>
    %778 = arith.subf %720, %777 : vector<16x128xf32>
    %cst_326 = arith.constant 0.000000e+00 : f32
    %779 = vector.broadcast %cst_326 : f32 to vector<16x128xf32>
    %780 = arith.maximumf %778, %779 : vector<16x128xf32>
    %781 = arith.mulf %744, %780 : vector<16x128xf32>
    %782 = arith.subf %780, %781 : vector<16x128xf32>
    %cst_327 = arith.constant 0.000000e+00 : f32
    %783 = vector.broadcast %cst_327 : f32 to vector<16x128xf32>
    %784 = arith.maximumf %782, %783 : vector<16x128xf32>
    %785 = arith.addf %744, %784 : vector<16x128xf32>
    %c1_i32_328 = arith.constant 1 : i32
    %786 = tpu.dynamic_rotate %761 by %c1_i32_328 dim 0 : vector<16x128xf32>, i32 -> vector<16x128xf32>
    %cst_329 = arith.constant 0x7F800000 : f32
    %787 = vector.broadcast %cst_329 : f32 to vector<16x128xf32>
    %788 = arith.select %3, %786, %787 : vector<16x128xi1>, vector<16x128xf32>
    %789 = arith.minimumf %761, %788 : vector<16x128xf32>
    %c15_i32_330 = arith.constant 15 : i32
    %790 = tpu.dynamic_rotate %761 by %c15_i32_330 dim 0 : vector<16x128xf32>, i32 -> vector<16x128xf32>
    %cst_331 = arith.constant 0x7F800000 : f32
    %791 = vector.broadcast %cst_331 : f32 to vector<16x128xf32>
    %792 = arith.select %5, %790, %791 : vector<16x128xi1>, vector<16x128xf32>
    %793 = arith.minimumf %789, %792 : vector<16x128xf32>
    %c1_i32_332 = arith.constant 1 : i32
    %794 = tpu.dynamic_rotate %761 by %c1_i32_332 dim 1 : vector<16x128xf32>, i32 -> vector<16x128xf32>
    %cst_333 = arith.constant 0x7F800000 : f32
    %795 = vector.broadcast %cst_333 : f32 to vector<16x128xf32>
    %796 = arith.select %52, %794, %795 : vector<16x128xi1>, vector<16x128xf32>
    %797 = arith.minimumf %761, %796 : vector<16x128xf32>
    %c127_i32_334 = arith.constant 127 : i32
    %798 = tpu.dynamic_rotate %761 by %c127_i32_334 dim 1 : vector<16x128xf32>, i32 -> vector<16x128xf32>
    %cst_335 = arith.constant 0x7F800000 : f32
    %799 = vector.broadcast %cst_335 : f32 to vector<16x128xf32>
    %800 = arith.select %53, %798, %799 : vector<16x128xi1>, vector<16x128xf32>
    %801 = arith.minimumf %797, %800 : vector<16x128xf32>
    %802 = arith.minimumf %793, %801 : vector<16x128xf32>
    %c1_i32_336 = arith.constant 1 : i32
    %803 = tpu.dynamic_rotate %802 by %c1_i32_336 dim 1 : vector<16x128xf32>, i32 -> vector<16x128xf32>
    %cst_337 = arith.constant 0xFF800000 : f32
    %804 = vector.broadcast %cst_337 : f32 to vector<16x128xf32>
    %805 = arith.select %52, %803, %804 : vector<16x128xi1>, vector<16x128xf32>
    %806 = arith.maximumf %802, %805 : vector<16x128xf32>
    %c127_i32_338 = arith.constant 127 : i32
    %807 = tpu.dynamic_rotate %802 by %c127_i32_338 dim 1 : vector<16x128xf32>, i32 -> vector<16x128xf32>
    %cst_339 = arith.constant 0xFF800000 : f32
    %808 = vector.broadcast %cst_339 : f32 to vector<16x128xf32>
    %809 = arith.select %53, %807, %808 : vector<16x128xi1>, vector<16x128xf32>
    %810 = arith.maximumf %806, %809 : vector<16x128xf32>
    %c1_i32_340 = arith.constant 1 : i32
    %811 = tpu.dynamic_rotate %810 by %c1_i32_340 dim 0 : vector<16x128xf32>, i32 -> vector<16x128xf32>
    %cst_341 = arith.constant 0xFF800000 : f32
    %812 = vector.broadcast %cst_341 : f32 to vector<16x128xf32>
    %813 = arith.select %3, %811, %812 : vector<16x128xi1>, vector<16x128xf32>
    %814 = arith.maximumf %810, %813 : vector<16x128xf32>
    %c15_i32_342 = arith.constant 15 : i32
    %815 = tpu.dynamic_rotate %810 by %c15_i32_342 dim 0 : vector<16x128xf32>, i32 -> vector<16x128xf32>
    %cst_343 = arith.constant 0xFF800000 : f32
    %816 = vector.broadcast %cst_343 : f32 to vector<16x128xf32>
    %817 = arith.select %5, %815, %816 : vector<16x128xi1>, vector<16x128xf32>
    %818 = arith.maximumf %814, %817 : vector<16x128xf32>
    %819 = arith.subf %761, %818 : vector<16x128xf32>
    %cst_344 = arith.constant 0.000000e+00 : f32
    %820 = vector.broadcast %cst_344 : f32 to vector<16x128xf32>
    %821 = arith.maximumf %819, %820 : vector<16x128xf32>
    %822 = arith.mulf %785, %821 : vector<16x128xf32>
    %823 = arith.subf %821, %822 : vector<16x128xf32>
    %cst_345 = arith.constant 0.000000e+00 : f32
    %824 = vector.broadcast %cst_345 : f32 to vector<16x128xf32>
    %825 = arith.maximumf %823, %824 : vector<16x128xf32>
    %826 = arith.addf %785, %825 : vector<16x128xf32>
    %c1_i32_346 = arith.constant 1 : i32
    %827 = tpu.dynamic_rotate %802 by %c1_i32_346 dim 0 : vector<16x128xf32>, i32 -> vector<16x128xf32>
    %cst_347 = arith.constant 0x7F800000 : f32
    %828 = vector.broadcast %cst_347 : f32 to vector<16x128xf32>
    %829 = arith.select %3, %827, %828 : vector<16x128xi1>, vector<16x128xf32>
    %830 = arith.minimumf %802, %829 : vector<16x128xf32>
    %c15_i32_348 = arith.constant 15 : i32
    %831 = tpu.dynamic_rotate %802 by %c15_i32_348 dim 0 : vector<16x128xf32>, i32 -> vector<16x128xf32>
    %cst_349 = arith.constant 0x7F800000 : f32
    %832 = vector.broadcast %cst_349 : f32 to vector<16x128xf32>
    %833 = arith.select %5, %831, %832 : vector<16x128xi1>, vector<16x128xf32>
    %834 = arith.minimumf %830, %833 : vector<16x128xf32>
    %c1_i32_350 = arith.constant 1 : i32
    %835 = tpu.dynamic_rotate %802 by %c1_i32_350 dim 1 : vector<16x128xf32>, i32 -> vector<16x128xf32>
    %cst_351 = arith.constant 0x7F800000 : f32
    %836 = vector.broadcast %cst_351 : f32 to vector<16x128xf32>
    %837 = arith.select %52, %835, %836 : vector<16x128xi1>, vector<16x128xf32>
    %838 = arith.minimumf %802, %837 : vector<16x128xf32>
    %c127_i32_352 = arith.constant 127 : i32
    %839 = tpu.dynamic_rotate %802 by %c127_i32_352 dim 1 : vector<16x128xf32>, i32 -> vector<16x128xf32>
    %cst_353 = arith.constant 0x7F800000 : f32
    %840 = vector.broadcast %cst_353 : f32 to vector<16x128xf32>
    %841 = arith.select %53, %839, %840 : vector<16x128xi1>, vector<16x128xf32>
    %842 = arith.minimumf %838, %841 : vector<16x128xf32>
    %843 = arith.minimumf %834, %842 : vector<16x128xf32>
    %c1_i32_354 = arith.constant 1 : i32
    %844 = tpu.dynamic_rotate %843 by %c1_i32_354 dim 1 : vector<16x128xf32>, i32 -> vector<16x128xf32>
    %cst_355 = arith.constant 0xFF800000 : f32
    %845 = vector.broadcast %cst_355 : f32 to vector<16x128xf32>
    %846 = arith.select %52, %844, %845 : vector<16x128xi1>, vector<16x128xf32>
    %847 = arith.maximumf %843, %846 : vector<16x128xf32>
    %c127_i32_356 = arith.constant 127 : i32
    %848 = tpu.dynamic_rotate %843 by %c127_i32_356 dim 1 : vector<16x128xf32>, i32 -> vector<16x128xf32>
    %cst_357 = arith.constant 0xFF800000 : f32
    %849 = vector.broadcast %cst_357 : f32 to vector<16x128xf32>
    %850 = arith.select %53, %848, %849 : vector<16x128xi1>, vector<16x128xf32>
    %851 = arith.maximumf %847, %850 : vector<16x128xf32>
    %c1_i32_358 = arith.constant 1 : i32
    %852 = tpu.dynamic_rotate %851 by %c1_i32_358 dim 0 : vector<16x128xf32>, i32 -> vector<16x128xf32>
    %cst_359 = arith.constant 0xFF800000 : f32
    %853 = vector.broadcast %cst_359 : f32 to vector<16x128xf32>
    %854 = arith.select %3, %852, %853 : vector<16x128xi1>, vector<16x128xf32>
    %855 = arith.maximumf %851, %854 : vector<16x128xf32>
    %c15_i32_360 = arith.constant 15 : i32
    %856 = tpu.dynamic_rotate %851 by %c15_i32_360 dim 0 : vector<16x128xf32>, i32 -> vector<16x128xf32>
    %cst_361 = arith.constant 0xFF800000 : f32
    %857 = vector.broadcast %cst_361 : f32 to vector<16x128xf32>
    %858 = arith.select %5, %856, %857 : vector<16x128xi1>, vector<16x128xf32>
    %859 = arith.maximumf %855, %858 : vector<16x128xf32>
    %860 = arith.subf %802, %859 : vector<16x128xf32>
    %cst_362 = arith.constant 0.000000e+00 : f32
    %861 = vector.broadcast %cst_362 : f32 to vector<16x128xf32>
    %862 = arith.maximumf %860, %861 : vector<16x128xf32>
    %863 = arith.mulf %826, %862 : vector<16x128xf32>
    %864 = arith.subf %862, %863 : vector<16x128xf32>
    %cst_363 = arith.constant 0.000000e+00 : f32
    %865 = vector.broadcast %cst_363 : f32 to vector<16x128xf32>
    %866 = arith.maximumf %864, %865 : vector<16x128xf32>
    %867 = arith.addf %826, %866 : vector<16x128xf32>
    %c1_i32_364 = arith.constant 1 : i32
    %868 = tpu.dynamic_rotate %843 by %c1_i32_364 dim 0 : vector<16x128xf32>, i32 -> vector<16x128xf32>
    %cst_365 = arith.constant 0x7F800000 : f32
    %869 = vector.broadcast %cst_365 : f32 to vector<16x128xf32>
    %870 = arith.select %3, %868, %869 : vector<16x128xi1>, vector<16x128xf32>
    %871 = arith.minimumf %843, %870 : vector<16x128xf32>
    %c15_i32_366 = arith.constant 15 : i32
    %872 = tpu.dynamic_rotate %843 by %c15_i32_366 dim 0 : vector<16x128xf32>, i32 -> vector<16x128xf32>
    %cst_367 = arith.constant 0x7F800000 : f32
    %873 = vector.broadcast %cst_367 : f32 to vector<16x128xf32>
    %874 = arith.select %5, %872, %873 : vector<16x128xi1>, vector<16x128xf32>
    %875 = arith.minimumf %871, %874 : vector<16x128xf32>
    %c1_i32_368 = arith.constant 1 : i32
    %876 = tpu.dynamic_rotate %843 by %c1_i32_368 dim 1 : vector<16x128xf32>, i32 -> vector<16x128xf32>
    %cst_369 = arith.constant 0x7F800000 : f32
    %877 = vector.broadcast %cst_369 : f32 to vector<16x128xf32>
    %878 = arith.select %52, %876, %877 : vector<16x128xi1>, vector<16x128xf32>
    %879 = arith.minimumf %843, %878 : vector<16x128xf32>
    %c127_i32_370 = arith.constant 127 : i32
    %880 = tpu.dynamic_rotate %843 by %c127_i32_370 dim 1 : vector<16x128xf32>, i32 -> vector<16x128xf32>
    %cst_371 = arith.constant 0x7F800000 : f32
    %881 = vector.broadcast %cst_371 : f32 to vector<16x128xf32>
    %882 = arith.select %53, %880, %881 : vector<16x128xi1>, vector<16x128xf32>
    %883 = arith.minimumf %879, %882 : vector<16x128xf32>
    %884 = arith.minimumf %875, %883 : vector<16x128xf32>
    %c1_i32_372 = arith.constant 1 : i32
    %885 = tpu.dynamic_rotate %884 by %c1_i32_372 dim 1 : vector<16x128xf32>, i32 -> vector<16x128xf32>
    %cst_373 = arith.constant 0xFF800000 : f32
    %886 = vector.broadcast %cst_373 : f32 to vector<16x128xf32>
    %887 = arith.select %52, %885, %886 : vector<16x128xi1>, vector<16x128xf32>
    %888 = arith.maximumf %884, %887 : vector<16x128xf32>
    %c127_i32_374 = arith.constant 127 : i32
    %889 = tpu.dynamic_rotate %884 by %c127_i32_374 dim 1 : vector<16x128xf32>, i32 -> vector<16x128xf32>
    %cst_375 = arith.constant 0xFF800000 : f32
    %890 = vector.broadcast %cst_375 : f32 to vector<16x128xf32>
    %891 = arith.select %53, %889, %890 : vector<16x128xi1>, vector<16x128xf32>
    %892 = arith.maximumf %888, %891 : vector<16x128xf32>
    %c1_i32_376 = arith.constant 1 : i32
    %893 = tpu.dynamic_rotate %892 by %c1_i32_376 dim 0 : vector<16x128xf32>, i32 -> vector<16x128xf32>
    %cst_377 = arith.constant 0xFF800000 : f32
    %894 = vector.broadcast %cst_377 : f32 to vector<16x128xf32>
    %895 = arith.select %3, %893, %894 : vector<16x128xi1>, vector<16x128xf32>
    %896 = arith.maximumf %892, %895 : vector<16x128xf32>
    %c15_i32_378 = arith.constant 15 : i32
    %897 = tpu.dynamic_rotate %892 by %c15_i32_378 dim 0 : vector<16x128xf32>, i32 -> vector<16x128xf32>
    %cst_379 = arith.constant 0xFF800000 : f32
    %898 = vector.broadcast %cst_379 : f32 to vector<16x128xf32>
    %899 = arith.select %5, %897, %898 : vector<16x128xi1>, vector<16x128xf32>
    %900 = arith.maximumf %896, %899 : vector<16x128xf32>
    %901 = arith.subf %843, %900 : vector<16x128xf32>
    %cst_380 = arith.constant 0.000000e+00 : f32
    %902 = vector.broadcast %cst_380 : f32 to vector<16x128xf32>
    %903 = arith.maximumf %901, %902 : vector<16x128xf32>
    %904 = arith.mulf %867, %903 : vector<16x128xf32>
    %905 = arith.subf %903, %904 : vector<16x128xf32>
    %cst_381 = arith.constant 0.000000e+00 : f32
    %906 = vector.broadcast %cst_381 : f32 to vector<16x128xf32>
    %907 = arith.maximumf %905, %906 : vector<16x128xf32>
    %908 = arith.addf %867, %907 : vector<16x128xf32>
    %c1_i32_382 = arith.constant 1 : i32
    %909 = tpu.dynamic_rotate %884 by %c1_i32_382 dim 0 : vector<16x128xf32>, i32 -> vector<16x128xf32>
    %cst_383 = arith.constant 0x7F800000 : f32
    %910 = vector.broadcast %cst_383 : f32 to vector<16x128xf32>
    %911 = arith.select %3, %909, %910 : vector<16x128xi1>, vector<16x128xf32>
    %912 = arith.minimumf %884, %911 : vector<16x128xf32>
    %c15_i32_384 = arith.constant 15 : i32
    %913 = tpu.dynamic_rotate %884 by %c15_i32_384 dim 0 : vector<16x128xf32>, i32 -> vector<16x128xf32>
    %cst_385 = arith.constant 0x7F800000 : f32
    %914 = vector.broadcast %cst_385 : f32 to vector<16x128xf32>
    %915 = arith.select %5, %913, %914 : vector<16x128xi1>, vector<16x128xf32>
    %916 = arith.minimumf %912, %915 : vector<16x128xf32>
    %c1_i32_386 = arith.constant 1 : i32
    %917 = tpu.dynamic_rotate %884 by %c1_i32_386 dim 1 : vector<16x128xf32>, i32 -> vector<16x128xf32>
    %cst_387 = arith.constant 0x7F800000 : f32
    %918 = vector.broadcast %cst_387 : f32 to vector<16x128xf32>
    %919 = arith.select %52, %917, %918 : vector<16x128xi1>, vector<16x128xf32>
    %920 = arith.minimumf %884, %919 : vector<16x128xf32>
    %c127_i32_388 = arith.constant 127 : i32
    %921 = tpu.dynamic_rotate %884 by %c127_i32_388 dim 1 : vector<16x128xf32>, i32 -> vector<16x128xf32>
    %cst_389 = arith.constant 0x7F800000 : f32
    %922 = vector.broadcast %cst_389 : f32 to vector<16x128xf32>
    %923 = arith.select %53, %921, %922 : vector<16x128xi1>, vector<16x128xf32>
    %924 = arith.minimumf %920, %923 : vector<16x128xf32>
    %925 = arith.minimumf %916, %924 : vector<16x128xf32>
    %c1_i32_390 = arith.constant 1 : i32
    %926 = tpu.dynamic_rotate %925 by %c1_i32_390 dim 1 : vector<16x128xf32>, i32 -> vector<16x128xf32>
    %cst_391 = arith.constant 0xFF800000 : f32
    %927 = vector.broadcast %cst_391 : f32 to vector<16x128xf32>
    %928 = arith.select %52, %926, %927 : vector<16x128xi1>, vector<16x128xf32>
    %929 = arith.maximumf %925, %928 : vector<16x128xf32>
    %c127_i32_392 = arith.constant 127 : i32
    %930 = tpu.dynamic_rotate %925 by %c127_i32_392 dim 1 : vector<16x128xf32>, i32 -> vector<16x128xf32>
    %cst_393 = arith.constant 0xFF800000 : f32
    %931 = vector.broadcast %cst_393 : f32 to vector<16x128xf32>
    %932 = arith.select %53, %930, %931 : vector<16x128xi1>, vector<16x128xf32>
    %933 = arith.maximumf %929, %932 : vector<16x128xf32>
    %c1_i32_394 = arith.constant 1 : i32
    %934 = tpu.dynamic_rotate %933 by %c1_i32_394 dim 0 : vector<16x128xf32>, i32 -> vector<16x128xf32>
    %cst_395 = arith.constant 0xFF800000 : f32
    %935 = vector.broadcast %cst_395 : f32 to vector<16x128xf32>
    %936 = arith.select %3, %934, %935 : vector<16x128xi1>, vector<16x128xf32>
    %937 = arith.maximumf %933, %936 : vector<16x128xf32>
    %c15_i32_396 = arith.constant 15 : i32
    %938 = tpu.dynamic_rotate %933 by %c15_i32_396 dim 0 : vector<16x128xf32>, i32 -> vector<16x128xf32>
    %cst_397 = arith.constant 0xFF800000 : f32
    %939 = vector.broadcast %cst_397 : f32 to vector<16x128xf32>
    %940 = arith.select %5, %938, %939 : vector<16x128xi1>, vector<16x128xf32>
    %941 = arith.maximumf %937, %940 : vector<16x128xf32>
    %942 = arith.subf %884, %941 : vector<16x128xf32>
    %cst_398 = arith.constant 0.000000e+00 : f32
    %943 = vector.broadcast %cst_398 : f32 to vector<16x128xf32>
    %944 = arith.maximumf %942, %943 : vector<16x128xf32>
    %945 = arith.mulf %908, %944 : vector<16x128xf32>
    %946 = arith.subf %944, %945 : vector<16x128xf32>
    %cst_399 = arith.constant 0.000000e+00 : f32
    %947 = vector.broadcast %cst_399 : f32 to vector<16x128xf32>
    %948 = arith.maximumf %946, %947 : vector<16x128xf32>
    %949 = arith.addf %908, %948 : vector<16x128xf32>
    %950 = arith.mulf %503, %55 : vector<16x128xf32>
    %cst_400 = arith.constant dense<0.000000e+00> : vector<128xf32>
    %951 = vector.multi_reduction <add>, %950, %cst_400 [0] : vector<16x128xf32> to vector<128xf32>
    %952 = vector.shape_cast %951 : vector<128xf32> to vector<1x128xf32>
    %c0_401 = arith.constant 0 : index
    %c0_402 = arith.constant 0 : index
    %c0_403 = arith.constant 0 : index
    %953 = vector.load %arg3[%c0_401, %c0_402, %c0_403] : memref<1x4x128xf32, #tpu.memory_space<vmem>>, vector<1x1x128xf32>
    %954 = vector.shape_cast %953 : vector<1x1x128xf32> to vector<1x128xf32>
    %955 = vector.shape_cast %952 : vector<1x128xf32> to vector<1x1x128xf32>
    tpu.vector_store %arg3[%c0_401, %c0_402, %c0_403], %955 {strides = array<i32>} : memref<1x4x128xf32, #tpu.memory_space<vmem>>, vector<1x1x128xf32>,
    %cst_404 = arith.constant dense<0.000000e+00> : vector<128xf32>
    %956 = vector.multi_reduction <add>, %503, %cst_404 [0] : vector<16x128xf32> to vector<128xf32>
    %957 = vector.shape_cast %956 : vector<128xf32> to vector<1x128xf32>
    %c0_405 = arith.constant 0 : index
    %c1 = arith.constant 1 : index
    %c0_406 = arith.constant 0 : index
    %958 = vector.load %arg3[%c0_405, %c1, %c0_406] : memref<1x4x128xf32, #tpu.memory_space<vmem>>, vector<1x1x128xf32>
    %959 = vector.shape_cast %958 : vector<1x1x128xf32> to vector<1x128xf32>
    %960 = vector.shape_cast %957 : vector<1x128xf32> to vector<1x1x128xf32>
    tpu.vector_store %arg3[%c0_405, %c1, %c0_406], %960 {strides = array<i32>} : memref<1x4x128xf32, #tpu.memory_space<vmem>>, vector<1x1x128xf32>,
    %961 = arith.mulf %949, %57 : vector<16x128xf32>
    %cst_407 = arith.constant dense<0.000000e+00> : vector<128xf32>
    %962 = vector.multi_reduction <add>, %961, %cst_407 [0] : vector<16x128xf32> to vector<128xf32>
    %963 = vector.shape_cast %962 : vector<128xf32> to vector<1x128xf32>
    %c0_408 = arith.constant 0 : index
    %c2 = arith.constant 2 : index
    %c0_409 = arith.constant 0 : index
    %964 = vector.load %arg3[%c0_408, %c2, %c0_409] : memref<1x4x128xf32, #tpu.memory_space<vmem>>, vector<1x1x128xf32>
    %965 = vector.shape_cast %964 : vector<1x1x128xf32> to vector<1x128xf32>
    %966 = vector.shape_cast %963 : vector<1x128xf32> to vector<1x1x128xf32>
    tpu.vector_store %arg3[%c0_408, %c2, %c0_409], %966 {strides = array<i32>} : memref<1x4x128xf32, #tpu.memory_space<vmem>>, vector<1x1x128xf32>,
    %cst_410 = arith.constant dense<0.000000e+00> : vector<128xf32>
    %967 = vector.multi_reduction <add>, %949, %cst_410 [0] : vector<16x128xf32> to vector<128xf32>
    %968 = vector.shape_cast %967 : vector<128xf32> to vector<1x128xf32>
    %c0_411 = arith.constant 0 : index
    %c3 = arith.constant 3 : index
    %c0_412 = arith.constant 0 : index
    %969 = vector.load %arg3[%c0_411, %c3, %c0_412] : memref<1x4x128xf32, #tpu.memory_space<vmem>>, vector<1x1x128xf32>
    %970 = vector.shape_cast %969 : vector<1x1x128xf32> to vector<1x128xf32>
    %971 = vector.shape_cast %968 : vector<1x128xf32> to vector<1x1x128xf32>
    tpu.vector_store %arg3[%c0_411, %c3, %c0_412], %971 {strides = array<i32>} : memref<1x4x128xf32, #tpu.memory_space<vmem>>, vector<1x1x128xf32>,
    return
  }
  func.func @transform_0(%arg0: i32) -> (i32, i32, i32) {
    %c0_i32 = arith.constant 0 : i32
    %c0_i32_0 = arith.constant 0 : i32
    %c0_i32_1 = arith.constant 0 : i32
    return %arg0, %c0_i32, %c0_i32_0 : i32, i32, i32
  }
  func.func @transform_1(%arg0: i32) -> (i32, i32, i32) {
    %c0_i32 = arith.constant 0 : i32
    %c0_i32_0 = arith.constant 0 : i32
    %c0_i32_1 = arith.constant 0 : i32
    return %arg0, %c0_i32, %c0_i32_0 : i32, i32, i32
  }
  func.func @transform_2(%arg0: i32) -> (i32, i32, i32) {
    %c0_i32 = arith.constant 0 : i32
    %c0_i32_0 = arith.constant 0 : i32
    %c0_i32_1 = arith.constant 0 : i32
    return %arg0, %c0_i32, %c0_i32_0 : i32, i32, i32
  }
}

</mosaic_0001>

<llo_original>
// kernel: tpu_custom_call.1
$region0: #{tpu_custom_call.1}
  #allocation0 [shape = 'u32[]', space=smem, size = 0x4, offset = 0x4, fixed_abs, tag = 'smem constant byte address 0x4 - core index']
  #allocation1 [shape = 'u32[144,128]{1,0:T(1,128)}', space=vmem, size = 0x12000, scoped, tag = 'internal scratch']
  %s0 = inlined_call_operand.hbm [shape: f32[1,16,128], index: 0, kind: input, shape index: {}]
  %s1 = inlined_call_operand.hbm [shape: f32[1,16,128], index: 1, kind: input, shape index: {}]
  %s2 = inlined_call_operand.hbm [shape: f32[1,4,128], index: 2, kind: output, shape index: {}]
  %s3 = sld [smem:[#allocation0]]
  $region26: #{tpu_custom_call.1} parent=0
    _
  %s5 = ssub.s32 1, %s3
  %s6 = scalar_select 0, %s5, %s3
  $region1: #{tpu_custom_call.1} parent=0
    #allocation2 [shape = 'u8[8192]{0}', space=vmem, size = 0x2000, scoped, tag = 'input window, operand 0, single buffered']
    #allocation3 [shape = 's32[1]{0}', space=sflag, size = 0x4, scoped, tag = 'scoped memory for tpu_custom_call.1']
    #allocation4 [shape = 's32[1]{0}', space=sflag, size = 0x4, scoped, tag = 'scoped memory for tpu_custom_call.1']
    #allocation5 [shape = 'u8[8192]{0}', space=vmem, size = 0x2000, scoped, tag = 'input window, operand 1, single buffered']
    #allocation6 [shape = 's32[1]{0}', space=sflag, size = 0x4, scoped, tag = 'scoped memory for tpu_custom_call.1']
    #allocation7 [shape = 'u8[2048]{0}', space=vmem, size = 0x800, scoped, tag = 'output window, operand 0, single buffered']
    %7 = vsyncpa [#allocation3], 0
    %8 = vsyncpa [#allocation6], 0
    %9 = vsyncpa [#allocation4], 0
    // Predicated region
    $region2: #{tpu_custom_call.1} parent=1 // pred_check
      _
    $region3: #{tpu_custom_call.1} parent=1 // pred_check_branch
      %11 = sbr.rel (0) target = $region5
    $region4: #{tpu_custom_call.1} parent=1 // pred_region
      %s13 = ssub.s32 256, 256
      %14 = vsyncadd [#allocation3], %s13
      %s15 = sshll.u32 [#allocation2], 4
      %s16 = int_to_ptr.vmem [resolvable:$true] %s15
      %21 = dma.hbm_to_vmem [thread:$0]  %s0, 256, %s16, [#allocation3], 128, 128, 8
    $region5: #{tpu_custom_call.1} parent=1 // pred_fallthru
      _
    // Predicated region
    $region6: #{tpu_custom_call.1} parent=1 // pred_check
      _
    $region7: #{tpu_custom_call.1} parent=1 // pred_check_branch
      %23 = sbr.rel (0) target = $region9
    $region8: #{tpu_custom_call.1} parent=1 // pred_region
      %s25 = ssub.s32 256, 256
      %26 = vsyncadd [#allocation6], %s25
      %s27 = sshll.u32 [#allocation5], 4
      %s28 = int_to_ptr.vmem [resolvable:$true] %s27
      %33 = dma.hbm_to_vmem [thread:$0]  %s1, 256, %s28, [#allocation6], 128, 128, 8
    $region9: #{tpu_custom_call.1} parent=1 // pred_fallthru
      _
    // Predicated region
    $region10: #{tpu_custom_call.1} parent=1 // pred_check
      _
    $region11: #{tpu_custom_call.1} parent=1 // pred_check_branch
      %35 = sbr.rel (0) target = $region13
    $region12: #{tpu_custom_call.1} parent=1 // pred_region
      %36 = dma.done [#allocation3], 256
    $region13: #{tpu_custom_call.1} parent=1 // pred_fallthru
      _
    // Predicated region
    $region14: #{tpu_custom_call.1} parent=1 // pred_check
      _
    $region15: #{tpu_custom_call.1} parent=1 // pred_check_branch
      %38 = sbr.rel (0) target = $region17
    $region16: #{tpu_custom_call.1} parent=1 // pred_region
      %39 = dma.done [#allocation6], 256
    $region17: #{tpu_custom_call.1} parent=1 // pred_fallthru
      _
    %v40 = vlaneseq
    %v41 = vshrl.u32 %v40, 7
    %v42 = vadd.s32 %v41, 8
    %v43 = vlaneseq
    %v44 = vand.u32 %v43, 127
    %vm45 = vcmp.ge.s32.totalorder %v41, 1
    %vm46 = vcmp.ge.s32.totalorder %v42, 1
    %vm47 = vcmp.le.s32.totalorder %v41, 14
    %vm48 = vcmp.le.s32.totalorder %v42, 14
    %vm49 = vcmp.eq.s32.totalorder %v44, 0
    %vm50 = vcmp.eq.s32.totalorder %v44, 15
    %vm51 = vcmp.eq.s32.totalorder %v44, 16
    %vm52 = vmor %vm49, %vm51
    %vm53 = vcmp.eq.s32.totalorder %v44, 31
    %vm54 = vmor %vm50, %vm53
    %vm55 = vcmp.eq.s32.totalorder %v44, 32
    %vm56 = vmor %vm52, %vm55
    %vm57 = vcmp.eq.s32.totalorder %v44, 47
    %vm58 = vmor %vm54, %vm57
    %vm59 = vcmp.eq.s32.totalorder %v44, 48
    %vm60 = vmor %vm56, %vm59
    %vm61 = vcmp.eq.s32.totalorder %v44, 63
    %vm62 = vmor %vm58, %vm61
    %vm63 = vcmp.eq.s32.totalorder %v44, 64
    %vm64 = vmor %vm60, %vm63
    %vm65 = vcmp.eq.s32.totalorder %v44, 79
    %vm66 = vmor %vm62, %vm65
    %vm67 = vcmp.eq.s32.totalorder %v44, 80
    %vm68 = vmor %vm64, %vm67
    %vm69 = vcmp.eq.s32.totalorder %v44, 95
    %vm70 = vmor %vm66, %vm69
    %vm71 = vcmp.eq.s32.totalorder %v44, 96
    %vm72 = vmor %vm68, %vm71
    %vm73 = vcmp.eq.s32.totalorder %v44, 111
    %vm74 = vmor %vm70, %vm73
    %vm75 = vcmp.eq.s32.totalorder %v44, 112
    %vm76 = vmor %vm72, %vm75
    %vm77 = vcmp.eq.s32.totalorder %v44, 127
    %vm78 = vmor %vm74, %vm77
    %vm79 = vmxor %vm76, 1
    %vm80 = vmxor %vm78, 1
    %v81 = vld [vmem:[#allocation2] sm:$0xff]
    %v82 = vld [vmem:[#allocation2 + $0x8] sm:$0xff]
    %v83 = vld [vmem:[#allocation5] sm:$0xff]
    %v84 = vld [vmem:[#allocation5 + $0x8] sm:$0xff]
    %v85 = vrot.slane %v83, 7
    %v86 = vrot.slane %v84, 7
    %vm87 = vcmp.lt.s32.totalorder %v41, 1
    %v88 = vsel %vm87, %v85, %v86
    %v89 = vsel %vm87, %v86, %v85
    %v90 = vsel %vm45, %v89, inf
    %v91 = vsel %vm46, %v88, inf
    %v92 = vmin.f32 %v83, %v90
    %v93 = vmin.f32 %v84, %v91
    %v94 = vrot.slane %v83, 1
    %v95 = vrot.slane %v84, 1
    %vm96 = vcmp.lt.s32.totalorder %v41, 7
    %v97 = vsel %vm96, %v94, %v95
    %v98 = vsel %vm96, %v95, %v94
    %v99 = vsel %vm47, %v97, inf
    %v100 = vsel %vm48, %v98, inf
    %v101 = vmin.f32 %v92, %v99
    %v102 = vmin.f32 %v93, %v100
    %103 = vrot.lane.b32.xlu0 %v83, 1
    %v104 = vpop.permute.xlu0 %103
    %105 = vrot.lane.b32.xlu0 %v84, 1
    %v106 = vpop.permute.xlu0 %105
    %v107 = vsel %vm79, %v104, inf
    %v108 = vsel %vm79, %v106, inf
    %v109 = vmin.f32 %v83, %v107
    %v110 = vmin.f32 %v84, %v108
    %111 = vrot.lane.b32.xlu0 %v83, 127
    %v112 = vpop.permute.xlu0 %111
    %113 = vrot.lane.b32.xlu0 %v84, 127
    %v114 = vpop.permute.xlu0 %113
    %v115 = vsel %vm80, %v112, inf
    %v116 = vsel %vm80, %v114, inf
    %v117 = vmin.f32 %v109, %v115
    %v118 = vmin.f32 %v110, %v116
    %v119 = vmin.f32 %v101, %v117
    %v120 = vmin.f32 %v102, %v118
    %121 = vrot.lane.b32.xlu0 %v119, 1
    %v122 = vpop.permute.xlu0 %121
    %123 = vrot.lane.b32.xlu0 %v120, 1
    %v124 = vpop.permute.xlu0 %123
    %v125 = vsel %vm79, %v122, -inf
    %v126 = vsel %vm79, %v124, -inf
    %v127 = vmax.f32 %v119, %v125
    %v128 = vmax.f32 %v120, %v126
    %129 = vrot.lane.b32.xlu0 %v119, 127
    %v130 = vpop.permute.xlu0 %129
    %131 = vrot.lane.b32.xlu0 %v120, 127
    %v132 = vpop.permute.xlu0 %131
    %v133 = vsel %vm80, %v130, -inf
    %v134 = vsel %vm80, %v132, -inf
    %v135 = vmax.f32 %v127, %v133
    %v136 = vmax.f32 %v128, %v134
    %v137 = vrot.slane %v135, 7
    %v138 = vrot.slane %v136, 7
    %v139 = vsel %vm87, %v137, %v138
    %v140 = vsel %vm87, %v138, %v137
    %v141 = vsel %vm45, %v140, -inf
    %v142 = vsel %vm46, %v139, -inf
    %v143 = vmax.f32 %v135, %v141
    %v144 = vmax.f32 %v136, %v142
    %v145 = vrot.slane %v135, 1
    %v146 = vrot.slane %v136, 1
    %v147 = vsel %vm96, %v145, %v146
    %v148 = vsel %vm96, %v146, %v145
    %v149 = vsel %vm47, %v147, -inf
    %v150 = vsel %vm48, %v148, -inf
    %v151 = vmax.f32 %v143, %v149
    %v152 = vmax.f32 %v144, %v150
    %v153 = vsub.f32 %v83, %v151
    %v154 = vsub.f32 %v84, %v152
    %v155 = vmax.f32 %v153, 0.0
    %v156 = vmax.f32 %v154, 0.0
    %v157 = vrot.slane %v119, 7
    %v158 = vrot.slane %v120, 7
    %v159 = vsel %vm87, %v157, %v158
    %v160 = vsel %vm87, %v158, %v157
    %v161 = vsel %vm45, %v160, inf
    %v162 = vsel %vm46, %v159, inf
    %v163 = vmin.f32 %v119, %v161
    %v164 = vmin.f32 %v120, %v162
    %v165 = vrot.slane %v119, 1
    %v166 = vrot.slane %v120, 1
    %v167 = vsel %vm96, %v165, %v166
    %v168 = vsel %vm96, %v166, %v165
    %v169 = vsel %vm47, %v167, inf
    %v170 = vsel %vm48, %v168, inf
    %v171 = vmin.f32 %v163, %v169
    %v172 = vmin.f32 %v164, %v170
    %v173 = vsel %vm79, %v122, inf
    %v174 = vsel %vm79, %v124, inf
    %v175 = vmin.f32 %v119, %v173
    %v176 = vmin.f32 %v120, %v174
    %v177 = vsel %vm80, %v130, inf
    %v178 = vsel %vm80, %v132, inf
    %v179 = vmin.f32 %v175, %v177
    %v180 = vmin.f32 %v176, %v178
    %v181 = vmin.f32 %v171, %v179
    %v182 = vmin.f32 %v172, %v180
    %183 = vrot.lane.b32.xlu0 %v181, 1
    %v184 = vpop.permute.xlu0 %183
    %185 = vrot.lane.b32.xlu0 %v182, 1
    %v186 = vpop.permute.xlu0 %185
    %v187 = vsel %vm79, %v184, -inf
    %v188 = vsel %vm79, %v186, -inf
    %v189 = vmax.f32 %v181, %v187
    %v190 = vmax.f32 %v182, %v188
    %191 = vrot.lane.b32.xlu0 %v181, 127
    %v192 = vpop.permute.xlu0 %191
    %193 = vrot.lane.b32.xlu0 %v182, 127
    %v194 = vpop.permute.xlu0 %193
    %v195 = vsel %vm80, %v192, -inf
    %v196 = vsel %vm80, %v194, -inf
    %v197 = vmax.f32 %v189, %v195
    %v198 = vmax.f32 %v190, %v196
    %v199 = vrot.slane %v197, 7
    %v200 = vrot.slane %v198, 7
    %v201 = vsel %vm87, %v199, %v200
    %v202 = vsel %vm87, %v200, %v199
    %v203 = vsel %vm45, %v202, -inf
    %v204 = vsel %vm46, %v201, -inf
    %v205 = vmax.f32 %v197, %v203
    %v206 = vmax.f32 %v198, %v204
    %v207 = vrot.slane %v197, 1
    %v208 = vrot.slane %v198, 1
    %v209 = vsel %vm96, %v207, %v208
    %v210 = vsel %vm96, %v208, %v207
    %v211 = vsel %vm47, %v209, -inf
    %v212 = vsel %vm48, %v210, -inf
    %v213 = vmax.f32 %v205, %v211
    %v214 = vmax.f32 %v206, %v212
    %v215 = vsub.f32 %v119, %v213
    %v216 = vsub.f32 %v120, %v214
    %v217 = vmax.f32 %v215, 0.0
    %v218 = vmax.f32 %v216, 0.0
    %v219 = vmul.f32 %v155, %v217
    %v220 = vmul.f32 %v156, %v218
    %v221 = vsub.f32 %v217, %v219
    %v222 = vsub.f32 %v218, %v220
    %v223 = vmax.f32 %v221, 0.0
    %v224 = vmax.f32 %v222, 0.0
    %v225 = vadd.f32 %v155, %v223
    %v226 = vadd.f32 %v156, %v224
    %v227 = vrot.slane %v181, 7
    %v228 = vrot.slane %v182, 7
    %v229 = vsel %vm87, %v227, %v228
    %v230 = vsel %vm87, %v228, %v227
    %v231 = vsel %vm45, %v230, inf
    %v232 = vsel %vm46, %v229, inf
    %v233 = vmin.f32 %v181, %v231
    %v234 = vmin.f32 %v182, %v232
    %v235 = vrot.slane %v181, 1
    %v236 = vrot.slane %v182, 1
    %v237 = vsel %vm96, %v235, %v236
    %v238 = vsel %vm96, %v236, %v235
    %v239 = vsel %vm47, %v237, inf
    %v240 = vsel %vm48, %v238, inf
    %v241 = vmin.f32 %v233, %v239
    %v242 = vmin.f32 %v234, %v240
    %v243 = vsel %vm79, %v184, inf
    %v244 = vsel %vm79, %v186, inf
    %v245 = vmin.f32 %v181, %v243
    %v246 = vmin.f32 %v182, %v244
    %v247 = vsel %vm80, %v192, inf
    %v248 = vsel %vm80, %v194, inf
    %v249 = vmin.f32 %v245, %v247
    %v250 = vmin.f32 %v246, %v248
    %v251 = vmin.f32 %v241, %v249
    %v252 = vmin.f32 %v242, %v250
    %253 = vrot.lane.b32.xlu0 %v251, 1
    %v254 = vpop.permute.xlu0 %253
    %255 = vrot.lane.b32.xlu0 %v252, 1
    %v256 = vpop.permute.xlu0 %255
    %v257 = vsel %vm79, %v254, -inf
    %v258 = vsel %vm79, %v256, -inf
    %v259 = vmax.f32 %v251, %v257
    %v260 = vmax.f32 %v252, %v258
    %261 = vrot.lane.b32.xlu0 %v251, 127
    %v262 = vpop.permute.xlu0 %261
    %263 = vrot.lane.b32.xlu0 %v252, 127
    %v264 = vpop.permute.xlu0 %263
    %v265 = vsel %vm80, %v262, -inf
    %v266 = vsel %vm80, %v264, -inf
    %v267 = vmax.f32 %v259, %v265
    %v268 = vmax.f32 %v260, %v266
    %v269 = vrot.slane %v267, 7
    %v270 = vrot.slane %v268, 7
    %v271 = vsel %vm87, %v269, %v270
    %v272 = vsel %vm87, %v270, %v269
    %v273 = vsel %vm45, %v272, -inf
    %v274 = vsel %vm46, %v271, -inf
    %v275 = vmax.f32 %v267, %v273
    %v276 = vmax.f32 %v268, %v274
    %v277 = vrot.slane %v267, 1
    %v278 = vrot.slane %v268, 1
    %v279 = vsel %vm96, %v277, %v278
    %v280 = vsel %vm96, %v278, %v277
    %v281 = vsel %vm47, %v279, -inf
    %v282 = vsel %vm48, %v280, -inf
    %v283 = vmax.f32 %v275, %v281
    %v284 = vmax.f32 %v276, %v282
    %v285 = vsub.f32 %v181, %v283
    %v286 = vsub.f32 %v182, %v284
    %v287 = vmax.f32 %v285, 0.0
    %v288 = vmax.f32 %v286, 0.0
    %v289 = vmul.f32 %v225, %v287
    %v290 = vmul.f32 %v226, %v288
    %v291 = vsub.f32 %v287, %v289
    %v292 = vsub.f32 %v288, %v290
    %v293 = vmax.f32 %v291, 0.0
    %v294 = vmax.f32 %v292, 0.0
    %v295 = vadd.f32 %v225, %v293
    %v296 = vadd.f32 %v226, %v294
    %v297 = vrot.slane %v251, 7
    %v298 = vrot.slane %v252, 7
    %v299 = vsel %vm87, %v297, %v298
    %v300 = vsel %vm87, %v298, %v297
    %v301 = vsel %vm45, %v300, inf
    %v302 = vsel %vm46, %v299, inf
    %v303 = vmin.f32 %v251, %v301
    %v304 = vmin.f32 %v252, %v302
    %v305 = vrot.slane %v251, 1
    %v306 = vrot.slane %v252, 1
    %v307 = vsel %vm96, %v305, %v306
    %v308 = vsel %vm96, %v306, %v305
    %v309 = vsel %vm47, %v307, inf
    %v310 = vsel %vm48, %v308, inf
    %v311 = vmin.f32 %v303, %v309
    %v312 = vmin.f32 %v304, %v310
    %v313 = vsel %vm79, %v254, inf
    %v314 = vsel %vm79, %v256, inf
    %v315 = vmin.f32 %v251, %v313
    %v316 = vmin.f32 %v252, %v314
    %v317 = vsel %vm80, %v262, inf
    %v318 = vsel %vm80, %v264, inf
    %v319 = vmin.f32 %v315, %v317
    %v320 = vmin.f32 %v316, %v318
    %v321 = vmin.f32 %v311, %v319
    %v322 = vmin.f32 %v312, %v320
    %323 = vrot.lane.b32.xlu0 %v321, 1
    %v324 = vpop.permute.xlu0 %323
    %325 = vrot.lane.b32.xlu0 %v322, 1
    %v326 = vpop.permute.xlu0 %325
    %v327 = vsel %vm79, %v324, -inf
    %v328 = vsel %vm79, %v326, -inf
    %v329 = vmax.f32 %v321, %v327
    %v330 = vmax.f32 %v322, %v328
    %331 = vrot.lane.b32.xlu0 %v321, 127
    %v332 = vpop.permute.xlu0 %331
    %333 = vrot.lane.b32.xlu0 %v322, 127
    %v334 = vpop.permute.xlu0 %333
    %v335 = vsel %vm80, %v332, -inf
    %v336 = vsel %vm80, %v334, -inf
    %v337 = vmax.f32 %v329, %v335
    %v338 = vmax.f32 %v330, %v336
    %v339 = vrot.slane %v337, 7
    %v340 = vrot.slane %v338, 7
    %v341 = vsel %vm87, %v339, %v340
    %v342 = vsel %vm87, %v340, %v339
    %v343 = vsel %vm45, %v342, -inf
    %v344 = vsel %vm46, %v341, -inf
    %v345 = vmax.f32 %v337, %v343
    %v346 = vmax.f32 %v338, %v344
    %v347 = vrot.slane %v337, 1
    %v348 = vrot.slane %v338, 1
    %v349 = vsel %vm96, %v347, %v348
    %v350 = vsel %vm96, %v348, %v347
    %v351 = vsel %vm47, %v349, -inf
    %v352 = vsel %vm48, %v350, -inf
    %v353 = vmax.f32 %v345, %v351
    %v354 = vmax.f32 %v346, %v352
    %v355 = vsub.f32 %v251, %v353
    %v356 = vsub.f32 %v252, %v354
    %v357 = vmax.f32 %v355, 0.0
    %v358 = vmax.f32 %v356, 0.0
    %v359 = vmul.f32 %v295, %v357
    %v360 = vmul.f32 %v296, %v358
    %v361 = vsub.f32 %v357, %v359
    %v362 = vsub.f32 %v358, %v360
    %v363 = vmax.f32 %v361, 0.0
    %v364 = vmax.f32 %v362, 0.0
    %v365 = vadd.f32 %v295, %v363
    %v366 = vadd.f32 %v296, %v364
    %v367 = vrot.slane %v321, 7
    %v368 = vrot.slane %v322, 7
    %v369 = vsel %vm87, %v367, %v368
    %v370 = vsel %vm87, %v368, %v367
    %v371 = vsel %vm45, %v370, inf
    %v372 = vsel %vm46, %v369, inf
    %v373 = vmin.f32 %v321, %v371
    %v374 = vmin.f32 %v322, %v372
    %v375 = vrot.slane %v321, 1
    %v376 = vrot.slane %v322, 1
    %v377 = vsel %vm96, %v375, %v376
    %v378 = vsel %vm96, %v376, %v375
    %v379 = vsel %vm47, %v377, inf
    %v380 = vsel %vm48, %v378, inf
    %v381 = vmin.f32 %v373, %v379
    %v382 = vmin.f32 %v374, %v380
    %v383 = vsel %vm79, %v324, inf
    %v384 = vsel %vm79, %v326, inf
    %v385 = vmin.f32 %v321, %v383
    %v386 = vmin.f32 %v322, %v384
    %v387 = vsel %vm80, %v332, inf
    %v388 = vsel %vm80, %v334, inf
    %v389 = vmin.f32 %v385, %v387
    %v390 = vmin.f32 %v386, %v388
    %v391 = vmin.f32 %v381, %v389
    %v392 = vmin.f32 %v382, %v390
    %393 = vrot.lane.b32.xlu0 %v391, 1
    %v394 = vpop.permute.xlu0 %393
    %395 = vrot.lane.b32.xlu0 %v392, 1
    %v396 = vpop.permute.xlu0 %395
    %v397 = vsel %vm79, %v394, -inf
    %v398 = vsel %vm79, %v396, -inf
    %v399 = vmax.f32 %v391, %v397
    %v400 = vmax.f32 %v392, %v398
    %401 = vrot.lane.b32.xlu0 %v391, 127
    %v402 = vpop.permute.xlu0 %401
    %403 = vrot.lane.b32.xlu0 %v392, 127
    %v404 = vpop.permute.xlu0 %403
    %v405 = vsel %vm80, %v402, -inf
    %v406 = vsel %vm80, %v404, -inf
    %v407 = vmax.f32 %v399, %v405
    %v408 = vmax.f32 %v400, %v406
    %v409 = vrot.slane %v407, 7
    %v410 = vrot.slane %v408, 7
    %v411 = vsel %vm87, %v409, %v410
    %v412 = vsel %vm87, %v410, %v409
    %v413 = vsel %vm45, %v412, -inf
    %v414 = vsel %vm46, %v411, -inf
    %v415 = vmax.f32 %v407, %v413
    %v416 = vmax.f32 %v408, %v414
    %v417 = vrot.slane %v407, 1
    %v418 = vrot.slane %v408, 1
    %v419 = vsel %vm96, %v417, %v418
    %v420 = vsel %vm96, %v418, %v417
    %v421 = vsel %vm47, %v419, -inf
    %v422 = vsel %vm48, %v420, -inf
    %v423 = vmax.f32 %v415, %v421
    %v424 = vmax.f32 %v416, %v422
    %v425 = vsub.f32 %v321, %v423
    %v426 = vsub.f32 %v322, %v424
    %v427 = vmax.f32 %v425, 0.0
    %v428 = vmax.f32 %v426, 0.0
    %v429 = vmul.f32 %v365, %v427
    %v430 = vmul.f32 %v366, %v428
    %v431 = vsub.f32 %v427, %v429
    %v432 = vsub.f32 %v428, %v430
    %v433 = vmax.f32 %v431, 0.0
    %v434 = vmax.f32 %v432, 0.0
    %v435 = vadd.f32 %v365, %v433
    %v436 = vadd.f32 %v366, %v434
    %v437 = vrot.slane %v391, 7
    %v438 = vrot.slane %v392, 7
    %v439 = vsel %vm87, %v437, %v438
    %v440 = vsel %vm87, %v438, %v437
    %v441 = vsel %vm45, %v440, inf
    %v442 = vsel %vm46, %v439, inf
    %v443 = vmin.f32 %v391, %v441
    %v444 = vmin.f32 %v392, %v442
    %v445 = vrot.slane %v391, 1
    %v446 = vrot.slane %v392, 1
    %v447 = vsel %vm96, %v445, %v446
    %v448 = vsel %vm96, %v446, %v445
    %v449 = vsel %vm47, %v447, inf
    %v450 = vsel %vm48, %v448, inf
    %v451 = vmin.f32 %v443, %v449
    %v452 = vmin.f32 %v444, %v450
    %v453 = vsel %vm79, %v394, inf
    %v454 = vsel %vm79, %v396, inf
    %v455 = vmin.f32 %v391, %v453
    %v456 = vmin.f32 %v392, %v454
    %v457 = vsel %vm80, %v402, inf
    %v458 = vsel %vm80, %v404, inf
    %v459 = vmin.f32 %v455, %v457
    %v460 = vmin.f32 %v456, %v458
    %v461 = vmin.f32 %v451, %v459
    %v462 = vmin.f32 %v452, %v460
    %463 = vrot.lane.b32.xlu0 %v461, 1
    %v464 = vpop.permute.xlu0 %463
    %465 = vrot.lane.b32.xlu0 %v462, 1
    %v466 = vpop.permute.xlu0 %465
    %v467 = vsel %vm79, %v464, -inf
    %v468 = vsel %vm79, %v466, -inf
    %v469 = vmax.f32 %v461, %v467
    %v470 = vmax.f32 %v462, %v468
    %471 = vrot.lane.b32.xlu0 %v461, 127
    %v472 = vpop.permute.xlu0 %471
    %473 = vrot.lane.b32.xlu0 %v462, 127
    %v474 = vpop.permute.xlu0 %473
    %v475 = vsel %vm80, %v472, -inf
    %v476 = vsel %vm80, %v474, -inf
    %v477 = vmax.f32 %v469, %v475
    %v478 = vmax.f32 %v470, %v476
    %v479 = vrot.slane %v477, 7
    %v480 = vrot.slane %v478, 7
    %v481 = vsel %vm87, %v479, %v480
    %v482 = vsel %vm87, %v480, %v479
    %v483 = vsel %vm45, %v482, -inf
    %v484 = vsel %vm46, %v481, -inf
    %v485 = vmax.f32 %v477, %v483
    %v486 = vmax.f32 %v478, %v484
    %v487 = vrot.slane %v477, 1
    %v488 = vrot.slane %v478, 1
    %v489 = vsel %vm96, %v487, %v488
    %v490 = vsel %vm96, %v488, %v487
    %v491 = vsel %vm47, %v489, -inf
    %v492 = vsel %vm48, %v490, -inf
    %v493 = vmax.f32 %v485, %v491
    %v494 = vmax.f32 %v486, %v492
    %v495 = vsub.f32 %v391, %v493
    %v496 = vsub.f32 %v392, %v494
    %v497 = vmax.f32 %v495, 0.0
    %v498 = vmax.f32 %v496, 0.0
    %v499 = vmul.f32 %v435, %v497
    %v500 = vmul.f32 %v436, %v498
    %v501 = vsub.f32 %v497, %v499
    %v502 = vsub.f32 %v498, %v500
    %v503 = vmax.f32 %v501, 0.0
    %v504 = vmax.f32 %v502, 0.0
    %v505 = vadd.f32 %v435, %v503
    %v506 = vadd.f32 %v436, %v504
    %v507 = vrot.slane %v461, 7
    %v508 = vrot.slane %v462, 7
    %v509 = vsel %vm87, %v507, %v508
    %v510 = vsel %vm87, %v508, %v507
    %v511 = vsel %vm45, %v510, inf
    %v512 = vsel %vm46, %v509, inf
    %v513 = vmin.f32 %v461, %v511
    %v514 = vmin.f32 %v462, %v512
    %v515 = vrot.slane %v461, 1
    %v516 = vrot.slane %v462, 1
    %v517 = vsel %vm96, %v515, %v516
    %v518 = vsel %vm96, %v516, %v515
    %v519 = vsel %vm47, %v517, inf
    %v520 = vsel %vm48, %v518, inf
    %v521 = vmin.f32 %v513, %v519
    %v522 = vmin.f32 %v514, %v520
    %v523 = vsel %vm79, %v464, inf
    %v524 = vsel %vm79, %v466, inf
    %v525 = vmin.f32 %v461, %v523
    %v526 = vmin.f32 %v462, %v524
    %v527 = vsel %vm80, %v472, inf
    %v528 = vsel %vm80, %v474, inf
    %v529 = vmin.f32 %v525, %v527
    %v530 = vmin.f32 %v526, %v528
    %v531 = vmin.f32 %v521, %v529
    %v532 = vmin.f32 %v522, %v530
    %533 = vrot.lane.b32.xlu0 %v531, 1
    %v534 = vpop.permute.xlu0 %533
    %535 = vrot.lane.b32.xlu0 %v532, 1
    %v536 = vpop.permute.xlu0 %535
    %v537 = vsel %vm79, %v534, -inf
    %v538 = vsel %vm79, %v536, -inf
    %v539 = vmax.f32 %v531, %v537
    %v540 = vmax.f32 %v532, %v538
    %541 = vrot.lane.b32.xlu0 %v531, 127
    %v542 = vpop.permute.xlu0 %541
    %543 = vrot.lane.b32.xlu0 %v532, 127
    %v544 = vpop.permute.xlu0 %543
    %v545 = vsel %vm80, %v542, -inf
    %v546 = vsel %vm80, %v544, -inf
    %v547 = vmax.f32 %v539, %v545
    %v548 = vmax.f32 %v540, %v546
    %v549 = vrot.slane %v547, 7
    %v550 = vrot.slane %v548, 7
    %v551 = vsel %vm87, %v549, %v550
    %v552 = vsel %vm87, %v550, %v549
    %v553 = vsel %vm45, %v552, -inf
    %v554 = vsel %vm46, %v551, -inf
    %v555 = vmax.f32 %v547, %v553
    %v556 = vmax.f32 %v548, %v554
    %v557 = vrot.slane %v547, 1
    %v558 = vrot.slane %v548, 1
    %v559 = vsel %vm96, %v557, %v558
    %v560 = vsel %vm96, %v558, %v557
    %v561 = vsel %vm47, %v559, -inf
    %v562 = vsel %vm48, %v560, -inf
    %v563 = vmax.f32 %v555, %v561
    %v564 = vmax.f32 %v556, %v562
    %v565 = vsub.f32 %v461, %v563
    %v566 = vsub.f32 %v462, %v564
    %v567 = vmax.f32 %v565, 0.0
    %v568 = vmax.f32 %v566, 0.0
    %v569 = vmul.f32 %v505, %v567
    %v570 = vmul.f32 %v506, %v568
    %v571 = vsub.f32 %v567, %v569
    %v572 = vsub.f32 %v568, %v570
    %v573 = vmax.f32 %v571, 0.0
    %v574 = vmax.f32 %v572, 0.0
    %v575 = vadd.f32 %v505, %v573
    %v576 = vadd.f32 %v506, %v574
    %v577 = vrot.slane %v531, 7
    %v578 = vrot.slane %v532, 7
    %v579 = vsel %vm87, %v577, %v578
    %v580 = vsel %vm87, %v578, %v577
    %v581 = vsel %vm45, %v580, inf
    %v582 = vsel %vm46, %v579, inf
    %v583 = vmin.f32 %v531, %v581
    %v584 = vmin.f32 %v532, %v582
    %v585 = vrot.slane %v531, 1
    %v586 = vrot.slane %v532, 1
    %v587 = vsel %vm96, %v585, %v586
    %v588 = vsel %vm96, %v586, %v585
    %v589 = vsel %vm47, %v587, inf
    %v590 = vsel %vm48, %v588, inf
    %v591 = vmin.f32 %v583, %v589
    %v592 = vmin.f32 %v584, %v590
    %v593 = vsel %vm79, %v534, inf
    %v594 = vsel %vm79, %v536, inf
    %v595 = vmin.f32 %v531, %v593
    %v596 = vmin.f32 %v532, %v594
    %v597 = vsel %vm80, %v542, inf
    %v598 = vsel %vm80, %v544, inf
    %v599 = vmin.f32 %v595, %v597
    %v600 = vmin.f32 %v596, %v598
    %v601 = vmin.f32 %v591, %v599
    %v602 = vmin.f32 %v592, %v600
    %603 = vrot.lane.b32.xlu0 %v601, 1
    %v604 = vpop.permute.xlu0 %603
    %605 = vrot.lane.b32.xlu0 %v602, 1
    %v606 = vpop.permute.xlu0 %605
    %v607 = vsel %vm79, %v604, -inf
    %v608 = vsel %vm79, %v606, -inf
    %v609 = vmax.f32 %v601, %v607
    %v610 = vmax.f32 %v602, %v608
    %611 = vrot.lane.b32.xlu0 %v601, 127
    %v612 = vpop.permute.xlu0 %611
    %613 = vrot.lane.b32.xlu0 %v602, 127
    %v614 = vpop.permute.xlu0 %613
    %v615 = vsel %vm80, %v612, -inf
    %v616 = vsel %vm80, %v614, -inf
    %v617 = vmax.f32 %v609, %v615
    %v618 = vmax.f32 %v610, %v616
    %v619 = vrot.slane %v617, 7
    %v620 = vrot.slane %v618, 7
    %v621 = vsel %vm87, %v619, %v620
    %v622 = vsel %vm87, %v620, %v619
    %v623 = vsel %vm45, %v622, -inf
    %v624 = vsel %vm46, %v621, -inf
    %v625 = vmax.f32 %v617, %v623
    %v626 = vmax.f32 %v618, %v624
    %v627 = vrot.slane %v617, 1
    %v628 = vrot.slane %v618, 1
    %v629 = vsel %vm96, %v627, %v628
    %v630 = vsel %vm96, %v628, %v627
    %v631 = vsel %vm47, %v629, -inf
    %v632 = vsel %vm48, %v630, -inf
    %v633 = vmax.f32 %v625, %v631
    %v634 = vmax.f32 %v626, %v632
    %v635 = vsub.f32 %v531, %v633
    %v636 = vsub.f32 %v532, %v634
    %v637 = vmax.f32 %v635, 0.0
    %v638 = vmax.f32 %v636, 0.0
    %v639 = vmul.f32 %v575, %v637
    %v640 = vmul.f32 %v576, %v638
    %v641 = vsub.f32 %v637, %v639
    %v642 = vsub.f32 %v638, %v640
    %v643 = vmax.f32 %v641, 0.0
    %v644 = vmax.f32 %v642, 0.0
    %v645 = vadd.f32 %v575, %v643
    %v646 = vadd.f32 %v576, %v644
    %v647 = vrot.slane %v601, 7
    %v648 = vrot.slane %v602, 7
    %v649 = vsel %vm87, %v647, %v648
    %v650 = vsel %vm87, %v648, %v647
    %v651 = vsel %vm45, %v650, inf
    %v652 = vsel %vm46, %v649, inf
    %v653 = vmin.f32 %v601, %v651
    %v654 = vmin.f32 %v602, %v652
    %v655 = vrot.slane %v601, 1
    %v656 = vrot.slane %v602, 1
    %v657 = vsel %vm96, %v655, %v656
    %v658 = vsel %vm96, %v656, %v655
    %v659 = vsel %vm47, %v657, inf
    %v660 = vsel %vm48, %v658, inf
    %v661 = vmin.f32 %v653, %v659
    %v662 = vmin.f32 %v654, %v660
    %v663 = vsel %vm79, %v604, inf
    %v664 = vsel %vm79, %v606, inf
    %v665 = vmin.f32 %v601, %v663
    %v666 = vmin.f32 %v602, %v664
    %v667 = vsel %vm80, %v612, inf
    %v668 = vsel %vm80, %v614, inf
    %v669 = vmin.f32 %v665, %v667
    %v670 = vmin.f32 %v666, %v668
    %v671 = vmin.f32 %v661, %v669
    %v672 = vmin.f32 %v662, %v670
    %673 = vrot.lane.b32.xlu0 %v671, 1
    %v674 = vpop.permute.xlu0 %673
    %675 = vrot.lane.b32.xlu0 %v672, 1
    %v676 = vpop.permute.xlu0 %675
    %v677 = vsel %vm79, %v674, -inf
    %v678 = vsel %vm79, %v676, -inf
    %v679 = vmax.f32 %v671, %v677
    %v680 = vmax.f32 %v672, %v678
    %681 = vrot.lane.b32.xlu0 %v671, 127
    %v682 = vpop.permute.xlu0 %681
    %683 = vrot.lane.b32.xlu0 %v672, 127
    %v684 = vpop.permute.xlu0 %683
    %v685 = vsel %vm80, %v682, -inf
    %v686 = vsel %vm80, %v684, -inf
    %v687 = vmax.f32 %v679, %v685
    %v688 = vmax.f32 %v680, %v686
    %v689 = vrot.slane %v687, 7
    %v690 = vrot.slane %v688, 7
    %v691 = vsel %vm87, %v689, %v690
    %v692 = vsel %vm87, %v690, %v689
    %v693 = vsel %vm45, %v692, -inf
    %v694 = vsel %vm46, %v691, -inf
    %v695 = vmax.f32 %v687, %v693
    %v696 = vmax.f32 %v688, %v694
    %v697 = vrot.slane %v687, 1
    %v698 = vrot.slane %v688, 1
    %v699 = vsel %vm96, %v697, %v698
    %v700 = vsel %vm96, %v698, %v697
    %v701 = vsel %vm47, %v699, -inf
    %v702 = vsel %vm48, %v700, -inf
    %v703 = vmax.f32 %v695, %v701
    %v704 = vmax.f32 %v696, %v702
    %v705 = vsub.f32 %v601, %v703
    %v706 = vsub.f32 %v602, %v704
    %v707 = vmax.f32 %v705, 0.0
    %v708 = vmax.f32 %v706, 0.0
    %v709 = vmul.f32 %v645, %v707
    %v710 = vmul.f32 %v646, %v708
    %v711 = vsub.f32 %v707, %v709
    %v712 = vsub.f32 %v708, %v710
    %v713 = vmax.f32 %v711, 0.0
    %v714 = vmax.f32 %v712, 0.0
    %v715 = vadd.f32 %v645, %v713
    %v716 = vadd.f32 %v646, %v714
    %v717 = vrot.slane %v671, 7
    %v718 = vrot.slane %v672, 7
    %v719 = vsel %vm87, %v717, %v718
    %v720 = vsel %vm87, %v718, %v717
    %v721 = vsel %vm45, %v720, inf
    %v722 = vsel %vm46, %v719, inf
    %v723 = vmin.f32 %v671, %v721
    %v724 = vmin.f32 %v672, %v722
    %v725 = vrot.slane %v671, 1
    %v726 = vrot.slane %v672, 1
    %v727 = vsel %vm96, %v725, %v726
    %v728 = vsel %vm96, %v726, %v725
    %v729 = vsel %vm47, %v727, inf
    %v730 = vsel %vm48, %v728, inf
    %v731 = vmin.f32 %v723, %v729
    %v732 = vmin.f32 %v724, %v730
    %v733 = vsel %vm79, %v674, inf
    %v734 = vsel %vm79, %v676, inf
    %v735 = vmin.f32 %v671, %v733
    %v736 = vmin.f32 %v672, %v734
    %v737 = vsel %vm80, %v682, inf
    %v738 = vsel %vm80, %v684, inf
    %v739 = vmin.f32 %v735, %v737
    %v740 = vmin.f32 %v736, %v738
    %v741 = vmin.f32 %v731, %v739
    %v742 = vmin.f32 %v732, %v740
    %743 = vrot.lane.b32.xlu0 %v741, 1
    %v744 = vpop.permute.xlu0 %743
    %745 = vrot.lane.b32.xlu0 %v742, 1
    %v746 = vpop.permute.xlu0 %745
    %v747 = vsel %vm79, %v744, -inf
    %v748 = vsel %vm79, %v746, -inf
    %v749 = vmax.f32 %v741, %v747
    %v750 = vmax.f32 %v742, %v748
    %751 = vrot.lane.b32.xlu0 %v741, 127
    %v752 = vpop.permute.xlu0 %751
    %753 = vrot.lane.b32.xlu0 %v742, 127
    %v754 = vpop.permute.xlu0 %753
    %v755 = vsel %vm80, %v752, -inf
    %v756 = vsel %vm80, %v754, -inf
    %v757 = vmax.f32 %v749, %v755
    %v758 = vmax.f32 %v750, %v756
    %v759 = vrot.slane %v757, 7
    %v760 = vrot.slane %v758, 7
    %v761 = vsel %vm87, %v759, %v760
    %v762 = vsel %vm87, %v760, %v759
    %v763 = vsel %vm45, %v762, -inf
    %v764 = vsel %vm46, %v761, -inf
    %v765 = vmax.f32 %v757, %v763
    %v766 = vmax.f32 %v758, %v764
    %v767 = vrot.slane %v757, 1
    %v768 = vrot.slane %v758, 1
    %v769 = vsel %vm96, %v767, %v768
    %v770 = vsel %vm96, %v768, %v767
    %v771 = vsel %vm47, %v769, -inf
    %v772 = vsel %vm48, %v770, -inf
    %v773 = vmax.f32 %v765, %v771
    %v774 = vmax.f32 %v766, %v772
    %v775 = vsub.f32 %v671, %v773
    %v776 = vsub.f32 %v672, %v774
    %v777 = vmax.f32 %v775, 0.0
    %v778 = vmax.f32 %v776, 0.0
    %v779 = vmul.f32 %v715, %v777
    %v780 = vmul.f32 %v716, %v778
    %v781 = vsub.f32 %v777, %v779
    %v782 = vsub.f32 %v778, %v780
    %v783 = vmax.f32 %v781, 0.0
    %v784 = vmax.f32 %v782, 0.0
    %v785 = vadd.f32 %v715, %v783
    %v786 = vadd.f32 %v716, %v784
    %v787 = vrot.slane %v741, 7
    %v788 = vrot.slane %v742, 7
    %v789 = vsel %vm87, %v787, %v788
    %v790 = vsel %vm87, %v788, %v787
    %v791 = vsel %vm45, %v790, inf
    %v792 = vsel %vm46, %v789, inf
    %v793 = vmin.f32 %v741, %v791
    %v794 = vmin.f32 %v742, %v792
    %v795 = vrot.slane %v741, 1
    %v796 = vrot.slane %v742, 1
    %v797 = vsel %vm96, %v795, %v796
    %v798 = vsel %vm96, %v796, %v795
    %v799 = vsel %vm47, %v797, inf
    %v800 = vsel %vm48, %v798, inf
    %v801 = vmin.f32 %v793, %v799
    %v802 = vmin.f32 %v794, %v800
    %v803 = vsel %vm79, %v744, inf
    %v804 = vsel %vm79, %v746, inf
    %v805 = vmin.f32 %v741, %v803
    %v806 = vmin.f32 %v742, %v804
    %v807 = vsel %vm80, %v752, inf
    %v808 = vsel %vm80, %v754, inf
    %v809 = vmin.f32 %v805, %v807
    %v810 = vmin.f32 %v806, %v808
    %v811 = vmin.f32 %v801, %v809
    %v812 = vmin.f32 %v802, %v810
    %813 = vrot.lane.b32.xlu0 %v811, 1
    %v814 = vpop.permute.xlu0 %813
    %815 = vrot.lane.b32.xlu0 %v812, 1
    %v816 = vpop.permute.xlu0 %815
    %v817 = vsel %vm79, %v814, -inf
    %v818 = vsel %vm79, %v816, -inf
    %v819 = vmax.f32 %v811, %v817
    %v820 = vmax.f32 %v812, %v818
    %821 = vrot.lane.b32.xlu0 %v811, 127
    %v822 = vpop.permute.xlu0 %821
    %823 = vrot.lane.b32.xlu0 %v812, 127
    %v824 = vpop.permute.xlu0 %823
    %v825 = vsel %vm80, %v822, -inf
    %v826 = vsel %vm80, %v824, -inf
    %v827 = vmax.f32 %v819, %v825
    %v828 = vmax.f32 %v820, %v826
    %v829 = vrot.slane %v827, 7
    %v830 = vrot.slane %v828, 7
    %v831 = vsel %vm87, %v829, %v830
    %v832 = vsel %vm87, %v830, %v829
    %v833 = vsel %vm45, %v832, -inf
    %v834 = vsel %vm46, %v831, -inf
    %v835 = vmax.f32 %v827, %v833
    %v836 = vmax.f32 %v828, %v834
    %v837 = vrot.slane %v827, 1
    %v838 = vrot.slane %v828, 1
    %v839 = vsel %vm96, %v837, %v838
    %v840 = vsel %vm96, %v838, %v837
    %v841 = vsel %vm47, %v839, -inf
    %v842 = vsel %vm48, %v840, -inf
    %v843 = vmax.f32 %v835, %v841
    %v844 = vmax.f32 %v836, %v842
    %v845 = vsub.f32 %v741, %v843
    %v846 = vsub.f32 %v742, %v844
    %v847 = vmax.f32 %v845, 0.0
    %v848 = vmax.f32 %v846, 0.0
    %v849 = vmul.f32 %v785, %v847
    %v850 = vmul.f32 %v786, %v848
    %v851 = vsub.f32 %v847, %v849
    %v852 = vsub.f32 %v848, %v850
    %v853 = vmax.f32 %v851, 0.0
    %v854 = vmax.f32 %v852, 0.0
    %v855 = vadd.f32 %v785, %v853
    %v856 = vadd.f32 %v786, %v854
    %v857 = vrot.slane %v81, 7
    %v858 = vrot.slane %v82, 7
    %v859 = vsel %vm87, %v857, %v858
    %v860 = vsel %vm87, %v858, %v857
    %v861 = vsel %vm45, %v860, inf
    %v862 = vsel %vm46, %v859, inf
    %v863 = vmin.f32 %v81, %v861
    %v864 = vmin.f32 %v82, %v862
    %v865 = vrot.slane %v81, 1
    %v866 = vrot.slane %v82, 1
    %v867 = vsel %vm96, %v865, %v866
    %v868 = vsel %vm96, %v866, %v865
    %v869 = vsel %vm47, %v867, inf
    %v870 = vsel %vm48, %v868, inf
    %v871 = vmin.f32 %v863, %v869
    %v872 = vmin.f32 %v864, %v870
    %873 = vrot.lane.b32.xlu0 %v81, 1
    %v874 = vpop.permute.xlu0 %873
    %875 = vrot.lane.b32.xlu0 %v82, 1
    %v876 = vpop.permute.xlu0 %875
    %v877 = vsel %vm79, %v874, inf
    %v878 = vsel %vm79, %v876, inf
    %v879 = vmin.f32 %v81, %v877
    %v880 = vmin.f32 %v82, %v878
    %881 = vrot.lane.b32.xlu0 %v81, 127
    %v882 = vpop.permute.xlu0 %881
    %883 = vrot.lane.b32.xlu0 %v82, 127
    %v884 = vpop.permute.xlu0 %883
    %v885 = vsel %vm80, %v882, inf
    %v886 = vsel %vm80, %v884, inf
    %v887 = vmin.f32 %v879, %v885
    %v888 = vmin.f32 %v880, %v886
    %v889 = vmin.f32 %v871, %v887
    %v890 = vmin.f32 %v872, %v888
    %891 = vrot.lane.b32.xlu0 %v889, 1
    %v892 = vpop.permute.xlu0 %891
    %893 = vrot.lane.b32.xlu0 %v890, 1
    %v894 = vpop.permute.xlu0 %893
    %v895 = vsel %vm79, %v892, -inf
    %v896 = vsel %vm79, %v894, -inf
    %v897 = vmax.f32 %v889, %v895
    %v898 = vmax.f32 %v890, %v896
    %899 = vrot.lane.b32.xlu0 %v889, 127
    %v900 = vpop.permute.xlu0 %899
    %901 = vrot.lane.b32.xlu0 %v890, 127
    %v902 = vpop.permute.xlu0 %901
    %v903 = vsel %vm80, %v900, -inf
    %v904 = vsel %vm80, %v902, -inf
    %v905 = vmax.f32 %v897, %v903
    %v906 = vmax.f32 %v898, %v904
    %v907 = vrot.slane %v905, 7
    %v908 = vrot.slane %v906, 7
    %v909 = vsel %vm87, %v907, %v908
    %v910 = vsel %vm87, %v908, %v907
    %v911 = vsel %vm45, %v910, -inf
    %v912 = vsel %vm46, %v909, -inf
    %v913 = vmax.f32 %v905, %v911
    %v914 = vmax.f32 %v906, %v912
    %v915 = vrot.slane %v905, 1
    %v916 = vrot.slane %v906, 1
    %v917 = vsel %vm96, %v915, %v916
    %v918 = vsel %vm96, %v916, %v915
    %v919 = vsel %vm47, %v917, -inf
    %v920 = vsel %vm48, %v918, -inf
    %v921 = vmax.f32 %v913, %v919
    %v922 = vmax.f32 %v914, %v920
    %v923 = vsub.f32 %v81, %v921
    %v924 = vsub.f32 %v82, %v922
    %v925 = vmax.f32 %v923, 0.0
    %v926 = vmax.f32 %v924, 0.0
    %v927 = vrot.slane %v889, 7
    %v928 = vrot.slane %v890, 7
    %v929 = vsel %vm87, %v927, %v928
    %v930 = vsel %vm87, %v928, %v927
    %v931 = vsel %vm45, %v930, inf
    %v932 = vsel %vm46, %v929, inf
    %v933 = vmin.f32 %v889, %v931
    %v934 = vmin.f32 %v890, %v932
    %v935 = vrot.slane %v889, 1
    %v936 = vrot.slane %v890, 1
    %v937 = vsel %vm96, %v935, %v936
    %v938 = vsel %vm96, %v936, %v935
    %v939 = vsel %vm47, %v937, inf
    %v940 = vsel %vm48, %v938, inf
    %v941 = vmin.f32 %v933, %v939
    %v942 = vmin.f32 %v934, %v940
    %v943 = vsel %vm79, %v892, inf
    %v944 = vsel %vm79, %v894, inf
    %v945 = vmin.f32 %v889, %v943
    %v946 = vmin.f32 %v890, %v944
    %v947 = vsel %vm80, %v900, inf
    %v948 = vsel %vm80, %v902, inf
    %v949 = vmin.f32 %v945, %v947
    %v950 = vmin.f32 %v946, %v948
    %v951 = vmin.f32 %v941, %v949
    %v952 = vmin.f32 %v942, %v950
    %953 = vrot.lane.b32.xlu0 %v951, 1
    %v954 = vpop.permute.xlu0 %953
    %955 = vrot.lane.b32.xlu0 %v952, 1
    %v956 = vpop.permute.xlu0 %955
    %v957 = vsel %vm79, %v954, -inf
    %v958 = vsel %vm79, %v956, -inf
    %v959 = vmax.f32 %v951, %v957
    %v960 = vmax.f32 %v952, %v958
    %961 = vrot.lane.b32.xlu0 %v951, 127
    %v962 = vpop.permute.xlu0 %961
    %963 = vrot.lane.b32.xlu0 %v952, 127
    %v964 = vpop.permute.xlu0 %963
    %v965 = vsel %vm80, %v962, -inf
    %v966 = vsel %vm80, %v964, -inf
    %v967 = vmax.f32 %v959, %v965
    %v968 = vmax.f32 %v960, %v966
    %v969 = vrot.slane %v967, 7
    %v970 = vrot.slane %v968, 7
    %v971 = vsel %vm87, %v969, %v970
    %v972 = vsel %vm87, %v970, %v969
    %v973 = vsel %vm45, %v972, -inf
    %v974 = vsel %vm46, %v971, -inf
    %v975 = vmax.f32 %v967, %v973
    %v976 = vmax.f32 %v968, %v974
    %v977 = vrot.slane %v967, 1
    %v978 = vrot.slane %v968, 1
    %v979 = vsel %vm96, %v977, %v978
    %v980 = vsel %vm96, %v978, %v977
    %v981 = vsel %vm47, %v979, -inf
    %v982 = vsel %vm48, %v980, -inf
    %v983 = vmax.f32 %v975, %v981
    %v984 = vmax.f32 %v976, %v982
    %v985 = vsub.f32 %v889, %v983
    %v986 = vsub.f32 %v890, %v984
    %v987 = vmax.f32 %v985, 0.0
    %v988 = vmax.f32 %v986, 0.0
    %v989 = vmul.f32 %v925, %v987
    %v990 = vmul.f32 %v926, %v988
    %v991 = vsub.f32 %v987, %v989
    %v992 = vsub.f32 %v988, %v990
    %v993 = vmax.f32 %v991, 0.0
    %v994 = vmax.f32 %v992, 0.0
    %v995 = vadd.f32 %v925, %v993
    %v996 = vadd.f32 %v926, %v994
    %v997 = vrot.slane %v951, 7
    %v998 = vrot.slane %v952, 7
    %v999 = vsel %vm87, %v997, %v998
    %v1000 = vsel %vm87, %v998, %v997
    %v1001 = vsel %vm45, %v1000, inf
    %v1002 = vsel %vm46, %v999, inf
    %v1003 = vmin.f32 %v951, %v1001
    %v1004 = vmin.f32 %v952, %v1002
    %v1005 = vrot.slane %v951, 1
    %v1006 = vrot.slane %v952, 1
    %v1007 = vsel %vm96, %v1005, %v1006
    %v1008 = vsel %vm96, %v1006, %v1005
    %v1009 = vsel %vm47, %v1007, inf
    %v1010 = vsel %vm48, %v1008, inf
    %v1011 = vmin.f32 %v1003, %v1009
    %v1012 = vmin.f32 %v1004, %v1010
    %v1013 = vsel %vm79, %v954, inf
    %v1014 = vsel %vm79, %v956, inf
    %v1015 = vmin.f32 %v951, %v1013
    %v1016 = vmin.f32 %v952, %v1014
    %v1017 = vsel %vm80, %v962, inf
    %v1018 = vsel %vm80, %v964, inf
    %v1019 = vmin.f32 %v1015, %v1017
    %v1020 = vmin.f32 %v1016, %v1018
    %v1021 = vmin.f32 %v1011, %v1019
    %v1022 = vmin.f32 %v1012, %v1020
    %1023 = vrot.lane.b32.xlu0 %v1021, 1
    %v1024 = vpop.permute.xlu0 %1023
    %1025 = vrot.lane.b32.xlu0 %v1022, 1
    %v1026 = vpop.permute.xlu0 %1025
    %v1027 = vsel %vm79, %v1024, -inf
    %v1028 = vsel %vm79, %v1026, -inf
    %v1029 = vmax.f32 %v1021, %v1027
    %v1030 = vmax.f32 %v1022, %v1028
    %1031 = vrot.lane.b32.xlu0 %v1021, 127
    %v1032 = vpop.permute.xlu0 %1031
    %1033 = vrot.lane.b32.xlu0 %v1022, 127
    %v1034 = vpop.permute.xlu0 %1033
    %v1035 = vsel %vm80, %v1032, -inf
    %v1036 = vsel %vm80, %v1034, -inf
    %v1037 = vmax.f32 %v1029, %v1035
    %v1038 = vmax.f32 %v1030, %v1036
    %v1039 = vrot.slane %v1037, 7
    %v1040 = vrot.slane %v1038, 7
    %v1041 = vsel %vm87, %v1039, %v1040
    %v1042 = vsel %vm87, %v1040, %v1039
    %v1043 = vsel %vm45, %v1042, -inf
    %v1044 = vsel %vm46, %v1041, -inf
    %v1045 = vmax.f32 %v1037, %v1043
    %v1046 = vmax.f32 %v1038, %v1044
    %v1047 = vrot.slane %v1037, 1
    %v1048 = vrot.slane %v1038, 1
    %v1049 = vsel %vm96, %v1047, %v1048
    %v1050 = vsel %vm96, %v1048, %v1047
    %v1051 = vsel %vm47, %v1049, -inf
    %v1052 = vsel %vm48, %v1050, -inf
    %v1053 = vmax.f32 %v1045, %v1051
    %v1054 = vmax.f32 %v1046, %v1052
    %v1055 = vsub.f32 %v951, %v1053
    %v1056 = vsub.f32 %v952, %v1054
    %v1057 = vmax.f32 %v1055, 0.0
    %v1058 = vmax.f32 %v1056, 0.0
    %v1059 = vmul.f32 %v995, %v1057
    %v1060 = vmul.f32 %v996, %v1058
    %v1061 = vsub.f32 %v1057, %v1059
    %v1062 = vsub.f32 %v1058, %v1060
    %v1063 = vmax.f32 %v1061, 0.0
    %v1064 = vmax.f32 %v1062, 0.0
    %v1065 = vadd.f32 %v995, %v1063
    %v1066 = vadd.f32 %v996, %v1064
    %v1067 = vrot.slane %v1021, 7
    %v1068 = vrot.slane %v1022, 7
    %v1069 = vsel %vm87, %v1067, %v1068
    %v1070 = vsel %vm87, %v1068, %v1067
    %v1071 = vsel %vm45, %v1070, inf
    %v1072 = vsel %vm46, %v1069, inf
    %v1073 = vmin.f32 %v1021, %v1071
    %v1074 = vmin.f32 %v1022, %v1072
    %v1075 = vrot.slane %v1021, 1
    %v1076 = vrot.slane %v1022, 1
    %v1077 = vsel %vm96, %v1075, %v1076
    %v1078 = vsel %vm96, %v1076, %v1075
    %v1079 = vsel %vm47, %v1077, inf
    %v1080 = vsel %vm48, %v1078, inf
    %v1081 = vmin.f32 %v1073, %v1079
    %v1082 = vmin.f32 %v1074, %v1080
    %v1083 = vsel %vm79, %v1024, inf
    %v1084 = vsel %vm79, %v1026, inf
    %v1085 = vmin.f32 %v1021, %v1083
    %v1086 = vmin.f32 %v1022, %v1084
    %v1087 = vsel %vm80, %v1032, inf
    %v1088 = vsel %vm80, %v1034, inf
    %v1089 = vmin.f32 %v1085, %v1087
    %v1090 = vmin.f32 %v1086, %v1088
    %v1091 = vmin.f32 %v1081, %v1089
    %v1092 = vmin.f32 %v1082, %v1090
    %1093 = vrot.lane.b32.xlu0 %v1091, 1
    %v1094 = vpop.permute.xlu0 %1093
    %1095 = vrot.lane.b32.xlu0 %v1092, 1
    %v1096 = vpop.permute.xlu0 %1095
    %v1097 = vsel %vm79, %v1094, -inf
    %v1098 = vsel %vm79, %v1096, -inf
    %v1099 = vmax.f32 %v1091, %v1097
    %v1100 = vmax.f32 %v1092, %v1098
    %1101 = vrot.lane.b32.xlu0 %v1091, 127
    %v1102 = vpop.permute.xlu0 %1101
    %1103 = vrot.lane.b32.xlu0 %v1092, 127
    %v1104 = vpop.permute.xlu0 %1103
    %v1105 = vsel %vm80, %v1102, -inf
    %v1106 = vsel %vm80, %v1104, -inf
    %v1107 = vmax.f32 %v1099, %v1105
    %v1108 = vmax.f32 %v1100, %v1106
    %v1109 = vrot.slane %v1107, 7
    %v1110 = vrot.slane %v1108, 7
    %v1111 = vsel %vm87, %v1109, %v1110
    %v1112 = vsel %vm87, %v1110, %v1109
    %v1113 = vsel %vm45, %v1112, -inf
    %v1114 = vsel %vm46, %v1111, -inf
    %v1115 = vmax.f32 %v1107, %v1113
    %v1116 = vmax.f32 %v1108, %v1114
    %v1117 = vrot.slane %v1107, 1
    %v1118 = vrot.slane %v1108, 1
    %v1119 = vsel %vm96, %v1117, %v1118
    %v1120 = vsel %vm96, %v1118, %v1117
    %v1121 = vsel %vm47, %v1119, -inf
    %v1122 = vsel %vm48, %v1120, -inf
    %v1123 = vmax.f32 %v1115, %v1121
    %v1124 = vmax.f32 %v1116, %v1122
    %v1125 = vsub.f32 %v1021, %v1123
    %v1126 = vsub.f32 %v1022, %v1124
    %v1127 = vmax.f32 %v1125, 0.0
    %v1128 = vmax.f32 %v1126, 0.0
    %v1129 = vmul.f32 %v1065, %v1127
    %v1130 = vmul.f32 %v1066, %v1128
    %v1131 = vsub.f32 %v1127, %v1129
    %v1132 = vsub.f32 %v1128, %v1130
    %v1133 = vmax.f32 %v1131, 0.0
    %v1134 = vmax.f32 %v1132, 0.0
    %v1135 = vadd.f32 %v1065, %v1133
    %v1136 = vadd.f32 %v1066, %v1134
    %v1137 = vrot.slane %v1091, 7
    %v1138 = vrot.slane %v1092, 7
    %v1139 = vsel %vm87, %v1137, %v1138
    %v1140 = vsel %vm87, %v1138, %v1137
    %v1141 = vsel %vm45, %v1140, inf
    %v1142 = vsel %vm46, %v1139, inf
    %v1143 = vmin.f32 %v1091, %v1141
    %v1144 = vmin.f32 %v1092, %v1142
    %v1145 = vrot.slane %v1091, 1
    %v1146 = vrot.slane %v1092, 1
    %v1147 = vsel %vm96, %v1145, %v1146
    %v1148 = vsel %vm96, %v1146, %v1145
    %v1149 = vsel %vm47, %v1147, inf
    %v1150 = vsel %vm48, %v1148, inf
    %v1151 = vmin.f32 %v1143, %v1149
    %v1152 = vmin.f32 %v1144, %v1150
    %v1153 = vsel %vm79, %v1094, inf
    %v1154 = vsel %vm79, %v1096, inf
    %v1155 = vmin.f32 %v1091, %v1153
    %v1156 = vmin.f32 %v1092, %v1154
    %v1157 = vsel %vm80, %v1102, inf
    %v1158 = vsel %vm80, %v1104, inf
    %v1159 = vmin.f32 %v1155, %v1157
    %v1160 = vmin.f32 %v1156, %v1158
    %v1161 = vmin.f32 %v1151, %v1159
    %v1162 = vmin.f32 %v1152, %v1160
    %1163 = vrot.lane.b32.xlu0 %v1161, 1
    %v1164 = vpop.permute.xlu0 %1163
    %1165 = vrot.lane.b32.xlu0 %v1162, 1
    %v1166 = vpop.permute.xlu0 %1165
    %v1167 = vsel %vm79, %v1164, -inf
    %v1168 = vsel %vm79, %v1166, -inf
    %v1169 = vmax.f32 %v1161, %v1167
    %v1170 = vmax.f32 %v1162, %v1168
    %1171 = vrot.lane.b32.xlu0 %v1161, 127
    %v1172 = vpop.permute.xlu0 %1171
    %1173 = vrot.lane.b32.xlu0 %v1162, 127
    %v1174 = vpop.permute.xlu0 %1173
    %v1175 = vsel %vm80, %v1172, -inf
    %v1176 = vsel %vm80, %v1174, -inf
    %v1177 = vmax.f32 %v1169, %v1175
    %v1178 = vmax.f32 %v1170, %v1176
    %v1179 = vrot.slane %v1177, 7
    %v1180 = vrot.slane %v1178, 7
    %v1181 = vsel %vm87, %v1179, %v1180
    %v1182 = vsel %vm87, %v1180, %v1179
    %v1183 = vsel %vm45, %v1182, -inf
    %v1184 = vsel %vm46, %v1181, -inf
    %v1185 = vmax.f32 %v1177, %v1183
    %v1186 = vmax.f32 %v1178, %v1184
    %v1187 = vrot.slane %v1177, 1
    %v1188 = vrot.slane %v1178, 1
    %v1189 = vsel %vm96, %v1187, %v1188
    %v1190 = vsel %vm96, %v1188, %v1187
    %v1191 = vsel %vm47, %v1189, -inf
    %v1192 = vsel %vm48, %v1190, -inf
    %v1193 = vmax.f32 %v1185, %v1191
    %v1194 = vmax.f32 %v1186, %v1192
    %v1195 = vsub.f32 %v1091, %v1193
    %v1196 = vsub.f32 %v1092, %v1194
    %v1197 = vmax.f32 %v1195, 0.0
    %v1198 = vmax.f32 %v1196, 0.0
    %v1199 = vmul.f32 %v1135, %v1197
    %v1200 = vmul.f32 %v1136, %v1198
    %v1201 = vsub.f32 %v1197, %v1199
    %v1202 = vsub.f32 %v1198, %v1200
    %v1203 = vmax.f32 %v1201, 0.0
    %v1204 = vmax.f32 %v1202, 0.0
    %v1205 = vadd.f32 %v1135, %v1203
    %v1206 = vadd.f32 %v1136, %v1204
    %v1207 = vrot.slane %v1161, 7
    %v1208 = vrot.slane %v1162, 7
    %v1209 = vsel %vm87, %v1207, %v1208
    %v1210 = vsel %vm87, %v1208, %v1207
    %v1211 = vsel %vm45, %v1210, inf
    %v1212 = vsel %vm46, %v1209, inf
    %v1213 = vmin.f32 %v1161, %v1211
    %v1214 = vmin.f32 %v1162, %v1212
    %v1215 = vrot.slane %v1161, 1
    %v1216 = vrot.slane %v1162, 1
    %v1217 = vsel %vm96, %v1215, %v1216
    %v1218 = vsel %vm96, %v1216, %v1215
    %v1219 = vsel %vm47, %v1217, inf
    %v1220 = vsel %vm48, %v1218, inf
    %v1221 = vmin.f32 %v1213, %v1219
    %v1222 = vmin.f32 %v1214, %v1220
    %v1223 = vsel %vm79, %v1164, inf
    %v1224 = vsel %vm79, %v1166, inf
    %v1225 = vmin.f32 %v1161, %v1223
    %v1226 = vmin.f32 %v1162, %v1224
    %v1227 = vsel %vm80, %v1172, inf
    %v1228 = vsel %vm80, %v1174, inf
    %v1229 = vmin.f32 %v1225, %v1227
    %v1230 = vmin.f32 %v1226, %v1228
    %v1231 = vmin.f32 %v1221, %v1229
    %v1232 = vmin.f32 %v1222, %v1230
    %1233 = vrot.lane.b32.xlu0 %v1231, 1
    %v1234 = vpop.permute.xlu0 %1233
    %1235 = vrot.lane.b32.xlu0 %v1232, 1
    %v1236 = vpop.permute.xlu0 %1235
    %v1237 = vsel %vm79, %v1234, -inf
    %v1238 = vsel %vm79, %v1236, -inf
    %v1239 = vmax.f32 %v1231, %v1237
    %v1240 = vmax.f32 %v1232, %v1238
    %1241 = vrot.lane.b32.xlu0 %v1231, 127
    %v1242 = vpop.permute.xlu0 %1241
    %1243 = vrot.lane.b32.xlu0 %v1232, 127
    %v1244 = vpop.permute.xlu0 %1243
    %v1245 = vsel %vm80, %v1242, -inf
    %v1246 = vsel %vm80, %v1244, -inf
    %v1247 = vmax.f32 %v1239, %v1245
    %v1248 = vmax.f32 %v1240, %v1246
    %v1249 = vrot.slane %v1247, 7
    %v1250 = vrot.slane %v1248, 7
    %v1251 = vsel %vm87, %v1249, %v1250
    %v1252 = vsel %vm87, %v1250, %v1249
    %v1253 = vsel %vm45, %v1252, -inf
    %v1254 = vsel %vm46, %v1251, -inf
    %v1255 = vmax.f32 %v1247, %v1253
    %v1256 = vmax.f32 %v1248, %v1254
    %v1257 = vrot.slane %v1247, 1
    %v1258 = vrot.slane %v1248, 1
    %v1259 = vsel %vm96, %v1257, %v1258
    %v1260 = vsel %vm96, %v1258, %v1257
    %v1261 = vsel %vm47, %v1259, -inf
    %v1262 = vsel %vm48, %v1260, -inf
    %v1263 = vmax.f32 %v1255, %v1261
    %v1264 = vmax.f32 %v1256, %v1262
    %v1265 = vsub.f32 %v1161, %v1263
    %v1266 = vsub.f32 %v1162, %v1264
    %v1267 = vmax.f32 %v1265, 0.0
    %v1268 = vmax.f32 %v1266, 0.0
    %v1269 = vmul.f32 %v1205, %v1267
    %v1270 = vmul.f32 %v1206, %v1268
    %v1271 = vsub.f32 %v1267, %v1269
    %v1272 = vsub.f32 %v1268, %v1270
    %v1273 = vmax.f32 %v1271, 0.0
    %v1274 = vmax.f32 %v1272, 0.0
    %v1275 = vadd.f32 %v1205, %v1273
    %v1276 = vadd.f32 %v1206, %v1274
    %v1277 = vrot.slane %v1231, 7
    %v1278 = vrot.slane %v1232, 7
    %v1279 = vsel %vm87, %v1277, %v1278
    %v1280 = vsel %vm87, %v1278, %v1277
    %v1281 = vsel %vm45, %v1280, inf
    %v1282 = vsel %vm46, %v1279, inf
    %v1283 = vmin.f32 %v1231, %v1281
    %v1284 = vmin.f32 %v1232, %v1282
    %v1285 = vrot.slane %v1231, 1
    %v1286 = vrot.slane %v1232, 1
    %v1287 = vsel %vm96, %v1285, %v1286
    %v1288 = vsel %vm96, %v1286, %v1285
    %v1289 = vsel %vm47, %v1287, inf
    %v1290 = vsel %vm48, %v1288, inf
    %v1291 = vmin.f32 %v1283, %v1289
    %v1292 = vmin.f32 %v1284, %v1290
    %v1293 = vsel %vm79, %v1234, inf
    %v1294 = vsel %vm79, %v1236, inf
    %v1295 = vmin.f32 %v1231, %v1293
    %v1296 = vmin.f32 %v1232, %v1294
    %v1297 = vsel %vm80, %v1242, inf
    %v1298 = vsel %vm80, %v1244, inf
    %v1299 = vmin.f32 %v1295, %v1297
    %v1300 = vmin.f32 %v1296, %v1298
    %v1301 = vmin.f32 %v1291, %v1299
    %v1302 = vmin.f32 %v1292, %v1300
    %1303 = vrot.lane.b32.xlu0 %v1301, 1
    %v1304 = vpop.permute.xlu0 %1303
    %1305 = vrot.lane.b32.xlu0 %v1302, 1
    %v1306 = vpop.permute.xlu0 %1305
    %v1307 = vsel %vm79, %v1304, -inf
    %v1308 = vsel %vm79, %v1306, -inf
    %v1309 = vmax.f32 %v1301, %v1307
    %v1310 = vmax.f32 %v1302, %v1308
    %1311 = vrot.lane.b32.xlu0 %v1301, 127
    %v1312 = vpop.permute.xlu0 %1311
    %1313 = vrot.lane.b32.xlu0 %v1302, 127
    %v1314 = vpop.permute.xlu0 %1313
    %v1315 = vsel %vm80, %v1312, -inf
    %v1316 = vsel %vm80, %v1314, -inf
    %v1317 = vmax.f32 %v1309, %v1315
    %v1318 = vmax.f32 %v1310, %v1316
    %v1319 = vrot.slane %v1317, 7
    %v1320 = vrot.slane %v1318, 7
    %v1321 = vsel %vm87, %v1319, %v1320
    %v1322 = vsel %vm87, %v1320, %v1319
    %v1323 = vsel %vm45, %v1322, -inf
    %v1324 = vsel %vm46, %v1321, -inf
    %v1325 = vmax.f32 %v1317, %v1323
    %v1326 = vmax.f32 %v1318, %v1324
    %v1327 = vrot.slane %v1317, 1
    %v1328 = vrot.slane %v1318, 1
    %v1329 = vsel %vm96, %v1327, %v1328
    %v1330 = vsel %vm96, %v1328, %v1327
    %v1331 = vsel %vm47, %v1329, -inf
    %v1332 = vsel %vm48, %v1330, -inf
    %v1333 = vmax.f32 %v1325, %v1331
    %v1334 = vmax.f32 %v1326, %v1332
    %v1335 = vsub.f32 %v1231, %v1333
    %v1336 = vsub.f32 %v1232, %v1334
    %v1337 = vmax.f32 %v1335, 0.0
    %v1338 = vmax.f32 %v1336, 0.0
    %v1339 = vmul.f32 %v1275, %v1337
    %v1340 = vmul.f32 %v1276, %v1338
    %v1341 = vsub.f32 %v1337, %v1339
    %v1342 = vsub.f32 %v1338, %v1340
    %v1343 = vmax.f32 %v1341, 0.0
    %v1344 = vmax.f32 %v1342, 0.0
    %v1345 = vadd.f32 %v1275, %v1343
    %v1346 = vadd.f32 %v1276, %v1344
    %v1347 = vrot.slane %v1301, 7
    %v1348 = vrot.slane %v1302, 7
    %v1349 = vsel %vm87, %v1347, %v1348
    %v1350 = vsel %vm87, %v1348, %v1347
    %v1351 = vsel %vm45, %v1350, inf
    %v1352 = vsel %vm46, %v1349, inf
    %v1353 = vmin.f32 %v1301, %v1351
    %v1354 = vmin.f32 %v1302, %v1352
    %v1355 = vrot.slane %v1301, 1
    %v1356 = vrot.slane %v1302, 1
    %v1357 = vsel %vm96, %v1355, %v1356
    %v1358 = vsel %vm96, %v1356, %v1355
    %v1359 = vsel %vm47, %v1357, inf
    %v1360 = vsel %vm48, %v1358, inf
    %v1361 = vmin.f32 %v1353, %v1359
    %v1362 = vmin.f32 %v1354, %v1360
    %v1363 = vsel %vm79, %v1304, inf
    %v1364 = vsel %vm79, %v1306, inf
    %v1365 = vmin.f32 %v1301, %v1363
    %v1366 = vmin.f32 %v1302, %v1364
    %v1367 = vsel %vm80, %v1312, inf
    %v1368 = vsel %vm80, %v1314, inf
    %v1369 = vmin.f32 %v1365, %v1367
    %v1370 = vmin.f32 %v1366, %v1368
    %v1371 = vmin.f32 %v1361, %v1369
    %v1372 = vmin.f32 %v1362, %v1370
    %1373 = vrot.lane.b32.xlu0 %v1371, 1
    %v1374 = vpop.permute.xlu0 %1373
    %1375 = vrot.lane.b32.xlu0 %v1372, 1
    %v1376 = vpop.permute.xlu0 %1375
    %v1377 = vsel %vm79, %v1374, -inf
    %v1378 = vsel %vm79, %v1376, -inf
    %v1379 = vmax.f32 %v1371, %v1377
    %v1380 = vmax.f32 %v1372, %v1378
    %1381 = vrot.lane.b32.xlu0 %v1371, 127
    %v1382 = vpop.permute.xlu0 %1381
    %1383 = vrot.lane.b32.xlu0 %v1372, 127
    %v1384 = vpop.permute.xlu0 %1383
    %v1385 = vsel %vm80, %v1382, -inf
    %v1386 = vsel %vm80, %v1384, -inf
    %v1387 = vmax.f32 %v1379, %v1385
    %v1388 = vmax.f32 %v1380, %v1386
    %v1389 = vrot.slane %v1387, 7
    %v1390 = vrot.slane %v1388, 7
    %v1391 = vsel %vm87, %v1389, %v1390
    %v1392 = vsel %vm87, %v1390, %v1389
    %v1393 = vsel %vm45, %v1392, -inf
    %v1394 = vsel %vm46, %v1391, -inf
    %v1395 = vmax.f32 %v1387, %v1393
    %v1396 = vmax.f32 %v1388, %v1394
    %v1397 = vrot.slane %v1387, 1
    %v1398 = vrot.slane %v1388, 1
    %v1399 = vsel %vm96, %v1397, %v1398
    %v1400 = vsel %vm96, %v1398, %v1397
    %v1401 = vsel %vm47, %v1399, -inf
    %v1402 = vsel %vm48, %v1400, -inf
    %v1403 = vmax.f32 %v1395, %v1401
    %v1404 = vmax.f32 %v1396, %v1402
    %v1405 = vsub.f32 %v1301, %v1403
    %v1406 = vsub.f32 %v1302, %v1404
    %v1407 = vmax.f32 %v1405, 0.0
    %v1408 = vmax.f32 %v1406, 0.0
    %v1409 = vmul.f32 %v1345, %v1407
    %v1410 = vmul.f32 %v1346, %v1408
    %v1411 = vsub.f32 %v1407, %v1409
    %v1412 = vsub.f32 %v1408, %v1410
    %v1413 = vmax.f32 %v1411, 0.0
    %v1414 = vmax.f32 %v1412, 0.0
    %v1415 = vadd.f32 %v1345, %v1413
    %v1416 = vadd.f32 %v1346, %v1414
    %v1417 = vrot.slane %v1371, 7
    %v1418 = vrot.slane %v1372, 7
    %v1419 = vsel %vm87, %v1417, %v1418
    %v1420 = vsel %vm87, %v1418, %v1417
    %v1421 = vsel %vm45, %v1420, inf
    %v1422 = vsel %vm46, %v1419, inf
    %v1423 = vmin.f32 %v1371, %v1421
    %v1424 = vmin.f32 %v1372, %v1422
    %v1425 = vrot.slane %v1371, 1
    %v1426 = vrot.slane %v1372, 1
    %v1427 = vsel %vm96, %v1425, %v1426
    %v1428 = vsel %vm96, %v1426, %v1425
    %v1429 = vsel %vm47, %v1427, inf
    %v1430 = vsel %vm48, %v1428, inf
    %v1431 = vmin.f32 %v1423, %v1429
    %v1432 = vmin.f32 %v1424, %v1430
    %v1433 = vsel %vm79, %v1374, inf
    %v1434 = vsel %vm79, %v1376, inf
    %v1435 = vmin.f32 %v1371, %v1433
    %v1436 = vmin.f32 %v1372, %v1434
    %v1437 = vsel %vm80, %v1382, inf
    %v1438 = vsel %vm80, %v1384, inf
    %v1439 = vmin.f32 %v1435, %v1437
    %v1440 = vmin.f32 %v1436, %v1438
    %v1441 = vmin.f32 %v1431, %v1439
    %v1442 = vmin.f32 %v1432, %v1440
    %1443 = vrot.lane.b32.xlu0 %v1441, 1
    %v1444 = vpop.permute.xlu0 %1443
    %1445 = vrot.lane.b32.xlu0 %v1442, 1
    %v1446 = vpop.permute.xlu0 %1445
    %v1447 = vsel %vm79, %v1444, -inf
    %v1448 = vsel %vm79, %v1446, -inf
    %v1449 = vmax.f32 %v1441, %v1447
    %v1450 = vmax.f32 %v1442, %v1448
    %1451 = vrot.lane.b32.xlu0 %v1441, 127
    %v1452 = vpop.permute.xlu0 %1451
    %1453 = vrot.lane.b32.xlu0 %v1442, 127
    %v1454 = vpop.permute.xlu0 %1453
    %v1455 = vsel %vm80, %v1452, -inf
    %v1456 = vsel %vm80, %v1454, -inf
    %v1457 = vmax.f32 %v1449, %v1455
    %v1458 = vmax.f32 %v1450, %v1456
    %v1459 = vrot.slane %v1457, 7
    %v1460 = vrot.slane %v1458, 7
    %v1461 = vsel %vm87, %v1459, %v1460
    %v1462 = vsel %vm87, %v1460, %v1459
    %v1463 = vsel %vm45, %v1462, -inf
    %v1464 = vsel %vm46, %v1461, -inf
    %v1465 = vmax.f32 %v1457, %v1463
    %v1466 = vmax.f32 %v1458, %v1464
    %v1467 = vrot.slane %v1457, 1
    %v1468 = vrot.slane %v1458, 1
    %v1469 = vsel %vm96, %v1467, %v1468
    %v1470 = vsel %vm96, %v1468, %v1467
    %v1471 = vsel %vm47, %v1469, -inf
    %v1472 = vsel %vm48, %v1470, -inf
    %v1473 = vmax.f32 %v1465, %v1471
    %v1474 = vmax.f32 %v1466, %v1472
    %v1475 = vsub.f32 %v1371, %v1473
    %v1476 = vsub.f32 %v1372, %v1474
    %v1477 = vmax.f32 %v1475, 0.0
    %v1478 = vmax.f32 %v1476, 0.0
    %v1479 = vmul.f32 %v1415, %v1477
    %v1480 = vmul.f32 %v1416, %v1478
    %v1481 = vsub.f32 %v1477, %v1479
    %v1482 = vsub.f32 %v1478, %v1480
    %v1483 = vmax.f32 %v1481, 0.0
    %v1484 = vmax.f32 %v1482, 0.0
    %v1485 = vadd.f32 %v1415, %v1483
    %v1486 = vadd.f32 %v1416, %v1484
    %v1487 = vrot.slane %v1441, 7
    %v1488 = vrot.slane %v1442, 7
    %v1489 = vsel %vm87, %v1487, %v1488
    %v1490 = vsel %vm87, %v1488, %v1487
    %v1491 = vsel %vm45, %v1490, inf
    %v1492 = vsel %vm46, %v1489, inf
    %v1493 = vmin.f32 %v1441, %v1491
    %v1494 = vmin.f32 %v1442, %v1492
    %v1495 = vrot.slane %v1441, 1
    %v1496 = vrot.slane %v1442, 1
    %v1497 = vsel %vm96, %v1495, %v1496
    %v1498 = vsel %vm96, %v1496, %v1495
    %v1499 = vsel %vm47, %v1497, inf
    %v1500 = vsel %vm48, %v1498, inf
    %v1501 = vmin.f32 %v1493, %v1499
    %v1502 = vmin.f32 %v1494, %v1500
    %v1503 = vsel %vm79, %v1444, inf
    %v1504 = vsel %vm79, %v1446, inf
    %v1505 = vmin.f32 %v1441, %v1503
    %v1506 = vmin.f32 %v1442, %v1504
    %v1507 = vsel %vm80, %v1452, inf
    %v1508 = vsel %vm80, %v1454, inf
    %v1509 = vmin.f32 %v1505, %v1507
    %v1510 = vmin.f32 %v1506, %v1508
    %v1511 = vmin.f32 %v1501, %v1509
    %v1512 = vmin.f32 %v1502, %v1510
    %1513 = vrot.lane.b32.xlu0 %v1511, 1
    %v1514 = vpop.permute.xlu0 %1513
    %1515 = vrot.lane.b32.xlu0 %v1512, 1
    %v1516 = vpop.permute.xlu0 %1515
    %v1517 = vsel %vm79, %v1514, -inf
    %v1518 = vsel %vm79, %v1516, -inf
    %v1519 = vmax.f32 %v1511, %v1517
    %v1520 = vmax.f32 %v1512, %v1518
    %1521 = vrot.lane.b32.xlu0 %v1511, 127
    %v1522 = vpop.permute.xlu0 %1521
    %1523 = vrot.lane.b32.xlu0 %v1512, 127
    %v1524 = vpop.permute.xlu0 %1523
    %v1525 = vsel %vm80, %v1522, -inf
    %v1526 = vsel %vm80, %v1524, -inf
    %v1527 = vmax.f32 %v1519, %v1525
    %v1528 = vmax.f32 %v1520, %v1526
    %v1529 = vrot.slane %v1527, 7
    %v1530 = vrot.slane %v1528, 7
    %v1531 = vsel %vm87, %v1529, %v1530
    %v1532 = vsel %vm87, %v1530, %v1529
    %v1533 = vsel %vm45, %v1532, -inf
    %v1534 = vsel %vm46, %v1531, -inf
    %v1535 = vmax.f32 %v1527, %v1533
    %v1536 = vmax.f32 %v1528, %v1534
    %v1537 = vrot.slane %v1527, 1
    %v1538 = vrot.slane %v1528, 1
    %v1539 = vsel %vm96, %v1537, %v1538
    %v1540 = vsel %vm96, %v1538, %v1537
    %v1541 = vsel %vm47, %v1539, -inf
    %v1542 = vsel %vm48, %v1540, -inf
    %v1543 = vmax.f32 %v1535, %v1541
    %v1544 = vmax.f32 %v1536, %v1542
    %v1545 = vsub.f32 %v1441, %v1543
    %v1546 = vsub.f32 %v1442, %v1544
    %v1547 = vmax.f32 %v1545, 0.0
    %v1548 = vmax.f32 %v1546, 0.0
    %v1549 = vmul.f32 %v1485, %v1547
    %v1550 = vmul.f32 %v1486, %v1548
    %v1551 = vsub.f32 %v1547, %v1549
    %v1552 = vsub.f32 %v1548, %v1550
    %v1553 = vmax.f32 %v1551, 0.0
    %v1554 = vmax.f32 %v1552, 0.0
    %v1555 = vadd.f32 %v1485, %v1553
    %v1556 = vadd.f32 %v1486, %v1554
    %v1557 = vrot.slane %v1511, 7
    %v1558 = vrot.slane %v1512, 7
    %v1559 = vsel %vm87, %v1557, %v1558
    %v1560 = vsel %vm87, %v1558, %v1557
    %v1561 = vsel %vm45, %v1560, inf
    %v1562 = vsel %vm46, %v1559, inf
    %v1563 = vmin.f32 %v1511, %v1561
    %v1564 = vmin.f32 %v1512, %v1562
    %v1565 = vrot.slane %v1511, 1
    %v1566 = vrot.slane %v1512, 1
    %v1567 = vsel %vm96, %v1565, %v1566
    %v1568 = vsel %vm96, %v1566, %v1565
    %v1569 = vsel %vm47, %v1567, inf
    %v1570 = vsel %vm48, %v1568, inf
    %v1571 = vmin.f32 %v1563, %v1569
    %v1572 = vmin.f32 %v1564, %v1570
    %v1573 = vsel %vm79, %v1514, inf
    %v1574 = vsel %vm79, %v1516, inf
    %v1575 = vmin.f32 %v1511, %v1573
    %v1576 = vmin.f32 %v1512, %v1574
    %v1577 = vsel %vm80, %v1522, inf
    %v1578 = vsel %vm80, %v1524, inf
    %v1579 = vmin.f32 %v1575, %v1577
    %v1580 = vmin.f32 %v1576, %v1578
    %v1581 = vmin.f32 %v1571, %v1579
    %v1582 = vmin.f32 %v1572, %v1580
    %1583 = vrot.lane.b32.xlu0 %v1581, 1
    %v1584 = vpop.permute.xlu0 %1583
    %1585 = vrot.lane.b32.xlu0 %v1582, 1
    %v1586 = vpop.permute.xlu0 %1585
    %v1587 = vsel %vm79, %v1584, -inf
    %v1588 = vsel %vm79, %v1586, -inf
    %v1589 = vmax.f32 %v1581, %v1587
    %v1590 = vmax.f32 %v1582, %v1588
    %1591 = vrot.lane.b32.xlu0 %v1581, 127
    %v1592 = vpop.permute.xlu0 %1591
    %1593 = vrot.lane.b32.xlu0 %v1582, 127
    %v1594 = vpop.permute.xlu0 %1593
    %v1595 = vsel %vm80, %v1592, -inf
    %v1596 = vsel %vm80, %v1594, -inf
    %v1597 = vmax.f32 %v1589, %v1595
    %v1598 = vmax.f32 %v1590, %v1596
    %v1599 = vrot.slane %v1597, 7
    %v1600 = vrot.slane %v1598, 7
    %v1601 = vsel %vm87, %v1599, %v1600
    %v1602 = vsel %vm87, %v1600, %v1599
    %v1603 = vsel %vm45, %v1602, -inf
    %v1604 = vsel %vm46, %v1601, -inf
    %v1605 = vmax.f32 %v1597, %v1603
    %v1606 = vmax.f32 %v1598, %v1604
    %v1607 = vrot.slane %v1597, 1
    %v1608 = vrot.slane %v1598, 1
    %v1609 = vsel %vm96, %v1607, %v1608
    %v1610 = vsel %vm96, %v1608, %v1607
    %v1611 = vsel %vm47, %v1609, -inf
    %v1612 = vsel %vm48, %v1610, -inf
    %v1613 = vmax.f32 %v1605, %v1611
    %v1614 = vmax.f32 %v1606, %v1612
    %v1615 = vsub.f32 %v1511, %v1613
    %v1616 = vsub.f32 %v1512, %v1614
    %v1617 = vmax.f32 %v1615, 0.0
    %v1618 = vmax.f32 %v1616, 0.0
    %v1619 = vmul.f32 %v1555, %v1617
    %v1620 = vmul.f32 %v1556, %v1618
    %v1621 = vsub.f32 %v1617, %v1619
    %v1622 = vsub.f32 %v1618, %v1620
    %v1623 = vmax.f32 %v1621, 0.0
    %v1624 = vmax.f32 %v1622, 0.0
    %v1625 = vadd.f32 %v1555, %v1623
    %v1626 = vadd.f32 %v1556, %v1624
    %v1627 = vmul.f32 %v855, %v81
    %v1628 = vmul.f32 %v856, %v82
    %v1629 = vadd.f32 %v1627, %v1628
    %v1630 = vrot.slane %v1629, 4
    %v1631 = vadd.f32 %v1629, %v1630
    %v1632 = vrot.slane %v1631, 2
    %v1633 = vadd.f32 %v1631, %v1632
    %v1634 = vrot.slane %v1633, 1
    %v1635 = vadd.f32 %v1633, %v1634
    %1636 = vst [vmem:[#allocation7] sm:$0x1] %v1635
    %v1637 = vadd.f32 %v855, %v856
    %v1638 = vrot.slane %v1637, 4
    %v1639 = vadd.f32 %v1637, %v1638
    %v1640 = vrot.slane %v1639, 2
    %v1641 = vadd.f32 %v1639, %v1640
    %v1642 = vrot.slane %v1641, 1
    %v1643 = vadd.f32 %v1641, %v1642
    %1644 = vst [vmem:[#allocation7 + $0x1] sm:$0x1] %v1643
    %v1645 = vmul.f32 %v1625, %v83
    %v1646 = vmul.f32 %v1626, %v84
    %v1647 = vadd.f32 %v1645, %v1646
    %v1648 = vrot.slane %v1647, 4
    %v1649 = vadd.f32 %v1647, %v1648
    %v1650 = vrot.slane %v1649, 2
    %v1651 = vadd.f32 %v1649, %v1650
    %v1652 = vrot.slane %v1651, 1
    %v1653 = vadd.f32 %v1651, %v1652
    %1654 = vst [vmem:[#allocation7 + $0x2] sm:$0x1] %v1653
    %v1655 = vadd.f32 %v1625, %v1626
    %v1656 = vrot.slane %v1655, 4
    %v1657 = vadd.f32 %v1655, %v1656
    %v1658 = vrot.slane %v1657, 2
    %v1659 = vadd.f32 %v1657, %v1658
    %v1660 = vrot.slane %v1659, 1
    %v1661 = vadd.f32 %v1659, %v1660
    %1662 = vst [vmem:[#allocation7 + $0x3] sm:$0x1] %v1661
    // Predicated region
    $region18: #{tpu_custom_call.1} parent=1 // pred_check
      _
    $region19: #{tpu_custom_call.1} parent=1 // pred_check_branch
      %1664 = sbr.rel (0) target = $region21
    $region20: #{tpu_custom_call.1} parent=1 // pred_region
      %s1666 = ssub.s32 64, 64
      %1667 = vsyncadd [#allocation4], %s1666
      %s1669 = sshll.u32 [#allocation7], 4
      %s1670 = int_to_ptr.vmem [resolvable:$true] %s1669
      %1672 = dma.vmem_to_hbm [thread:$0]  %s1670, 64, %s2, [#allocation4]
    $region21: #{tpu_custom_call.1} parent=1 // pred_fallthru
      _
    // Predicated region
    $region22: #{tpu_custom_call.1} parent=1 // pred_check
      _
    $region23: #{tpu_custom_call.1} parent=1 // pred_check_branch
      %1674 = sbr.rel (0) target = $region25
    $region24: #{tpu_custom_call.1} parent=1 // pred_region
      %1675 = dma.done [#allocation4], 64
    $region25: #{tpu_custom_call.1} parent=1 // pred_fallthru
      _
    %1676 = vsyncpa [#allocation3], 1
    %1677 = vsyncpa [#allocation6], 1
    %1678 = vsyncpa [#allocation4], 1

</llo_original>
